<compile_context>
chip_gen: v6e
topology: v6e:2x2x1
jax: 0.10.0
libtpu: 0.0.40
codegen_flags: <defaults>
</compile_context>

<pallas_src>
import functools

import jax
import jax.numpy as jnp
from jax.experimental import pallas as pl
from jax.experimental.pallas import tpu as pltpu

_VMEM_LIMIT = 32 * 1024 * 1024  # safe scoped-VMEM cap on v5e / v6e / v7x


def _round_up(x, m):
    return (x + m - 1) // m * m


def _pick_tile(total, max_tile, quantum):
    """Largest multiple of `quantum` that divides `total` and is <= max_tile."""
    best = None
    t = quantum
    while t <= min(total, max_tile):
        if total % t == 0:
            best = t
        t += quantum
    return best if best is not None else total


# ---------------------------------------------------------------------------
# Kernel 1: fused expand(1x1)+BN0+swish  ->  depthwise kxk + BN1 + swish  -> SE pool
# ---------------------------------------------------------------------------
def _expand_dw_kernel(*refs, k, H, W, TH, expand):
    """Grid (N, H//TH).  Padded NHWC input image stays VMEM-resident across H-tiles
    (constant block index); the expanded activation exists only in VMEM."""
    if expand:
        (xp_ref, we_ref, s0_ref, b0_ref, wd_ref, s1_ref, b1_ref,
         out_ref, pool_ref) = refs
    else:
        (xp_ref, wd_ref, s1_ref, b1_ref, out_ref, pool_ref) = refs

    h_idx = pl.program_id(1)
    pad = k // 2
    THp = TH + 2 * pad
    Wp = xp_ref.shape[2]
    Cexp = wd_ref.shape[1]

    row0 = h_idx * TH                                               # offset in padded H
    xs = xp_ref[0, pl.ds(row0, THp), :, :].astype(jnp.float32)      # (THp, Wp, Cin)

    if expand:
        Cin = xs.shape[-1]
        e = jnp.dot(xs.reshape(THp * Wp, Cin), we_ref[...],
                    preferred_element_type=jnp.float32)             # (THp*Wp, Cexp)
        e = e * s0_ref[...] + b0_ref[...]
        e = e * jax.nn.sigmoid(e)                                   # swish
        e = e.reshape(THp, Wp, Cexp)
    else:
        e = xs                                                      # Cin == Cexp

    # Zero positions that are SAME-padding of the depthwise conv (expand/BN0/swish of
    # a zero-padded pixel is not zero, so mask after the fused expand).
    grow = row0 + jax.lax.broadcasted_iota(jnp.int32, (THp, Wp, 1), 0)
    gcol = jax.lax.broadcasted_iota(jnp.int32, (THp, Wp, 1), 1)
    interior = ((grow >= pad) & (grow < pad + H) &
                (gcol >= pad) & (gcol < pad + W)).astype(jnp.float32)
    e = e * interior                                                # lane-broadcast mul

    wd = wd_ref[...].astype(jnp.float32)                            # (k*k, Cexp)
    acc = jnp.zeros((TH, W, Cexp), jnp.float32)
    for kh in range(k):                                             # static tap loop
        for kw in range(k):
            i = kh * k + kw
            tap = wd[i:i + 1, :].reshape(1, 1, Cexp)
            acc = acc + e[kh:kh + TH, kw:kw + W, :] * tap

    y = acc * s1_ref[...].reshape(1, 1, Cexp) + b1_ref[...].reshape(1, 1, Cexp)
    y = y * jax.nn.sigmoid(y)                                       # swish
    out_ref[...] = y[None].astype(out_ref.dtype)

    # SE global average pool, accumulated across H-tiles (reduction axis = grid dim 1).
    @pl.when(h_idx == 0)
    def _():
        pool_ref[...] = jnp.zeros_like(pool_ref)
    pool_ref[...] += jnp.sum(y, axis=(0, 1), keepdims=True) * (1.0 / (H * W))


def expand_dw(x_nhwc, params, *, k, expand):
    N, H, W, Cin = x_nhwc.shape
    Cexp = params["dw_w"].shape[1]
    pad = k // 2
    Hp = H + 2 * pad
    Wp = _round_up(W + 2 * pad, 8)            # keep sublane dim 8-aligned
    # Pad only the small Cin-channel input (not the 4x expanded tensor).
    xp = jnp.pad(x_nhwc, ((0, 0), (pad, pad), (pad, Wp - W - pad), (0, 0)))

    TH = _pick_tile(H, 8, 1)                  # rows per grid step bounds VMEM/vregs
    grid = (N, H // TH)

    in_specs = [pl.BlockSpec((1, Hp, Wp, Cin), lambda n, h: (n, 0, 0, 0))]
    args = [xp]
    if expand:
        in_specs += [pl.BlockSpec((Cin, Cexp), lambda n, h: (0, 0)),
                     pl.BlockSpec((1, Cexp), lambda n, h: (0, 0)),
                     pl.BlockSpec((1, Cexp), lambda n, h: (0, 0))]
        args += [params["expand_w"],
                 params["bn0_scale"].reshape(1, Cexp),
                 params["bn0_bias"].reshape(1, Cexp)]
    in_specs += [pl.BlockSpec((k * k, Cexp), lambda n, h: (0, 0)),
                 pl.BlockSpec((1, Cexp), lambda n, h: (0, 0)),
                 pl.BlockSpec((1, Cexp), lambda n, h: (0, 0))]
    args += [params["dw_w"],
             params["bn1_scale"].reshape(1, Cexp),
             params["bn1_bias"].reshape(1, Cexp)]

    out_shape = (jax.ShapeDtypeStruct((N, H, W, Cexp), x_nhwc.dtype),
                 jax.ShapeDtypeStruct((N, 1, Cexp), jnp.float32))
    out_specs = (pl.BlockSpec((1, TH, W, Cexp), lambda n, h: (n, h, 0, 0)),
                 pl.BlockSpec((1, 1, Cexp), lambda n, h: (n, 0, 0)))

    return pl.pallas_call(
        functools.partial(_expand_dw_kernel, k=k, H=H, W=W, TH=TH, expand=expand),
        grid=grid,
        in_specs=in_specs,
        out_specs=out_specs,
        out_shape=out_shape,
        compiler_params=pltpu.CompilerParams(
            dimension_semantics=("parallel", "arbitrary"),   # pool accumulates over H
            vmem_limit_bytes=_VMEM_LIMIT),
    )(*args)


# ---------------------------------------------------------------------------
# Kernel 2: SE reduce/expand MLP -> per-image per-channel gate (tiny N x C work)
# ---------------------------------------------------------------------------
def _se_gate_kernel(pool_ref, wr_ref, br_ref, we_ref, be_ref, gate_ref):
    p = pool_ref[...].astype(jnp.float32)                            # (N, Cexp)
    s = jnp.dot(p, wr_ref[...], preferred_element_type=jnp.float32) + br_ref[...]
    s = s * jax.nn.sigmoid(s)                                        # swish
    s = jnp.dot(s, we_ref[...], preferred_element_type=jnp.float32) + be_ref[...]
    gate_ref[...] = jax.nn.sigmoid(s).astype(gate_ref.dtype)


def se_gate(pooled, params):
    N, Cexp = pooled.shape
    Csq = params["se_r_w"].shape[1]
    return pl.pallas_call(
        _se_gate_kernel,
        out_shape=jax.ShapeDtypeStruct((N, Cexp), jnp.float32),
        compiler_params=pltpu.CompilerParams(vmem_limit_bytes=_VMEM_LIMIT),
    )(pooled, params["se_r_w"], params["se_r_b"].reshape(1, Csq),
      params["se_e_w"], params["se_e_b"].reshape(1, Cexp))


# ---------------------------------------------------------------------------
# Kernel 3: project 1x1 conv + BN2 + SE gate (+ identity residual), NCHW output
# ---------------------------------------------------------------------------
def _project_kernel(h_ref, g_ref, wt_ref, s_ref, b_ref, *rest, residual):
    if residual:
        res_ref, o_ref = rest
    else:
        (o_ref,) = rest
    ht = h_ref[0].astype(jnp.float32)                    # (TM, Cexp)
    gate = g_ref[0].astype(jnp.float32)                  # (1, Cexp)
    wt = wt_ref[...].astype(jnp.float32) * gate          # fold SE gate into the weight
    # y^T = (W^T * gate) . h^T  ->  (Cout, TM): lane-dense stores, NCHW layout out.
    y = jax.lax.dot_general(wt, ht, (((1,), (1,)), ((), ())),
                            preferred_element_type=jnp.float32)
    y = y * s_ref[...] + b_ref[...]                      # folded BN2, (Cout,1) bcast
    if residual:
        y = y + res_ref[0].astype(jnp.float32)           # residual already NCHW
    o_ref[...] = y[None].astype(o_ref.dtype)


def project_gate(h_flat, gate, params, residual_nchw):
    N, HW, Cexp = h_flat.shape
    Cout = params["proj_w"].shape[1]
    TM = _pick_tile(HW, 1024, 128)            # M tile; weights stay VMEM-resident
    grid = (N, HW // TM)

    in_specs = [
        pl.BlockSpec((1, TM, Cexp), lambda n, m: (n, m, 0)),
        pl.BlockSpec((1, 1, Cexp), lambda n, m: (n, 0, 0)),
        pl.BlockSpec((Cout, Cexp), lambda n, m: (0, 0)),
        pl.BlockSpec((Cout, 1), lambda n, m: (0, 0)),
        pl.BlockSpec((Cout, 1), lambda n, m: (0, 0)),
    ]
    args = [h_flat, gate.reshape(N, 1, Cexp), jnp.transpose(params["proj_w"]),
            params["bn2_scale"].reshape(Cout, 1), params["bn2_bias"].reshape(Cout, 1)]
    residual = residual_nchw is not None
    if residual:
        in_specs.append(pl.BlockSpec((1, Cout, TM), lambda n, m: (n, 0, m)))
        args.append(residual_nchw)

    return pl.pallas_call(
        functools.partial(_project_kernel, residual=residual),
        grid=grid,
        in_specs=in_specs,
        out_specs=pl.BlockSpec((1, Cout, TM), lambda n, m: (n, 0, m)),
        out_shape=jax.ShapeDtypeStruct((N, Cout, HW), h_flat.dtype),
        compiler_params=pltpu.CompilerParams(
            dimension_semantics=("parallel", "parallel"),
            vmem_limit_bytes=_VMEM_LIMIT),
    )(*args)


# ---------------------------------------------------------------------------
# MBConvBlock forward
# ---------------------------------------------------------------------------
def mbconv_forward(x_nchw, params, *, kernel_size, stride, expand_ratio, id_skip,
                   se_ratio=0.25):
    assert stride == 1, "TODO(synk): stride>1 / TF asymmetric SAME pad unimplemented"
    assert kernel_size % 2 == 1
    N, Cin, H, W = x_nchw.shape
    has_se = se_ratio is not None and 0 < se_ratio <= 1

    x_nhwc = jnp.transpose(x_nchw, (0, 2, 3, 1))          # channels -> lanes (small pass)
    h, pooled = expand_dw(x_nhwc, params, k=kernel_size, expand=(expand_ratio != 1))
    Cexp = h.shape[-1]

    if has_se:
        gate = se_gate(pooled.reshape(N, Cexp), params)   # (N, Cexp) in [0, 1]
    else:
        gate = jnp.ones((N, Cexp), jnp.float32)

    Cout = params["proj_w"].shape[1]
    use_res = id_skip and stride == 1 and Cin == Cout
    res = x_nchw.reshape(N, Cin, H * W) if use_res else None
    y = project_gate(h.reshape(N, H * W, Cexp), gate, params, res)
    return y.reshape(N, Cout, H, W)                       # already NCHW, no transpose


# ---------------------------------------------------------------------------
# Pure-JAX reference (for correctness check)
# ---------------------------------------------------------------------------
def mbconv_reference(x_nchw, params, *, kernel_size, stride, expand_ratio, id_skip,
                     se_ratio=0.25):
    x = jnp.transpose(x_nchw, (0, 2, 3, 1))
    N, H, W, Cin = x.shape
    silu = jax.nn.silu
    h = x
    if expand_ratio != 1:
        h = jnp.einsum("nhwc,cd->nhwd", h, params["expand_w"], precision="highest")
        h = silu(h * params["bn0_scale"] + params["bn0_bias"])
    C = h.shape[-1]
    w_dw = params["dw_w"].reshape(kernel_size, kernel_size, 1, C)
    h = jax.lax.conv_general_dilated(
        h, w_dw, window_strides=(stride, stride), padding="SAME",
        dimension_numbers=("NHWC", "HWIO", "NHWC"), feature_group_count=C)
    h = silu(h * params["bn1_scale"] + params["bn1_bias"])
    if se_ratio is not None and 0 < se_ratio <= 1:
        pooled = jnp.mean(h, axis=(1, 2))
        s = silu(jnp.dot(pooled, params["se_r_w"], precision="highest") + params["se_r_b"])
        s = jnp.dot(s, params["se_e_w"], precision="highest") + params["se_e_b"]
        h = h * jax.nn.sigmoid(s)[:, None, None, :]
    y = jnp.einsum("nhwc,cd->nhwd", h, params["proj_w"], precision="highest")
    y = y * params["bn2_scale"] + params["bn2_bias"]
    if id_skip and stride == 1 and Cin == params["proj_w"].shape[1]:
        y = y + x
    return jnp.transpose(y, (0, 3, 1, 2))


# ---------------------------------------------------------------------------
# Deterministic parameter construction (eval-mode BN folded into scale/bias)
# ---------------------------------------------------------------------------
def fold_bn(gamma, beta, mean, var, eps):
    scale = gamma / jnp.sqrt(var + eps)
    return scale, beta - mean * scale


def make_params(key, *, inp, expand_ratio, out, k, se_ratio, bn_eps):
    oup = inp * expand_ratio
    csq = max(1, int(inp * se_ratio))
    keys = jax.random.split(key, 20)
    ki = iter(range(20))

    def nrm(shape, scale=0.1):
        return scale * jax.random.normal(keys[next(ki)], shape, jnp.float32)

    def bn_triplet(c):
        gamma = 1.0 + 0.1 * jax.random.normal(keys[next(ki)], (c,), jnp.float32)
        beta = 0.1 * jax.random.normal(keys[next(ki)], (c,), jnp.float32)
        mean = 0.05 * jax.random.normal(keys[next(ki)], (c,), jnp.float32)
        var = 0.5 + jnp.abs(jax.random.normal(keys[next(ki)], (c,), jnp.float32)) * 0.5
        return fold_bn(gamma, beta, mean, var, bn_eps)

    p = {}
    p["expand_w"] = nrm((inp, oup))                 # torch (oup, inp, 1, 1) -> (inp, oup)
    p["bn0_scale"], p["bn0_bias"] = bn_triplet(oup)
    p["dw_w"] = nrm((k * k, oup))                   # torch (oup, 1, k, k) -> (k*k, oup)
    p["bn1_scale"], p["bn1_bias"] = bn_triplet(oup)
    p["se_r_w"] = nrm((oup, csq))                   # torch (csq, oup, 1, 1) -> (oup, csq)
    p["se_r_b"] = nrm((csq,))
    p["se_e_w"] = nrm((csq, oup))                   # torch (oup, csq, 1, 1) -> (csq, oup)
    p["se_e_b"] = nrm((oup,))
    p["proj_w"] = nrm((oup, out))                   # torch (out, oup, 1, 1) -> (oup, out)
    p["bn2_scale"], p["bn2_bias"] = bn_triplet(out)
    return p


# ---------------------------------------------------------------------------
if __name__ == "__main__":
    # Block config (EfficientNet-style): id_skip residual active since stride=1
    # and input_filters == output_filters.
    INP, OUT, EXPAND, K, STRIDE, SE_RATIO, BN_EPS = 32, 32, 4, 3, 1, 0.25, 1e-3
    N, H, W = 2, 16, 16

    key = jax.random.PRNGKey(0)
    kx, kp = jax.random.split(key)
    x = jax.random.normal(kx, (N, INP, H, W), jnp.float32)      # NCHW like PyTorch
    params = make_params(kp, inp=INP, expand_ratio=EXPAND, out=OUT,
                         k=K, se_ratio=SE_RATIO, bn_eps=BN_EPS)

    fwd = jax.jit(functools.partial(
        mbconv_forward, kernel_size=K, stride=STRIDE,
        expand_ratio=EXPAND, id_skip=True, se_ratio=SE_RATIO))
    y = fwd(x, params)
    jax.block_until_ready(y)

    y_ref = mbconv_reference(x, params, kernel_size=K, stride=STRIDE,
                             expand_ratio=EXPAND, id_skip=True, se_ratio=SE_RATIO)
    err = float(jnp.max(jnp.abs(y - y_ref)))
    assert y.shape == (N, OUT, H, W), y.shape
    assert err < 2e-3, f"max abs error {err}"
    print("KERNEL_OK")
</pallas_src>

<mosaic_0001>
module attributes {stable_mosaic.version = 11 : i64} {
  func.func @_se_gate_kernel(%arg0: memref<2x128xf32, #tpu.memory_space<vmem>>, %arg1: memref<128x8xf32, #tpu.memory_space<vmem>>, %arg2: memref<1x8xf32, #tpu.memory_space<vmem>>, %arg3: memref<8x128xf32, #tpu.memory_space<vmem>>, %arg4: memref<1x128xf32, #tpu.memory_space<vmem>>, %arg5: memref<2x128xf32, #tpu.memory_space<vmem>>) attributes {dimension_semantics = [], scalar_prefetch = 0 : i64, scratch_operands = 0 : i64, tpu.core_type = #tpu.core_type<tc>} {
    %c0 = arith.constant 0 : index
    %c0_0 = arith.constant 0 : index
    %0 = vector.load %arg0[%c0, %c0_0] : memref<2x128xf32, #tpu.memory_space<vmem>>, vector<2x128xf32>
    %c0_1 = arith.constant 0 : index
    %c0_2 = arith.constant 0 : index
    %1 = vector.load %arg1[%c0_1, %c0_2] : memref<128x8xf32, #tpu.memory_space<vmem>>, vector<128x8xf32>
    %cst = arith.constant dense<0.000000e+00> : vector<2x8xf32>
    %2 = tpu.matmul %0, %1, %cst {dimension_numbers = #tpu.dot_dimension_numbers<[1], [0], [0], [1], [0, 0, 1, 1], [], []>} : vector<2x128xf32>, vector<128x8xf32>, vector<2x8xf32> -> vector<2x8xf32>
    %c0_3 = arith.constant 0 : index
    %c0_4 = arith.constant 0 : index
    %3 = vector.load %arg2[%c0_3, %c0_4] : memref<1x8xf32, #tpu.memory_space<vmem>>, vector<1x8xf32>
    %4 = vector.broadcast %3 : vector<1x8xf32> to vector<2x8xf32>
    %5 = arith.addf %2, %4 : vector<2x8xf32>
    %6 = arith.negf %5 : vector<2x8xf32>
    %7 = math.exp %6 : vector<2x8xf32>
    %cst_5 = arith.constant 1.000000e+00 : f32
    %8 = vector.broadcast %cst_5 : f32 to vector<2x8xf32>
    %9 = arith.addf %8, %7 : vector<2x8xf32>
    %10 = arith.divf %8, %9 : vector<2x8xf32>
    %11 = arith.mulf %5, %10 : vector<2x8xf32>
    %c0_6 = arith.constant 0 : index
    %c0_7 = arith.constant 0 : index
    %12 = vector.load %arg3[%c0_6, %c0_7] : memref<8x128xf32, #tpu.memory_space<vmem>>, vector<8x128xf32>
    %cst_8 = arith.constant dense<0.000000e+00> : vector<2x128xf32>
    %13 = tpu.matmul %11, %12, %cst_8 {dimension_numbers = #tpu.dot_dimension_numbers<[1], [0], [0], [1], [0, 0, 1, 1], [], []>} : vector<2x8xf32>, vector<8x128xf32>, vector<2x128xf32> -> vector<2x128xf32>
    %c0_9 = arith.constant 0 : index
    %c0_10 = arith.constant 0 : index
    %14 = vector.load %arg4[%c0_9, %c0_10] : memref<1x128xf32, #tpu.memory_space<vmem>>, vector<1x128xf32>
    %15 = vector.broadcast %14 : vector<1x128xf32> to vector<2x128xf32>
    %16 = arith.addf %13, %15 : vector<2x128xf32>
    %17 = arith.negf %16 : vector<2x128xf32>
    %18 = math.exp %17 : vector<2x128xf32>
    %cst_11 = arith.constant 1.000000e+00 : f32
    %19 = vector.broadcast %cst_11 : f32 to vector<2x128xf32>
    %20 = arith.addf %19, %18 : vector<2x128xf32>
    %21 = arith.divf %19, %20 : vector<2x128xf32>
    %c0_12 = arith.constant 0 : index
    %c0_13 = arith.constant 0 : index
    %22 = vector.load %arg5[%c0_12, %c0_13] : memref<2x128xf32, #tpu.memory_space<vmem>>, vector<2x128xf32>
    tpu.vector_store %arg5[%c0_12, %c0_13], %21 {strides = array<i32>} : memref<2x128xf32, #tpu.memory_space<vmem>>, vector<2x128xf32>,
    return
  }
}

module attributes {stable_mosaic.version = 11 : i64} {
  func.func @_expand_dw_kernel(%arg0: i32, %arg1: i32, %arg2: memref<1x18x24x32xf32, #tpu.memory_space<vmem>>, %arg3: memref<32x128xf32, #tpu.memory_space<vmem>>, %arg4: memref<1x128xf32, #tpu.memory_space<vmem>>, %arg5: memref<1x128xf32, #tpu.memory_space<vmem>>, %arg6: memref<9x128xf32, #tpu.memory_space<vmem>>, %arg7: memref<1x128xf32, #tpu.memory_space<vmem>>, %arg8: memref<1x128xf32, #tpu.memory_space<vmem>>, %arg9: memref<1x8x16x128xf32, #tpu.memory_space<vmem>>, %arg10: memref<1x1x128xf32, #tpu.memory_space<vmem>>) attributes {dimension_semantics = [#tpu.dimension_semantics<parallel>, #tpu.dimension_semantics<arbitrary>], iteration_bounds = array<i64: 2, 2>, scalar_prefetch = 0 : i64, scratch_operands = 0 : i64, tpu.core_type = #tpu.core_type<tc>, window_params = [{transform_indices = @transform_0, window_bounds = array<i64: 1, 18, 24, 32>}, {pipeline_mode = #tpu.pipeline_mode<synchronous>, transform_indices = @transform_1, window_bounds = array<i64: 32, 128>}, {pipeline_mode = #tpu.pipeline_mode<synchronous>, transform_indices = @transform_2, window_bounds = array<i64: 1, 128>}, {pipeline_mode = #tpu.pipeline_mode<synchronous>, transform_indices = @transform_3, window_bounds = array<i64: 1, 128>}, {pipeline_mode = #tpu.pipeline_mode<synchronous>, transform_indices = @transform_4, window_bounds = array<i64: 9, 128>}, {pipeline_mode = #tpu.pipeline_mode<synchronous>, transform_indices = @transform_5, window_bounds = array<i64: 1, 128>}, {pipeline_mode = #tpu.pipeline_mode<synchronous>, transform_indices = @transform_6, window_bounds = array<i64: 1, 128>}, {transform_indices = @transform_7, window_bounds = array<i64: 1, 8, 16, 128>}, {transform_indices = @transform_8, window_bounds = array<i64: 1, 1, 128>}]} {
    %c8_i32 = arith.constant 8 : i32
    %0 = arith.muli %arg1, %c8_i32 : i32
    %c0 = arith.constant 0 : index
    %1 = arith.index_cast %0 : i32 to index
    %c0_0 = arith.constant 0 : index
    %c0_1 = arith.constant 0 : index
    %2 = vector.load %arg2[%c0, %1, %c0_0, %c0_1] : memref<1x18x24x32xf32, #tpu.memory_space<vmem>>, vector<1x10x24x32xf32>
    %3 = vector.shape_cast %2 : vector<1x10x24x32xf32> to vector<10x24x32xf32>
    %4 = vector.shape_cast %3 : vector<10x24x32xf32> to vector<240x32xf32>
    %c0_2 = arith.constant 0 : index
    %c0_3 = arith.constant 0 : index
    %5 = vector.load %arg3[%c0_2, %c0_3] : memref<32x128xf32, #tpu.memory_space<vmem>>, vector<32x128xf32>
    %cst = arith.constant dense<0.000000e+00> : vector<240x128xf32>
    %6 = tpu.matmul %4, %5, %cst {dimension_numbers = #tpu.dot_dimension_numbers<[1], [0], [0], [1], [0, 0, 1, 1], [], []>} : vector<240x32xf32>, vector<32x128xf32>, vector<240x128xf32> -> vector<240x128xf32>
    %c0_4 = arith.constant 0 : index
    %c0_5 = arith.constant 0 : index
    %7 = vector.load %arg4[%c0_4, %c0_5] : memref<1x128xf32, #tpu.memory_space<vmem>>, vector<1x128xf32>
    %8 = vector.broadcast %7 : vector<1x128xf32> to vector<240x128xf32>
    %9 = arith.mulf %6, %8 : vector<240x128xf32>
    %c0_6 = arith.constant 0 : index
    %c0_7 = arith.constant 0 : index
    %10 = vector.load %arg5[%c0_6, %c0_7] : memref<1x128xf32, #tpu.memory_space<vmem>>, vector<1x128xf32>
    %11 = vector.broadcast %10 : vector<1x128xf32> to vector<240x128xf32>
    %12 = arith.addf %9, %11 : vector<240x128xf32>
    %13 = arith.negf %12 : vector<240x128xf32>
    %14 = math.exp %13 : vector<240x128xf32>
    %cst_8 = arith.constant 1.000000e+00 : f32
    %15 = vector.broadcast %cst_8 : f32 to vector<240x128xf32>
    %16 = arith.addf %15, %14 : vector<240x128xf32>
    %17 = arith.divf %15, %16 : vector<240x128xf32>
    %18 = arith.mulf %12, %17 : vector<240x128xf32>
    %19 = vector.shape_cast %18 : vector<240x128xf32> to vector<10x24x128xf32>
    %20 = tpu.iota {dimensions = array<i32: 0>} : vector<10x24x1xi32>
    %21 = vector.broadcast %0 : i32 to vector<10x24x1xi32>
    %22 = arith.addi %21, %20 : vector<10x24x1xi32>
    %23 = tpu.iota {dimensions = array<i32: 1>} : vector<10x24x1xi32>
    %c1_i32 = arith.constant 1 : i32
    %24 = vector.broadcast %c1_i32 : i32 to vector<10x24x1xi32>
    %25 = arith.cmpi sge, %22, %24 : vector<10x24x1xi32>
    %c17_i32 = arith.constant 17 : i32
    %26 = vector.broadcast %c17_i32 : i32 to vector<10x24x1xi32>
    %27 = arith.cmpi slt, %22, %26 : vector<10x24x1xi32>
    %28 = arith.andi %25, %27 : vector<10x24x1xi1>
    %c1_i32_9 = arith.constant 1 : i32
    %29 = vector.broadcast %c1_i32_9 : i32 to vector<10x24x1xi32>
    %30 = arith.cmpi sge, %23, %29 : vector<10x24x1xi32>
    %31 = arith.andi %28, %30 : vector<10x24x1xi1>
    %c17_i32_10 = arith.constant 17 : i32
    %32 = vector.broadcast %c17_i32_10 : i32 to vector<10x24x1xi32>
    %33 = arith.cmpi slt, %23, %32 : vector<10x24x1xi32>
    %34 = arith.andi %31, %33 : vector<10x24x1xi1>
    %35 = arith.extui %34 : vector<10x24x1xi1> to vector<10x24x1xi32>
    %36 = arith.sitofp %35 : vector<10x24x1xi32> to vector<10x24x1xf32>
    %37 = vector.broadcast %36 : vector<10x24x1xf32> to vector<10x24x128xf32>
    %38 = arith.mulf %19, %37 : vector<10x24x128xf32>
    %c0_11 = arith.constant 0 : index
    %c0_12 = arith.constant 0 : index
    %39 = vector.load %arg6[%c0_11, %c0_12] : memref<9x128xf32, #tpu.memory_space<vmem>>, vector<9x128xf32>
    %cst_13 = arith.constant 0.000000e+00 : f32
    %40 = vector.broadcast %cst_13 : f32 to vector<8x16x128xf32>
    %41 = vector.extract_strided_slice %39 {offsets = [0, 0], sizes = [1, 128], strides = [1, 1]} : vector<9x128xf32> to vector<1x128xf32>
    %42 = vector.shape_cast %41 : vector<1x128xf32> to vector<1x1x128xf32>
    %43 = vector.extract_strided_slice %38 {offsets = [0, 0, 0], sizes = [8, 16, 128], strides = [1, 1, 1]} : vector<10x24x128xf32> to vector<8x16x128xf32>
    %44 = vector.broadcast %42 : vector<1x1x128xf32> to vector<8x16x128xf32>
    %45 = arith.mulf %43, %44 : vector<8x16x128xf32>
    %46 = arith.addf %40, %45 : vector<8x16x128xf32>
    %47 = vector.extract_strided_slice %39 {offsets = [1, 0], sizes = [1, 128], strides = [1, 1]} : vector<9x128xf32> to vector<1x128xf32>
    %48 = vector.shape_cast %47 : vector<1x128xf32> to vector<1x1x128xf32>
    %49 = vector.extract_strided_slice %38 {offsets = [0, 1, 0], sizes = [8, 16, 128], strides = [1, 1, 1]} : vector<10x24x128xf32> to vector<8x16x128xf32>
    %50 = vector.broadcast %48 : vector<1x1x128xf32> to vector<8x16x128xf32>
    %51 = arith.mulf %49, %50 : vector<8x16x128xf32>
    %52 = arith.addf %46, %51 : vector<8x16x128xf32>
    %53 = vector.extract_strided_slice %39 {offsets = [2, 0], sizes = [1, 128], strides = [1, 1]} : vector<9x128xf32> to vector<1x128xf32>
    %54 = vector.shape_cast %53 : vector<1x128xf32> to vector<1x1x128xf32>
    %55 = vector.extract_strided_slice %38 {offsets = [0, 2, 0], sizes = [8, 16, 128], strides = [1, 1, 1]} : vector<10x24x128xf32> to vector<8x16x128xf32>
    %56 = vector.broadcast %54 : vector<1x1x128xf32> to vector<8x16x128xf32>
    %57 = arith.mulf %55, %56 : vector<8x16x128xf32>
    %58 = arith.addf %52, %57 : vector<8x16x128xf32>
    %59 = vector.extract_strided_slice %39 {offsets = [3, 0], sizes = [1, 128], strides = [1, 1]} : vector<9x128xf32> to vector<1x128xf32>
    %60 = vector.shape_cast %59 : vector<1x128xf32> to vector<1x1x128xf32>
    %61 = vector.extract_strided_slice %38 {offsets = [1, 0, 0], sizes = [8, 16, 128], strides = [1, 1, 1]} : vector<10x24x128xf32> to vector<8x16x128xf32>
    %62 = vector.broadcast %60 : vector<1x1x128xf32> to vector<8x16x128xf32>
    %63 = arith.mulf %61, %62 : vector<8x16x128xf32>
    %64 = arith.addf %58, %63 : vector<8x16x128xf32>
    %65 = vector.extract_strided_slice %39 {offsets = [4, 0], sizes = [1, 128], strides = [1, 1]} : vector<9x128xf32> to vector<1x128xf32>
    %66 = vector.shape_cast %65 : vector<1x128xf32> to vector<1x1x128xf32>
    %67 = vector.extract_strided_slice %38 {offsets = [1, 1, 0], sizes = [8, 16, 128], strides = [1, 1, 1]} : vector<10x24x128xf32> to vector<8x16x128xf32>
    %68 = vector.broadcast %66 : vector<1x1x128xf32> to vector<8x16x128xf32>
    %69 = arith.mulf %67, %68 : vector<8x16x128xf32>
    %70 = arith.addf %64, %69 : vector<8x16x128xf32>
    %71 = vector.extract_strided_slice %39 {offsets = [5, 0], sizes = [1, 128], strides = [1, 1]} : vector<9x128xf32> to vector<1x128xf32>
    %72 = vector.shape_cast %71 : vector<1x128xf32> to vector<1x1x128xf32>
    %73 = vector.extract_strided_slice %38 {offsets = [1, 2, 0], sizes = [8, 16, 128], strides = [1, 1, 1]} : vector<10x24x128xf32> to vector<8x16x128xf32>
    %74 = vector.broadcast %72 : vector<1x1x128xf32> to vector<8x16x128xf32>
    %75 = arith.mulf %73, %74 : vector<8x16x128xf32>
    %76 = arith.addf %70, %75 : vector<8x16x128xf32>
    %77 = vector.extract_strided_slice %39 {offsets = [6, 0], sizes = [1, 128], strides = [1, 1]} : vector<9x128xf32> to vector<1x128xf32>
    %78 = vector.shape_cast %77 : vector<1x128xf32> to vector<1x1x128xf32>
    %79 = vector.extract_strided_slice %38 {offsets = [2, 0, 0], sizes = [8, 16, 128], strides = [1, 1, 1]} : vector<10x24x128xf32> to vector<8x16x128xf32>
    %80 = vector.broadcast %78 : vector<1x1x128xf32> to vector<8x16x128xf32>
    %81 = arith.mulf %79, %80 : vector<8x16x128xf32>
    %82 = arith.addf %76, %81 : vector<8x16x128xf32>
    %83 = vector.extract_strided_slice %39 {offsets = [7, 0], sizes = [1, 128], strides = [1, 1]} : vector<9x128xf32> to vector<1x128xf32>
    %84 = vector.shape_cast %83 : vector<1x128xf32> to vector<1x1x128xf32>
    %85 = vector.extract_strided_slice %38 {offsets = [2, 1, 0], sizes = [8, 16, 128], strides = [1, 1, 1]} : vector<10x24x128xf32> to vector<8x16x128xf32>
    %86 = vector.broadcast %84 : vector<1x1x128xf32> to vector<8x16x128xf32>
    %87 = arith.mulf %85, %86 : vector<8x16x128xf32>
    %88 = arith.addf %82, %87 : vector<8x16x128xf32>
    %89 = vector.extract_strided_slice %39 {offsets = [8, 0], sizes = [1, 128], strides = [1, 1]} : vector<9x128xf32> to vector<1x128xf32>
    %90 = vector.shape_cast %89 : vector<1x128xf32> to vector<1x1x128xf32>
    %91 = vector.extract_strided_slice %38 {offsets = [2, 2, 0], sizes = [8, 16, 128], strides = [1, 1, 1]} : vector<10x24x128xf32> to vector<8x16x128xf32>
    %92 = vector.broadcast %90 : vector<1x1x128xf32> to vector<8x16x128xf32>
    %93 = arith.mulf %91, %92 : vector<8x16x128xf32>
    %94 = arith.addf %88, %93 : vector<8x16x128xf32>
    %c0_14 = arith.constant 0 : index
    %c0_15 = arith.constant 0 : index
    %95 = vector.load %arg7[%c0_14, %c0_15] : memref<1x128xf32, #tpu.memory_space<vmem>>, vector<1x128xf32>
    %96 = vector.shape_cast %95 : vector<1x128xf32> to vector<1x1x128xf32>
    %97 = vector.broadcast %96 : vector<1x1x128xf32> to vector<8x16x128xf32>
    %98 = arith.mulf %94, %97 : vector<8x16x128xf32>
    %c0_16 = arith.constant 0 : index
    %c0_17 = arith.constant 0 : index
    %99 = vector.load %arg8[%c0_16, %c0_17] : memref<1x128xf32, #tpu.memory_space<vmem>>, vector<1x128xf32>
    %100 = vector.shape_cast %99 : vector<1x128xf32> to vector<1x1x128xf32>
    %101 = vector.broadcast %100 : vector<1x1x128xf32> to vector<8x16x128xf32>
    %102 = arith.addf %98, %101 : vector<8x16x128xf32>
    %103 = arith.negf %102 : vector<8x16x128xf32>
    %104 = math.exp %103 : vector<8x16x128xf32>
    %cst_18 = arith.constant 1.000000e+00 : f32
    %105 = vector.broadcast %cst_18 : f32 to vector<8x16x128xf32>
    %106 = arith.addf %105, %104 : vector<8x16x128xf32>
    %107 = arith.divf %105, %106 : vector<8x16x128xf32>
    %108 = arith.mulf %102, %107 : vector<8x16x128xf32>
    %109 = vector.shape_cast %108 : vector<8x16x128xf32> to vector<1x8x16x128xf32>
    %c0_19 = arith.constant 0 : index
    %c0_20 = arith.constant 0 : index
    %c0_21 = arith.constant 0 : index
    %c0_22 = arith.constant 0 : index
    %110 = vector.load %arg9[%c0_19, %c0_20, %c0_21, %c0_22] : memref<1x8x16x128xf32, #tpu.memory_space<vmem>>, vector<1x8x16x128xf32>
    tpu.vector_store %arg9[%c0_19, %c0_20, %c0_21, %c0_22], %109 {strides = array<i32>} : memref<1x8x16x128xf32, #tpu.memory_space<vmem>>, vector<1x8x16x128xf32>,
    %c0_i32 = arith.constant 0 : i32
    %111 = arith.cmpi eq, %arg1, %c0_i32 : i32
    %112 = arith.extui %111 : i1 to i32
    %c0_i32_23 = arith.constant 0 : i32
    %113 = arith.cmpi ne, %112, %c0_i32_23 : i32
    scf.if %113 {
      %cst_32 = arith.constant 0.000000e+00 : f32
      %121 = vector.broadcast %cst_32 : f32 to vector<1x1x128xf32>
      %c0_33 = arith.constant 0 : index
      %c0_34 = arith.constant 0 : index
      %c0_35 = arith.constant 0 : index
      %122 = vector.load %arg10[%c0_33, %c0_34, %c0_35] : memref<1x1x128xf32, #tpu.memory_space<vmem>>, vector<1x1x128xf32>
      tpu.vector_store %arg10[%c0_33, %c0_34, %c0_35], %121 {strides = array<i32>} : memref<1x1x128xf32, #tpu.memory_space<vmem>>, vector<1x1x128xf32>,
    } else {
    }
    %c0_24 = arith.constant 0 : index
    %c0_25 = arith.constant 0 : index
    %c0_26 = arith.constant 0 : index
    %114 = vector.load %arg10[%c0_24, %c0_25, %c0_26] : memref<1x1x128xf32, #tpu.memory_space<vmem>>, vector<1x1x128xf32>
    %cst_27 = arith.constant dense<0.000000e+00> : vector<128xf32>
    %115 = vector.multi_reduction <add>, %108, %cst_27 [0, 1] : vector<8x16x128xf32> to vector<128xf32>
    %116 = vector.shape_cast %115 : vector<128xf32> to vector<1x1x128xf32>
    %cst_28 = arith.constant 3.906250e-03 : f32
    %117 = vector.broadcast %cst_28 : f32 to vector<1x1x128xf32>
    %118 = arith.mulf %116, %117 : vector<1x1x128xf32>
    %119 = arith.addf %114, %118 : vector<1x1x128xf32>
    %c0_29 = arith.constant 0 : index
    %c0_30 = arith.constant 0 : index
    %c0_31 = arith.constant 0 : index
    %120 = vector.load %arg10[%c0_29, %c0_30, %c0_31] : memref<1x1x128xf32, #tpu.memory_space<vmem>>, vector<1x1x128xf32>
    tpu.vector_store %arg10[%c0_29, %c0_30, %c0_31], %119 {strides = array<i32>} : memref<1x1x128xf32, #tpu.memory_space<vmem>>, vector<1x1x128xf32>,
    return
  }
  func.func @transform_0(%arg0: i32, %arg1: i32) -> (i32, i32, i32, i32) {
    %c0_i32 = arith.constant 0 : i32
    %c0_i32_0 = arith.constant 0 : i32
    %c0_i32_1 = arith.constant 0 : i32
    %c0_i32_2 = arith.constant 0 : i32
    return %arg0, %c0_i32, %c0_i32_0, %c0_i32_1 : i32, i32, i32, i32
  }
  func.func @transform_1(%arg0: i32, %arg1: i32) -> (i32, i32) {
    %c0_i32 = arith.constant 0 : i32
    %c0_i32_0 = arith.constant 0 : i32
    %c0_i32_1 = arith.constant 0 : i32
    return %c0_i32, %c0_i32_0 : i32, i32
  }
  func.func @transform_2(%arg0: i32, %arg1: i32) -> (i32, i32) {
    %c0_i32 = arith.constant 0 : i32
    %c0_i32_0 = arith.constant 0 : i32
    %c0_i32_1 = arith.constant 0 : i32
    return %c0_i32, %c0_i32_0 : i32, i32
  }
  func.func @transform_3(%arg0: i32, %arg1: i32) -> (i32, i32) {
    %c0_i32 = arith.constant 0 : i32
    %c0_i32_0 = arith.constant 0 : i32
    %c0_i32_1 = arith.constant 0 : i32
    return %c0_i32, %c0_i32_0 : i32, i32
  }
  func.func @transform_4(%arg0: i32, %arg1: i32) -> (i32, i32) {
    %c0_i32 = arith.constant 0 : i32
    %c0_i32_0 = arith.constant 0 : i32
    %c0_i32_1 = arith.constant 0 : i32
    return %c0_i32, %c0_i32_0 : i32, i32
  }
  func.func @transform_5(%arg0: i32, %arg1: i32) -> (i32, i32) {
    %c0_i32 = arith.constant 0 : i32
    %c0_i32_0 = arith.constant 0 : i32
    %c0_i32_1 = arith.constant 0 : i32
    return %c0_i32, %c0_i32_0 : i32, i32
  }
  func.func @transform_6(%arg0: i32, %arg1: i32) -> (i32, i32) {
    %c0_i32 = arith.constant 0 : i32
    %c0_i32_0 = arith.constant 0 : i32
    %c0_i32_1 = arith.constant 0 : i32
    return %c0_i32, %c0_i32_0 : i32, i32
  }
  func.func @transform_7(%arg0: i32, %arg1: i32) -> (i32, i32, i32, i32) {
    %c0_i32 = arith.constant 0 : i32
    %c0_i32_0 = arith.constant 0 : i32
    %c0_i32_1 = arith.constant 0 : i32
    return %arg0, %arg1, %c0_i32, %c0_i32_0 : i32, i32, i32, i32
  }
  func.func @transform_8(%arg0: i32, %arg1: i32) -> (i32, i32, i32) {
    %c0_i32 = arith.constant 0 : i32
    %c0_i32_0 = arith.constant 0 : i32
    %c0_i32_1 = arith.constant 0 : i32
    return %arg0, %c0_i32, %c0_i32_0 : i32, i32, i32
  }
}

module attributes {stable_mosaic.version = 11 : i64} {
  func.func @_project_kernel(%arg0: i32, %arg1: i32, %arg2: memref<1x256x128xf32, #tpu.memory_space<vmem>>, %arg3: memref<1x1x128xf32, #tpu.memory_space<vmem>>, %arg4: memref<32x128xf32, #tpu.memory_space<vmem>>, %arg5: memref<32x1xf32, #tpu.memory_space<vmem>>, %arg6: memref<32x1xf32, #tpu.memory_space<vmem>>, %arg7: memref<1x32x256xf32, #tpu.memory_space<vmem>>, %arg8: memref<1x32x256xf32, #tpu.memory_space<vmem>>) attributes {dimension_semantics = [#tpu.dimension_semantics<parallel>, #tpu.dimension_semantics<parallel>], iteration_bounds = array<i64: 2, 1>, scalar_prefetch = 0 : i64, scratch_operands = 0 : i64, tpu.core_type = #tpu.core_type<tc>, window_params = [{transform_indices = @transform_0, window_bounds = array<i64: 1, 256, 128>}, {transform_indices = @transform_1, window_bounds = array<i64: 1, 1, 128>}, {pipeline_mode = #tpu.pipeline_mode<synchronous>, transform_indices = @transform_2, window_bounds = array<i64: 32, 128>}, {pipeline_mode = #tpu.pipeline_mode<synchronous>, transform_indices = @transform_3, window_bounds = array<i64: 32, 1>}, {pipeline_mode = #tpu.pipeline_mode<synchronous>, transform_indices = @transform_4, window_bounds = array<i64: 32, 1>}, {transform_indices = @transform_5, window_bounds = array<i64: 1, 32, 256>}, {transform_indices = @transform_6, window_bounds = array<i64: 1, 32, 256>}]} {
    %c0 = arith.constant 0 : index
    %c0_0 = arith.constant 0 : index
    %c0_1 = arith.constant 0 : index
    %0 = vector.load %arg2[%c0, %c0_0, %c0_1] : memref<1x256x128xf32, #tpu.memory_space<vmem>>, vector<1x256x128xf32>
    %1 = vector.shape_cast %0 : vector<1x256x128xf32> to vector<256x128xf32>
    %c0_2 = arith.constant 0 : index
    %c0_3 = arith.constant 0 : index
    %c0_4 = arith.constant 0 : index
    %2 = vector.load %arg3[%c0_2, %c0_3, %c0_4] : memref<1x1x128xf32, #tpu.memory_space<vmem>>, vector<1x1x128xf32>
    %3 = vector.shape_cast %2 : vector<1x1x128xf32> to vector<1x128xf32>
    %c0_5 = arith.constant 0 : index
    %c0_6 = arith.constant 0 : index
    %4 = vector.load %arg4[%c0_5, %c0_6] : memref<32x128xf32, #tpu.memory_space<vmem>>, vector<32x128xf32>
    %5 = vector.broadcast %3 : vector<1x128xf32> to vector<32x128xf32>
    %6 = arith.mulf %4, %5 : vector<32x128xf32>
    %cst = arith.constant dense<0.000000e+00> : vector<32x256xf32>
    %7 = tpu.matmul %6, %1, %cst {dimension_numbers = #tpu.dot_dimension_numbers<[1], [1], [0], [0], [0, 0, 1, 0], [], []>} : vector<32x128xf32>, vector<256x128xf32>, vector<32x256xf32> -> vector<32x256xf32>
    %c0_7 = arith.constant 0 : index
    %c0_8 = arith.constant 0 : index
    %8 = vector.load %arg5[%c0_7, %c0_8] : memref<32x1xf32, #tpu.memory_space<vmem>>, vector<32x1xf32>
    %9 = vector.broadcast %8 : vector<32x1xf32> to vector<32x256xf32>
    %10 = arith.mulf %7, %9 : vector<32x256xf32>
    %c0_9 = arith.constant 0 : index
    %c0_10 = arith.constant 0 : index
    %11 = vector.load %arg6[%c0_9, %c0_10] : memref<32x1xf32, #tpu.memory_space<vmem>>, vector<32x1xf32>
    %12 = vector.broadcast %11 : vector<32x1xf32> to vector<32x256xf32>
    %13 = arith.addf %10, %12 : vector<32x256xf32>
    %c0_11 = arith.constant 0 : index
    %c0_12 = arith.constant 0 : index
    %c0_13 = arith.constant 0 : index
    %14 = vector.load %arg7[%c0_11, %c0_12, %c0_13] : memref<1x32x256xf32, #tpu.memory_space<vmem>>, vector<1x32x256xf32>
    %15 = vector.shape_cast %14 : vector<1x32x256xf32> to vector<32x256xf32>
    %16 = arith.addf %13, %15 : vector<32x256xf32>
    %17 = vector.shape_cast %16 : vector<32x256xf32> to vector<1x32x256xf32>
    %c0_14 = arith.constant 0 : index
    %c0_15 = arith.constant 0 : index
    %c0_16 = arith.constant 0 : index
    %18 = vector.load %arg8[%c0_14, %c0_15, %c0_16] : memref<1x32x256xf32, #tpu.memory_space<vmem>>, vector<1x32x256xf32>
    tpu.vector_store %arg8[%c0_14, %c0_15, %c0_16], %17 {strides = array<i32>} : memref<1x32x256xf32, #tpu.memory_space<vmem>>, vector<1x32x256xf32>,
    return
  }
  func.func @transform_0(%arg0: i32, %arg1: i32) -> (i32, i32, i32) {
    %c0_i32 = arith.constant 0 : i32
    %c0_i32_0 = arith.constant 0 : i32
    return %arg0, %arg1, %c0_i32 : i32, i32, i32
  }
  func.func @transform_1(%arg0: i32, %arg1: i32) -> (i32, i32, i32) {
    %c0_i32 = arith.constant 0 : i32
    %c0_i32_0 = arith.constant 0 : i32
    %c0_i32_1 = arith.constant 0 : i32
    return %arg0, %c0_i32, %c0_i32_0 : i32, i32, i32
  }
  func.func @transform_2(%arg0: i32, %arg1: i32) -> (i32, i32) {
    %c0_i32 = arith.constant 0 : i32
    %c0_i32_0 = arith.constant 0 : i32
    %c0_i32_1 = arith.constant 0 : i32
    return %c0_i32, %c0_i32_0 : i32, i32
  }
  func.func @transform_3(%arg0: i32, %arg1: i32) -> (i32, i32) {
    %c0_i32 = arith.constant 0 : i32
    %c0_i32_0 = arith.constant 0 : i32
    %c0_i32_1 = arith.constant 0 : i32
    return %c0_i32, %c0_i32_0 : i32, i32
  }
  func.func @transform_4(%arg0: i32, %arg1: i32) -> (i32, i32) {
    %c0_i32 = arith.constant 0 : i32
    %c0_i32_0 = arith.constant 0 : i32
    %c0_i32_1 = arith.constant 0 : i32
    return %c0_i32, %c0_i32_0 : i32, i32
  }
  func.func @transform_5(%arg0: i32, %arg1: i32) -> (i32, i32, i32) {
    %c0_i32 = arith.constant 0 : i32
    %c0_i32_0 = arith.constant 0 : i32
    return %arg0, %c0_i32, %arg1 : i32, i32, i32
  }
  func.func @transform_6(%arg0: i32, %arg1: i32) -> (i32, i32, i32) {
    %c0_i32 = arith.constant 0 : i32
    %c0_i32_0 = arith.constant 0 : i32
    return %arg0, %c0_i32, %arg1 : i32, i32, i32
  }
}

</mosaic_0001>

<llo_original>
// kernel: mbconv_forward.4
$region0: #{mbconv_forward.4}
  #allocation0 [shape = 'u32[]', space=smem, size = 0x4, offset = 0x4, fixed_abs, tag = 'smem constant byte address 0x4 - core index']
  #allocation1 [shape = 'u32[144,128]{1,0:T(1,128)}', space=vmem, size = 0x12000, scoped, tag = 'internal scratch']
  %s0 = inlined_call_operand.vmem [shape: f32[2,128], index: 0, kind: input, shape index: {}]
  %s1 = inlined_call_operand.vmem [shape: f32[128,8], index: 1, kind: input, shape index: {}]
  %s2 = inlined_call_operand.vmem [shape: f32[1,8], index: 2, kind: input, shape index: {}]
  %s3 = inlined_call_operand.vmem [shape: f32[8,128], index: 3, kind: input, shape index: {}]
  %s4 = inlined_call_operand.vmem [shape: f32[1,128], index: 4, kind: input, shape index: {}]
  %s5 = inlined_call_operand.vmem [shape: f32[2,128], index: 5, kind: output, shape index: {}]
  %s6 = sld [smem:[#allocation0]]
  $region30: #{mbconv_forward.4} parent=0
    _
  %s8 = ssub.s32 1, %s6
  %s9 = scalar_select 0, %s8, %s6
  // Predicated region
  $region2: #{mbconv_forward.4} parent=0 // pred_check
    _
  $region3: #{mbconv_forward.4} parent=0 // pred_check_branch
    %11 = sbr.rel (0) target = $region5
  $region4: #{mbconv_forward.4} parent=0 // pred_region
    _
  $region5: #{mbconv_forward.4} parent=0 // pred_fallthru
    _
  // Predicated region
  $region6: #{mbconv_forward.4} parent=0 // pred_check
    _
  $region7: #{mbconv_forward.4} parent=0 // pred_check_branch
    %13 = sbr.rel (0) target = $region9
  $region8: #{mbconv_forward.4} parent=0 // pred_region
    _
  $region9: #{mbconv_forward.4} parent=0 // pred_fallthru
    _
  // Predicated region
  $region10: #{mbconv_forward.4} parent=0 // pred_check
    _
  $region11: #{mbconv_forward.4} parent=0 // pred_check_branch
    %15 = sbr.rel (0) target = $region13
  $region12: #{mbconv_forward.4} parent=0 // pred_region
    _
  $region13: #{mbconv_forward.4} parent=0 // pred_fallthru
    _
  // Predicated region
  $region14: #{mbconv_forward.4} parent=0 // pred_check
    _
  $region15: #{mbconv_forward.4} parent=0 // pred_check_branch
    %17 = sbr.rel (0) target = $region17
  $region16: #{mbconv_forward.4} parent=0 // pred_region
    _
  $region17: #{mbconv_forward.4} parent=0 // pred_fallthru
    _
  // Predicated region
  $region18: #{mbconv_forward.4} parent=0 // pred_check
    _
  $region19: #{mbconv_forward.4} parent=0 // pred_check_branch
    %19 = sbr.rel (0) target = $region21
  $region20: #{mbconv_forward.4} parent=0 // pred_region
    _
  $region21: #{mbconv_forward.4} parent=0 // pred_fallthru
    _
  %v20 = vld [vmem:[%s0] sm:$0x3]
  %v21 = vld [vmem:[%s1] sm:$0xff]
  %v22 = vld [vmem:[%s1 + $0x8] sm:$0xff]
  %v23 = vld [vmem:[%s1 + $0x10] sm:$0xff]
  %v24 = vld [vmem:[%s1 + $0x18] sm:$0xff]
  %v25 = vld [vmem:[%s1 + $0x20] sm:$0xff]
  %v26 = vld [vmem:[%s1 + $0x28] sm:$0xff]
  %v27 = vld [vmem:[%s1 + $0x30] sm:$0xff]
  %v28 = vld [vmem:[%s1 + $0x38] sm:$0xff]
  %v29 = vld [vmem:[%s1 + $0x40] sm:$0xff]
  %v30 = vld [vmem:[%s1 + $0x48] sm:$0xff]
  %v31 = vld [vmem:[%s1 + $0x50] sm:$0xff]
  %v32 = vld [vmem:[%s1 + $0x58] sm:$0xff]
  %v33 = vld [vmem:[%s1 + $0x60] sm:$0xff]
  %v34 = vld [vmem:[%s1 + $0x68] sm:$0xff]
  %v35 = vld [vmem:[%s1 + $0x70] sm:$0xff]
  %v36 = vld [vmem:[%s1 + $0x78] sm:$0xff]
  %v37 = vld [vmem:[%s2] sm:$0x1]
  %v39 = vlaneseq
  %v40 = vshrl.u32 %v39, 7
  %v41 = vsub.s32 0, %v40
  %v42 = vrot.slane %v37, %v41
  %44 = vmatprep.subr.mxu0 0.0
  %45 = vmatpush1.msra.mxu0 %v36
  %46 = vmatprep.subr.mxu0 0.0
  %47 = vmatpush1.msra.mxu0 %v35
  %48 = vmatprep.subr.mxu0 0.0
  %49 = vmatpush1.msra.mxu0 %v34
  %50 = vmatprep.subr.mxu0 0.0
  %51 = vmatpush1.msra.mxu0 %v33
  %52 = vmatprep.subr.mxu0 0.0
  %53 = vmatpush1.msra.mxu0 %v32
  %54 = vmatprep.subr.mxu0 0.0
  %55 = vmatpush1.msra.mxu0 %v31
  %56 = vmatprep.subr.mxu0 0.0
  %57 = vmatpush1.msra.mxu0 %v30
  %58 = vmatprep.subr.mxu0 0.0
  %59 = vmatpush1.msra.mxu0 %v29
  %60 = vmatprep.subr.mxu0 0.0
  %61 = vmatpush1.msra.mxu0 %v28
  %62 = vmatprep.subr.mxu0 0.0
  %63 = vmatpush1.msra.mxu0 %v27
  %64 = vmatprep.subr.mxu0 0.0
  %65 = vmatpush1.msra.mxu0 %v26
  %66 = vmatprep.subr.mxu0 0.0
  %67 = vmatpush1.msra.mxu0 %v25
  %68 = vmatprep.subr.mxu0 0.0
  %69 = vmatpush1.msra.mxu0 %v24
  %70 = vmatprep.subr.mxu0 0.0
  %71 = vmatpush1.msra.mxu0 %v23
  %72 = vmatprep.subr.mxu0 0.0
  %73 = vmatpush1.msra.mxu0 %v22
  %74 = vmatprep.subr.mxu0 0.0
  %75 = vmatpush1.msra.mxu0 %v21
  %76 = vmatprep.subr.mxu0 0.0
  %77 = vmatpush2.msra.mxu0 0.0
  %78 = vmatprep.subr.mxu0 0.0
  %79 = vmatpush2.msra.mxu0 0.0
  %80 = vmatprep.subr.mxu0 0.0
  %81 = vmatpush2.msra.mxu0 0.0
  %82 = vmatprep.subr.mxu0 0.0
  %83 = vmatpush2.msra.mxu0 0.0
  %84 = vmatprep.subr.mxu0 0.0
  %85 = vmatpush2.msra.mxu0 0.0
  %86 = vmatprep.subr.mxu0 0.0
  %87 = vmatpush2.msra.mxu0 0.0
  %88 = vmatprep.subr.mxu0 0.0
  %89 = vmatpush2.msra.mxu0 0.0
  %90 = vmatprep.subr.mxu0 0.0
  %91 = vmatpush2.msra.mxu0 0.0
  %92 = vmatprep.subr.mxu0 0.0
  %93 = vmatpush2.msra.mxu0 0.0
  %94 = vmatprep.subr.mxu0 0.0
  %95 = vmatpush2.msra.mxu0 0.0
  %96 = vmatprep.subr.mxu0 0.0
  %97 = vmatpush2.msra.mxu0 0.0
  %98 = vmatprep.subr.mxu0 0.0
  %99 = vmatpush2.msra.mxu0 0.0
  %100 = vmatprep.subr.mxu0 0.0
  %101 = vmatpush2.msra.mxu0 0.0
  %102 = vmatprep.subr.mxu0 0.0
  %103 = vmatpush2.msra.mxu0 0.0
  %104 = vmatprep.subr.mxu0 0.0
  %105 = vmatpush2.msra.mxu0 0.0
  %106 = vmatprep.subr.mxu0 0.0
  %107 = vmatpush2.msra.mxu0 0.0
  %108 = vmatprep.mubr.f32.mxu0 0.0
  %109 = vmatmul.mubr.f32.gmra.mxu0 %v20
  %v110 = vpop.f32.mrf.mxu0
  %v111 = vadd.f32 %v42, %v110
  %v112 = vpop.f32.mrf.mxu0
  %113 = vdwg.mxu0
  %v114 = vxor.u32 %v111, 2147483648
  %v115 = vmul.f32 %v114, 1.442695
  %v116 = vpow.pop %v115
  %v117 = vadd.f32 %v116, 1.0
  %v118 = vrcp.pop %v117
  %v119 = vmul.f32 1.0, %v118
  %v120 = vmul.f32 %v111, %v119
  %v121 = vld [vmem:[%s3] sm:$0xff]
  %v122 = vld [vmem:[%s4] sm:$0x1]
  %v124 = vlaneseq
  %v125 = vshrl.u32 %v124, 7
  %v126 = vsub.s32 0, %v125
  %v127 = vrot.slane %v122, %v126
  %vm129 = vcmask 64512
  %v131 = vsel %vm129, %v120, 0
  %133 = vmatprep.subr.mxu0 0.0
  %134 = vmatpush1.msra.mxu0 0.0
  %135 = vmatprep.subr.mxu0 0.0
  %136 = vmatpush1.msra.mxu0 0.0
  %137 = vmatprep.subr.mxu0 0.0
  %138 = vmatpush1.msra.mxu0 0.0
  %139 = vmatprep.subr.mxu0 0.0
  %140 = vmatpush1.msra.mxu0 0.0
  %141 = vmatprep.subr.mxu0 0.0
  %142 = vmatpush1.msra.mxu0 0.0
  %143 = vmatprep.subr.mxu0 0.0
  %144 = vmatpush1.msra.mxu0 0.0
  %145 = vmatprep.subr.mxu0 0.0
  %146 = vmatpush1.msra.mxu0 0.0
  %147 = vmatprep.subr.mxu0 0.0
  %148 = vmatpush1.msra.mxu0 0.0
  %149 = vmatprep.subr.mxu0 0.0
  %150 = vmatpush1.msra.mxu0 0.0
  %151 = vmatprep.subr.mxu0 0.0
  %152 = vmatpush1.msra.mxu0 0.0
  %153 = vmatprep.subr.mxu0 0.0
  %154 = vmatpush1.msra.mxu0 0.0
  %155 = vmatprep.subr.mxu0 0.0
  %156 = vmatpush1.msra.mxu0 0.0
  %157 = vmatprep.subr.mxu0 0.0
  %158 = vmatpush1.msra.mxu0 0.0
  %159 = vmatprep.subr.mxu0 0.0
  %160 = vmatpush1.msra.mxu0 0.0
  %161 = vmatprep.subr.mxu0 0.0
  %162 = vmatpush1.msra.mxu0 0.0
  %163 = vmatprep.subr.mxu0 0.0
  %164 = vmatpush1.msra.mxu0 %v121
  %165 = vmatprep.subr.mxu0 0.0
  %166 = vmatpush2.msra.mxu0 0.0
  %167 = vmatprep.subr.mxu0 0.0
  %168 = vmatpush2.msra.mxu0 0.0
  %169 = vmatprep.subr.mxu0 0.0
  %170 = vmatpush2.msra.mxu0 0.0
  %171 = vmatprep.subr.mxu0 0.0
  %172 = vmatpush2.msra.mxu0 0.0
  %173 = vmatprep.subr.mxu0 0.0
  %174 = vmatpush2.msra.mxu0 0.0
  %175 = vmatprep.subr.mxu0 0.0
  %176 = vmatpush2.msra.mxu0 0.0
  %177 = vmatprep.subr.mxu0 0.0
  %178 = vmatpush2.msra.mxu0 0.0
  %179 = vmatprep.subr.mxu0 0.0
  %180 = vmatpush2.msra.mxu0 0.0
  %181 = vmatprep.subr.mxu0 0.0
  %182 = vmatpush2.msra.mxu0 0.0
  %183 = vmatprep.subr.mxu0 0.0
  %184 = vmatpush2.msra.mxu0 0.0
  %185 = vmatprep.subr.mxu0 0.0
  %186 = vmatpush2.msra.mxu0 0.0
  %187 = vmatprep.subr.mxu0 0.0
  %188 = vmatpush2.msra.mxu0 0.0
  %189 = vmatprep.subr.mxu0 0.0
  %190 = vmatpush2.msra.mxu0 0.0
  %191 = vmatprep.subr.mxu0 0.0
  %192 = vmatpush2.msra.mxu0 0.0
  %193 = vmatprep.subr.mxu0 0.0
  %194 = vmatpush2.msra.mxu0 0.0
  %195 = vmatprep.subr.mxu0 0.0
  %196 = vmatpush2.msra.mxu0 0.0
  %197 = vmatprep.mubr.f32.mxu0 0.0
  %198 = vmatmul.mubr.f32.gmra.mxu0 %v131
  %v199 = vpop.f32.mrf.mxu0
  %v200 = vadd.f32 %v127, %v199
  %v201 = vpop.f32.mrf.mxu0
  %202 = vdwg.mxu0
  %v203 = vxor.u32 %v200, 2147483648
  %v204 = vmul.f32 %v203, 1.442695
  %v205 = vpow.pop %v204
  %v206 = vadd.f32 %v205, 1.0
  %v207 = vrcp.pop %v206
  %v208 = vmul.f32 1.0, %v207
  %209 = vst [vmem:[%s5] sm:$0x3] %v208
  // Predicated region
  $region22: #{mbconv_forward.4} parent=0 // pred_check
    _
  $region23: #{mbconv_forward.4} parent=0 // pred_check_branch
    %211 = sbr.rel (0) target = $region25
  $region24: #{mbconv_forward.4} parent=0 // pred_region
    _
  $region25: #{mbconv_forward.4} parent=0 // pred_fallthru
    _
  // Predicated region
  $region26: #{mbconv_forward.4} parent=0 // pred_check
    _
  $region27: #{mbconv_forward.4} parent=0 // pred_check_branch
    %213 = sbr.rel (0) target = $region29
  $region28: #{mbconv_forward.4} parent=0 // pred_region
    _
  $region29: #{mbconv_forward.4} parent=0 // pred_fallthru
    _

// kernel: mbconv_forward.5
$region0: #{mbconv_forward.5}
  #allocation0 [shape = 'u32[]', space=smem, size = 0x4, offset = 0x4, fixed_abs, tag = 'smem constant byte address 0x4 - core index']
  #allocation1 [shape = 'u32[144,128]{1,0:T(1,128)}', space=vmem, size = 0x12000, scoped, tag = 'internal scratch']
  %s0 = inlined_call_operand.vmem [shape: f32[2,256,128], index: 0, kind: input, shape index: {}]
  %s1 = inlined_call_operand.vmem [shape: f32[2,1,128], index: 1, kind: input, shape index: {}]
  %s2 = inlined_call_operand.vmem [shape: f32[32,128], index: 2, kind: input, shape index: {}]
  %s3 = inlined_call_operand.vmem [shape: f32[32,1], index: 3, kind: input, shape index: {}]
  %s4 = inlined_call_operand.vmem [shape: f32[32,1], index: 4, kind: input, shape index: {}]
  %s5 = inlined_call_operand.vmem [shape: f32[2,32,256], index: 5, kind: input, shape index: {}]
  %s6 = inlined_call_operand.vmem [shape: f32[2,32,256], index: 6, kind: output, shape index: {}]
  %s7 = sld [smem:[#allocation0]]
  $region57: #{mbconv_forward.5} parent=0
    _
  %s9 = ssub.s32 1, %s7
  %s10 = scalar_select 0, %s9, %s7
  loop: start=0, step=1, limit=4
  $region2: #{mbconv_forward.5} parent=0 // loop_pre_header
    _
  $region3: #{mbconv_forward.5} parent=0 // loop_header
    %s12 = sphi 0, %s16
    %p13 = scmp.ge.s32.totalorder %s12, 4
    %s19 = sphi 0, %s31
    %s20 = sphi 0, %s27
    %s21 = sphi 0, %s19
    %s22 = sphi 0, %s20
    %s23 = sphi 0, %s21
    %s24 = sphi 0, %s22
    %s36 = sphi 0, %s38
    %s39 = sphi 0, %s36
    %s40 = sphi 0, %s39
    %s56 = sphi 0, %s40
    %s62 = sphi 0, %s64
    %s65 = sphi 0, %s62
    %s66 = sphi 0, %s65
    %s82 = sphi 0, %s66
    %s86 = sphi 0, %s86
    %s88 = sphi 0, %s86
    %s89 = sphi 0, %s88
    %s103 = sphi 0, %s89
    %s107 = sphi 0, %s107
    %s109 = sphi 0, %s107
    %s110 = sphi 0, %s109
    %s124 = sphi 0, %s110
    %s128 = sphi 0, %s128
    %s130 = sphi 0, %s128
    %s131 = sphi 0, %s130
    %s145 = sphi 0, %s131
    %s153 = sphi 0, %s155
    %s156 = sphi 0, %s153
    %s157 = sphi 0, %s156
    %s173 = sphi 0, %s157
    %s181 = sphi 0, %s183
    %s184 = sphi 0, %s181
    %s185 = sphi 0, %s184
    %s201 = sphi 0, %s185
  $region4: #{mbconv_forward.5} parent=0 // loop_header_branch
    %15 = sbr.rel (%p13) target = $region8
  $region5: #{mbconv_forward.5} parent=0 // loop_body
    %s17 = ssub.s32 %s12, 1
    %s18 = ssub.s32 %s12, 2
    %s25 = sadd.s32 1, %s20
    %p26 = scmp.ge.s32.totalorder %s25, 1
    %s27 = scalar_select %p26, 0, %s25
    %s28 = sadd.s32 1, %s19
    %s29 = scalar_select %p26, %s28, %s19
    %p30 = scmp.ge.s32.totalorder %s29, 2
    %s31 = scalar_select %p30, 0, %s29
    %s32 = ssub.s32 %s19, %s31
    %s33 = ssub.s32 %s20, %s27
    %s34 = sor.u32 %s32, %s33
    %p35 = scmp.eq.s32.totalorder %s34, 0
    %s37 = sadd.s32 %s36, 1
    %s38 = scalar_select %p35, %s36, %s37
    %p41 = pneg %p35
    %p42 = scmp.eq.s32.totalorder %s12, 1
    %p43 = por %p41, %p42
    %p44 = scmp.ne.s32.totalorder %s36, %s39
    %p45 = scmp.eq.s32.totalorder %s12, 0
    %p46 = por %p44, %p45
    %p47 = scmp.ne.s32.totalorder %s36, %s39
    %p48 = scmp.eq.s32.totalorder %s17, 1
    %p49 = por %p47, %p48
    %p50 = scmp.ne.s32.totalorder %s39, %s40
    %p51 = scmp.eq.s32.totalorder %s17, 0
    %p52 = por %p50, %p51
    %p53 = scmp.ne.s32.totalorder %s39, %s40
    %p54 = scmp.eq.s32.totalorder %s18, 1
    %p55 = por %p53, %p54
    %p57 = scmp.ne.s32.totalorder %s40, %s56
    %p58 = scmp.eq.s32.totalorder %s18, 0
    %p59 = por %p57, %p58
    %s60 = ssub.s32 %s19, %s31
    %p61 = scmp.eq.s32.totalorder %s60, 0
    %s63 = sadd.s32 %s62, 1
    %s64 = scalar_select %p61, %s62, %s63
    %p67 = pneg %p61
    %p68 = scmp.eq.s32.totalorder %s12, 1
    %p69 = por %p67, %p68
    %p70 = scmp.ne.s32.totalorder %s62, %s65
    %p71 = scmp.eq.s32.totalorder %s12, 0
    %p72 = por %p70, %p71
    %p73 = scmp.ne.s32.totalorder %s62, %s65
    %p74 = scmp.eq.s32.totalorder %s17, 1
    %p75 = por %p73, %p74
    %p76 = scmp.ne.s32.totalorder %s65, %s66
    %p77 = scmp.eq.s32.totalorder %s17, 0
    %p78 = por %p76, %p77
    %p79 = scmp.ne.s32.totalorder %s65, %s66
    %p80 = scmp.eq.s32.totalorder %s18, 1
    %p81 = por %p79, %p80
    %p83 = scmp.ne.s32.totalorder %s66, %s82
    %p84 = scmp.eq.s32.totalorder %s18, 0
    %p85 = por %p83, %p84
    %s87 = sadd.s32 %s86, 1
    %p90 = scmp.eq.s32.totalorder %s12, 1
    %p91 = scmp.ne.s32.totalorder %s86, %s88
    %p92 = scmp.eq.s32.totalorder %s12, 0
    %p93 = por %p91, %p92
    %p94 = scmp.ne.s32.totalorder %s86, %s88
    %p95 = scmp.eq.s32.totalorder %s17, 1
    %p96 = por %p94, %p95
    %p97 = scmp.ne.s32.totalorder %s88, %s89
    %p98 = scmp.eq.s32.totalorder %s17, 0
    %p99 = por %p97, %p98
    %p100 = scmp.ne.s32.totalorder %s88, %s89
    %p101 = scmp.eq.s32.totalorder %s18, 1
    %p102 = por %p100, %p101
    %p104 = scmp.ne.s32.totalorder %s89, %s103
    %p105 = scmp.eq.s32.totalorder %s18, 0
    %p106 = por %p104, %p105
    %s108 = sadd.s32 %s107, 1
    %p111 = scmp.eq.s32.totalorder %s12, 1
    %p112 = scmp.ne.s32.totalorder %s107, %s109
    %p113 = scmp.eq.s32.totalorder %s12, 0
    %p114 = por %p112, %p113
    %p115 = scmp.ne.s32.totalorder %s107, %s109
    %p116 = scmp.eq.s32.totalorder %s17, 1
    %p117 = por %p115, %p116
    %p118 = scmp.ne.s32.totalorder %s109, %s110
    %p119 = scmp.eq.s32.totalorder %s17, 0
    %p120 = por %p118, %p119
    %p121 = scmp.ne.s32.totalorder %s109, %s110
    %p122 = scmp.eq.s32.totalorder %s18, 1
    %p123 = por %p121, %p122
    %p125 = scmp.ne.s32.totalorder %s110, %s124
    %p126 = scmp.eq.s32.totalorder %s18, 0
    %p127 = por %p125, %p126
    %s129 = sadd.s32 %s128, 1
    %p132 = scmp.eq.s32.totalorder %s12, 1
    %p133 = scmp.ne.s32.totalorder %s128, %s130
    %p134 = scmp.eq.s32.totalorder %s12, 0
    %p135 = por %p133, %p134
    %p136 = scmp.ne.s32.totalorder %s128, %s130
    %p137 = scmp.eq.s32.totalorder %s17, 1
    %p138 = por %p136, %p137
    %p139 = scmp.ne.s32.totalorder %s130, %s131
    %p140 = scmp.eq.s32.totalorder %s17, 0
    %p141 = por %p139, %p140
    %p142 = scmp.ne.s32.totalorder %s130, %s131
    %p143 = scmp.eq.s32.totalorder %s18, 1
    %p144 = por %p142, %p143
    %p146 = scmp.ne.s32.totalorder %s131, %s145
    %p147 = scmp.eq.s32.totalorder %s18, 0
    %p148 = por %p146, %p147
    %s149 = ssub.s32 %s19, %s31
    %s150 = ssub.s32 %s20, %s27
    %s151 = sor.u32 %s149, %s150
    %p152 = scmp.eq.s32.totalorder %s151, 0
    %s154 = sadd.s32 %s153, 1
    %s155 = scalar_select %p152, %s153, %s154
    %p158 = pneg %p152
    %p159 = scmp.eq.s32.totalorder %s12, 1
    %p160 = por %p158, %p159
    %p161 = scmp.ne.s32.totalorder %s153, %s156
    %p162 = scmp.eq.s32.totalorder %s12, 0
    %p163 = por %p161, %p162
    %p164 = scmp.ne.s32.totalorder %s153, %s156
    %p165 = scmp.eq.s32.totalorder %s17, 1
    %p166 = por %p164, %p165
    %p167 = scmp.ne.s32.totalorder %s156, %s157
    %p168 = scmp.eq.s32.totalorder %s17, 0
    %p169 = por %p167, %p168
    %p170 = scmp.ne.s32.totalorder %s156, %s157
    %p171 = scmp.eq.s32.totalorder %s18, 1
    %p172 = por %p170, %p171
    %p174 = scmp.ne.s32.totalorder %s157, %s173
    %p175 = scmp.eq.s32.totalorder %s18, 0
    %p176 = por %p174, %p175
    %s177 = ssub.s32 %s19, %s31
    %s178 = ssub.s32 %s20, %s27
    %s179 = sor.u32 %s177, %s178
    %p180 = scmp.eq.s32.totalorder %s179, 0
    %s182 = sadd.s32 %s181, 1
    %s183 = scalar_select %p180, %s181, %s182
    %p186 = pneg %p180
    %p187 = scmp.eq.s32.totalorder %s12, 1
    %p188 = por %p186, %p187
    %p189 = scmp.ne.s32.totalorder %s181, %s184
    %p190 = scmp.eq.s32.totalorder %s12, 0
    %p191 = por %p189, %p190
    %p192 = scmp.ne.s32.totalorder %s181, %s184
    %p193 = scmp.eq.s32.totalorder %s17, 1
    %p194 = por %p192, %p193
    %p195 = scmp.ne.s32.totalorder %s184, %s185
    %p196 = scmp.eq.s32.totalorder %s17, 0
    %p197 = por %p195, %p196
    %p198 = scmp.ne.s32.totalorder %s184, %s185
    %p199 = scmp.eq.s32.totalorder %s18, 1
    %p200 = por %p198, %p199
    %p202 = scmp.ne.s32.totalorder %s185, %s201
    %p203 = scmp.eq.s32.totalorder %s18, 0
    %p204 = por %p202, %p203
    %p205 = scmp.le.s32.totalorder 1, %s12
    %p206 = scmp.lt.s32.totalorder %s12, 3
    %p207 = pnand %p205, %p206
    %p208 = pneg %p207
    // Predicated region
    $region9: #{mbconv_forward.5} parent=5 // pred_check
      _
    $region10: #{mbconv_forward.5} parent=5 // pred_check_branch
      %210 = sbr.rel (%p207) target = $region12
    $region11: #{mbconv_forward.5} parent=5 // pred_region
      %s211 = ssub.s32 %s12, 1
      // Predicated region
      $region13: #{mbconv_forward.5} parent=11 // pred_check
        %p212 = pneg %p99
      $region14: #{mbconv_forward.5} parent=11 // pred_check_branch
        %214 = sbr.rel (%p212) target = $region16
      $region15: #{mbconv_forward.5} parent=11 // pred_region
        _
      $region16: #{mbconv_forward.5} parent=11 // pred_fallthru
        _
      // Predicated region
      $region17: #{mbconv_forward.5} parent=11 // pred_check
        %p215 = pneg %p120
      $region18: #{mbconv_forward.5} parent=11 // pred_check_branch
        %217 = sbr.rel (%p215) target = $region20
      $region19: #{mbconv_forward.5} parent=11 // pred_region
        _
      $region20: #{mbconv_forward.5} parent=11 // pred_fallthru
        _
      // Predicated region
      $region21: #{mbconv_forward.5} parent=11 // pred_check
        %p218 = pneg %p141
      $region22: #{mbconv_forward.5} parent=11 // pred_check_branch
        %220 = sbr.rel (%p218) target = $region24
      $region23: #{mbconv_forward.5} parent=11 // pred_region
        _
      $region24: #{mbconv_forward.5} parent=11 // pred_fallthru
        _
    $region12: #{mbconv_forward.5} parent=5 // pred_fallthru
      _
    %p221 = scmp.lt.s32.totalorder %s12, 2
    // Predicated region
    $region25: #{mbconv_forward.5} parent=5 // pred_check
      %p222 = pneg %p221
    $region26: #{mbconv_forward.5} parent=5 // pred_check_branch
      %224 = sbr.rel (%p222) target = $region28
    $region27: #{mbconv_forward.5} parent=5 // pred_region
      // Predicated region
      $region29: #{mbconv_forward.5} parent=27 // pred_check
        %p225 = pneg %p46
      $region30: #{mbconv_forward.5} parent=27 // pred_check_branch
        %227 = sbr.rel (%p225) target = $region32
      $region31: #{mbconv_forward.5} parent=27 // pred_region
        %s228 = smul.u32 32, %s20
        %p229 = scmp.lt.s32.totalorder %s19, 1
        %s230 = scalar_select %p229, %s19, 1
        %p231 = scmp.lt.s32.totalorder %s228, 31
        %s232 = scalar_select %p231, %s228, 31
        %s233 = smul.addr %s230, 32
        %s234 = sadd.s32 %s232, %s233
        %s235 = smul.addr %s234, 8
        %s236 = scalar_lea.vmem %s0, %s235
        %s237 = smul.u32 32, %s20
      $region32: #{mbconv_forward.5} parent=27 // pred_fallthru
        _
      // Predicated region
      $region33: #{mbconv_forward.5} parent=27 // pred_check
        %p238 = pneg %p72
      $region34: #{mbconv_forward.5} parent=27 // pred_check_branch
        %240 = sbr.rel (%p238) target = $region36
      $region35: #{mbconv_forward.5} parent=27 // pred_region
        %p241 = scmp.lt.s32.totalorder %s19, 1
        %s242 = scalar_select %p241, %s19, 1
        %s243 = scalar_lea.vmem %s1, %s242
      $region36: #{mbconv_forward.5} parent=27 // pred_fallthru
        _
      // Predicated region
      $region37: #{mbconv_forward.5} parent=27 // pred_check
        %p244 = pneg %p163
      $region38: #{mbconv_forward.5} parent=27 // pred_check_branch
        %246 = sbr.rel (%p244) target = $region40
      $region39: #{mbconv_forward.5} parent=27 // pred_region
        %s247 = smul.u32 2, %s20
        %p248 = scmp.lt.s32.totalorder %s19, 1
        %s249 = scalar_select %p248, %s19, 1
        %p250 = scmp.lt.s32.totalorder %s247, 1
        %s251 = scalar_select %p250, %s247, 1
        %s252 = smul.addr %s249, 8
        %s253 = sadd.s32 %s251, %s252
        %s254 = smul.addr %s253, 8
        %s255 = scalar_lea.vmem %s5, %s254
        %s256 = smul.u32 2, %s20
      $region40: #{mbconv_forward.5} parent=27 // pred_fallthru
        _
    $region28: #{mbconv_forward.5} parent=5 // pred_fallthru
      _
    %p257 = scmp.le.s32.totalorder 1, %s12
    %p258 = scmp.lt.s32.totalorder %s12, 3
    %p259 = pnand %p257, %p258
    %p260 = pneg %p259
    // Predicated region
    $region41: #{mbconv_forward.5} parent=5 // pred_check
      _
    $region42: #{mbconv_forward.5} parent=5 // pred_check_branch
      %262 = sbr.rel (%p259) target = $region44
    $region43: #{mbconv_forward.5} parent=5 // pred_region
      %s263 = ssub.s32 %s12, 1
      %s264 = smul.u32 32, %s22
      %p265 = scmp.lt.s32.totalorder %s21, 1
      %s266 = scalar_select %p265, %s21, 1
      %p267 = scmp.lt.s32.totalorder %s264, 31
      %s268 = scalar_select %p267, %s264, 31
      %s269 = smul.addr %s266, 32
      %s270 = sadd.s32 %s268, %s269
      %s271 = smul.addr %s270, 8
      %s272 = scalar_lea.vmem %s0, %s271
      %p273 = pneg %p52
      %p274 = pneg %p49
      %p275 = scmp.lt.s32.totalorder %s21, 1
      %s276 = scalar_select %p275, %s21, 1
      %s277 = scalar_lea.vmem %s1, %s276
      %p278 = pneg %p78
      %p279 = pneg %p75
      %p280 = pneg %p99
      %p281 = pneg %p96
      %p282 = pneg %p120
      %p283 = pneg %p117
      %p284 = pneg %p141
      %p285 = pneg %p138
      %s286 = smul.u32 2, %s22
      %p287 = scmp.lt.s32.totalorder %s21, 1
      %s288 = scalar_select %p287, %s21, 1
      %p289 = scmp.lt.s32.totalorder %s286, 1
      %s290 = scalar_select %p289, %s286, 1
      %s291 = smul.addr %s288, 8
      %s292 = sadd.s32 %s290, %s291
      %s293 = smul.addr %s292, 8
      %s294 = scalar_lea.vmem %s5, %s293
      %p295 = pneg %p169
      %p296 = pneg %p166
      %p297 = pneg %p197
      %p298 = pneg %p194
      %s299 = smul.u32 2, %s22
      %p300 = scmp.lt.s32.totalorder %s21, 1
      %s301 = scalar_select %p300, %s21, 1
      %p302 = scmp.lt.s32.totalorder %s299, 1
      %s303 = scalar_select %p302, %s299, 1
      %s304 = smul.addr %s301, 8
      %s305 = sadd.s32 %s303, %s304
      %s306 = smul.addr %s305, 8
      %s307 = scalar_lea.vmem %s6, %s306
      %s308 = smul.u32 32, %s22
      %p309 = scmp.lt.s32.totalorder %s21, 1
      %s310 = scalar_select %p309, %s21, 1
      %p311 = scmp.lt.s32.totalorder %s308, 31
      %s312 = scalar_select %p311, %s308, 31
      %s313 = smul.addr %s310, 32
      %s314 = sadd.s32 %s312, %s313
      %s315 = smul.addr %s314, 8
      %s316 = scalar_lea.vmem %s0, %s315
      %s317 = smul.u32 32, %s22
      %p318 = scmp.lt.s32.totalorder %s21, 1
      %s319 = scalar_select %p318, %s21, 1
      %s320 = scalar_lea.vmem %s1, %s319
      %s321 = smul.u32 2, %s22
      %p322 = scmp.lt.s32.totalorder %s21, 1
      %s323 = scalar_select %p322, %s21, 1
      %p324 = scmp.lt.s32.totalorder %s321, 1
      %s325 = scalar_select %p324, %s321, 1
      %s326 = smul.addr %s323, 8
      %s327 = sadd.s32 %s325, %s326
      %s328 = smul.addr %s327, 8
      %s329 = scalar_lea.vmem %s5, %s328
      %s330 = smul.u32 2, %s22
      %s331 = smul.u32 2, %s22
      %p332 = scmp.lt.s32.totalorder %s21, 1
      %s333 = scalar_select %p332, %s21, 1
      %p334 = scmp.lt.s32.totalorder %s331, 1
      %s335 = scalar_select %p334, %s331, 1
      %s336 = smul.addr %s333, 8
      %s337 = sadd.s32 %s335, %s336
      %s338 = smul.addr %s337, 8
      %s339 = scalar_lea.vmem %s6, %s338
      %s340 = smul.u32 2, %s22
      %v341 = vld [vmem:[%s316] sm:$0xff]
      %v342 = vld [vmem:[%s316 + $0x8] sm:$0xff]
      %v343 = vld [vmem:[%s316 + $0x10] sm:$0xff]
      %v344 = vld [vmem:[%s316 + $0x18] sm:$0xff]
      %v345 = vld [vmem:[%s316 + $0x20] sm:$0xff]
      %v346 = vld [vmem:[%s316 + $0x28] sm:$0xff]
      %v347 = vld [vmem:[%s316 + $0x30] sm:$0xff]
      %v348 = vld [vmem:[%s316 + $0x38] sm:$0xff]
      %v349 = vld [vmem:[%s316 + $0x40] sm:$0xff]
      %v350 = vld [vmem:[%s316 + $0x48] sm:$0xff]
      %v351 = vld [vmem:[%s316 + $0x50] sm:$0xff]
      %v352 = vld [vmem:[%s316 + $0x58] sm:$0xff]
      %v353 = vld [vmem:[%s316 + $0x60] sm:$0xff]
      %v354 = vld [vmem:[%s316 + $0x68] sm:$0xff]
      %v355 = vld [vmem:[%s316 + $0x70] sm:$0xff]
      %v356 = vld [vmem:[%s316 + $0x78] sm:$0xff]
      %v357 = vld [vmem:[%s316 + $0x80] sm:$0xff]
      %v358 = vld [vmem:[%s316 + $0x88] sm:$0xff]
      %v359 = vld [vmem:[%s316 + $0x90] sm:$0xff]
      %v360 = vld [vmem:[%s316 + $0x98] sm:$0xff]
      %v361 = vld [vmem:[%s316 + $0xa0] sm:$0xff]
      %v362 = vld [vmem:[%s316 + $0xa8] sm:$0xff]
      %v363 = vld [vmem:[%s316 + $0xb0] sm:$0xff]
      %v364 = vld [vmem:[%s316 + $0xb8] sm:$0xff]
      %v365 = vld [vmem:[%s316 + $0xc0] sm:$0xff]
      %v366 = vld [vmem:[%s316 + $0xc8] sm:$0xff]
      %v367 = vld [vmem:[%s316 + $0xd0] sm:$0xff]
      %v368 = vld [vmem:[%s316 + $0xd8] sm:$0xff]
      %v369 = vld [vmem:[%s316 + $0xe0] sm:$0xff]
      %v370 = vld [vmem:[%s316 + $0xe8] sm:$0xff]
      %v371 = vld [vmem:[%s316 + $0xf0] sm:$0xff]
      %v372 = vld [vmem:[%s316 + $0xf8] sm:$0xff]
      %v373 = vld [vmem:[%s320] sm:$0x1]
      %v374 = vld [vmem:[%s2] sm:$0xff]
      %v375 = vld [vmem:[%s2 + $0x8] sm:$0xff]
      %v376 = vld [vmem:[%s2 + $0x10] sm:$0xff]
      %v377 = vld [vmem:[%s2 + $0x18] sm:$0xff]
      %v379 = vlaneseq
      %v380 = vshrl.u32 %v379, 7
      %v381 = vsub.s32 0, %v380
      %v382 = vrot.slane %v373, %v381
      %v384 = vmul.f32 %v374, %v382
      %v385 = vmul.f32 %v375, %v382
      %v386 = vmul.f32 %v376, %v382
      %v387 = vmul.f32 %v377, %v382
      %388 = vmatprep.subr.mxu0 0.0
      %389 = vmatpush1.xpose.msra.mxu0 %v356
      %390 = vmatprep.subr.mxu0 0.0
      %391 = vmatpush1.xpose.msra.mxu0 %v355
      %392 = vmatprep.subr.mxu0 0.0
      %393 = vmatpush1.xpose.msra.mxu0 %v354
      %394 = vmatprep.subr.mxu0 0.0
      %395 = vmatpush1.xpose.msra.mxu0 %v353
      %396 = vmatprep.subr.mxu0 0.0
      %397 = vmatpush1.xpose.msra.mxu0 %v352
      %398 = vmatprep.subr.mxu0 0.0
      %399 = vmatpush1.xpose.msra.mxu0 %v351
      %400 = vmatprep.subr.mxu0 0.0
      %401 = vmatpush1.xpose.msra.mxu0 %v350
      %402 = vmatprep.subr.mxu0 0.0
      %403 = vmatpush1.xpose.msra.mxu0 %v349
      %404 = vmatprep.subr.mxu0 0.0
      %405 = vmatpush1.xpose.msra.mxu0 %v348
      %406 = vmatprep.subr.mxu0 0.0
      %407 = vmatpush1.xpose.msra.mxu0 %v347
      %408 = vmatprep.subr.mxu0 0.0
      %409 = vmatpush1.xpose.msra.mxu0 %v346
      %410 = vmatprep.subr.mxu0 0.0
      %411 = vmatpush1.xpose.msra.mxu0 %v345
      %412 = vmatprep.subr.mxu0 0.0
      %413 = vmatpush1.xpose.msra.mxu0 %v344
      %414 = vmatprep.subr.mxu0 0.0
      %415 = vmatpush1.xpose.msra.mxu0 %v343
      %416 = vmatprep.subr.mxu0 0.0
      %417 = vmatpush1.xpose.msra.mxu0 %v342
      %418 = vmatprep.subr.mxu0 0.0
      %419 = vmatpush1.xpose.msra.mxu0 %v341
      %420 = vmatprep.subr.mxu0 0.0
      %421 = vmatpush2.xpose.msra.mxu0 %v372
      %422 = vmatprep.subr.mxu0 0.0
      %423 = vmatpush2.xpose.msra.mxu0 %v371
      %424 = vmatprep.subr.mxu0 0.0
      %425 = vmatpush2.xpose.msra.mxu0 %v370
      %426 = vmatprep.subr.mxu0 0.0
      %427 = vmatpush2.xpose.msra.mxu0 %v369
      %428 = vmatprep.subr.mxu0 0.0
      %429 = vmatpush2.xpose.msra.mxu0 %v368
      %430 = vmatprep.subr.mxu0 0.0
      %431 = vmatpush2.xpose.msra.mxu0 %v367
      %432 = vmatprep.subr.mxu0 0.0
      %433 = vmatpush2.xpose.msra.mxu0 %v366
      %434 = vmatprep.subr.mxu0 0.0
      %435 = vmatpush2.xpose.msra.mxu0 %v365
      %436 = vmatprep.subr.mxu0 0.0
      %437 = vmatpush2.xpose.msra.mxu0 %v364
      %438 = vmatprep.subr.mxu0 0.0
      %439 = vmatpush2.xpose.msra.mxu0 %v363
      %440 = vmatprep.subr.mxu0 0.0
      %441 = vmatpush2.xpose.msra.mxu0 %v362
      %442 = vmatprep.subr.mxu0 0.0
      %443 = vmatpush2.xpose.msra.mxu0 %v361
      %444 = vmatprep.subr.mxu0 0.0
      %445 = vmatpush2.xpose.msra.mxu0 %v360
      %446 = vmatprep.subr.mxu0 0.0
      %447 = vmatpush2.xpose.msra.mxu0 %v359
      %448 = vmatprep.subr.mxu0 0.0
      %449 = vmatpush2.xpose.msra.mxu0 %v358
      %450 = vmatprep.subr.mxu0 0.0
      %451 = vmatpush2.xpose.msra.mxu0 %v357
      %452 = vmatprep.mubr.f32.mxu0 0.0
      %453 = vmatmul.mubr.f32.gmra.mxu0 %v384
      %v454 = vpop.f32.mrf.mxu0
      %v455 = vadd.f32 0.0, %v454
      %v456 = vpop.f32.mrf.mxu0
      %v457 = vadd.f32 0.0, %v456
      %458 = vmatprep.mubr.f32.mxu0 0.0
      %459 = vmatmul.mubr.f32.gmra.mxu0 %v385
      %v460 = vpop.f32.mrf.mxu0
      %v461 = vadd.f32 0.0, %v460
      %v462 = vpop.f32.mrf.mxu0
      %v463 = vadd.f32 0.0, %v462
      %464 = vmatprep.mubr.f32.mxu0 0.0
      %465 = vmatmul.mubr.f32.gmra.mxu0 %v386
      %v466 = vpop.f32.mrf.mxu0
      %v467 = vadd.f32 0.0, %v466
      %v468 = vpop.f32.mrf.mxu0
      %v469 = vadd.f32 0.0, %v468
      %470 = vmatprep.mubr.f32.mxu0 0.0
      %471 = vmatmul.mubr.f32.gmra.mxu0 %v387
      %v472 = vpop.f32.mrf.mxu0
      %v473 = vadd.f32 0.0, %v472
      %v474 = vpop.f32.mrf.mxu0
      %v475 = vadd.f32 0.0, %v474
      %476 = vdwg.mxu0
      %v477 = vld [vmem:[%s3] sm:$0xff]
      %v478 = vld [vmem:[%s3 + $0x8] sm:$0xff]
      %v479 = vld [vmem:[%s3 + $0x10] sm:$0xff]
      %v480 = vld [vmem:[%s3 + $0x18] sm:$0xff]
      %482 = vset.pattern.permute.xlu0 0
      %483 = vperm.xlu0 %482, %v477
      %v484 = vpop.permute.xlu0 %483
      %487 = vset.pattern.permute.xlu0 0
      %488 = vperm.xlu0 %487, %v478
      %v489 = vpop.permute.xlu0 %488
      %492 = vset.pattern.permute.xlu0 0
      %493 = vperm.xlu0 %492, %v479
      %v494 = vpop.permute.xlu0 %493
      %497 = vset.pattern.permute.xlu0 0
      %498 = vperm.xlu0 %497, %v480
      %v499 = vpop.permute.xlu0 %498
      %v501 = vmul.f32 %v455, %v484
      %v502 = vmul.f32 %v457, %v484
      %v503 = vmul.f32 %v461, %v489
      %v504 = vmul.f32 %v463, %v489
      %v505 = vmul.f32 %v467, %v494
      %v506 = vmul.f32 %v469, %v494
      %v507 = vmul.f32 %v473, %v499
      %v508 = vmul.f32 %v475, %v499
      %v509 = vld [vmem:[%s4] sm:$0xff]
      %v510 = vld [vmem:[%s4 + $0x8] sm:$0xff]
      %v511 = vld [vmem:[%s4 + $0x10] sm:$0xff]
      %v512 = vld [vmem:[%s4 + $0x18] sm:$0xff]
      %514 = vset.pattern.permute.xlu0 0
      %515 = vperm.xlu0 %514, %v509
      %v516 = vpop.permute.xlu0 %515
      %519 = vset.pattern.permute.xlu0 0
      %520 = vperm.xlu0 %519, %v510
      %v521 = vpop.permute.xlu0 %520
      %524 = vset.pattern.permute.xlu0 0
      %525 = vperm.xlu0 %524, %v511
      %v526 = vpop.permute.xlu0 %525
      %529 = vset.pattern.permute.xlu0 0
      %530 = vperm.xlu0 %529, %v512
      %v531 = vpop.permute.xlu0 %530
      %v533 = vadd.f32 %v501, %v516
      %v534 = vadd.f32 %v502, %v516
      %v535 = vadd.f32 %v503, %v521
      %v536 = vadd.f32 %v504, %v521
      %v537 = vadd.f32 %v505, %v526
      %v538 = vadd.f32 %v506, %v526
      %v539 = vadd.f32 %v507, %v531
      %v540 = vadd.f32 %v508, %v531
      %v541 = vld [vmem:[%s329] sm:$0xff]
      %v542 = vld [vmem:[%s329 + $0x8] sm:$0xff]
      %v543 = vld [vmem:[%s329 + $0x10] sm:$0xff]
      %v544 = vld [vmem:[%s329 + $0x18] sm:$0xff]
      %v545 = vld [vmem:[%s329 + $0x20] sm:$0xff]
      %v546 = vld [vmem:[%s329 + $0x28] sm:$0xff]
      %v547 = vld [vmem:[%s329 + $0x30] sm:$0xff]
      %v548 = vld [vmem:[%s329 + $0x38] sm:$0xff]
      %v549 = vadd.f32 %v533, %v541
      %v550 = vadd.f32 %v534, %v542
      %v551 = vadd.f32 %v535, %v543
      %v552 = vadd.f32 %v536, %v544
      %v553 = vadd.f32 %v537, %v545
      %v554 = vadd.f32 %v538, %v546
      %v555 = vadd.f32 %v539, %v547
      %v556 = vadd.f32 %v540, %v548
      %557 = vst [vmem:[%s339] sm:$0xff] %v549
      %558 = vst [vmem:[%s339 + $0x8] sm:$0xff] %v550
      %559 = vst [vmem:[%s339 + $0x10] sm:$0xff] %v551
      %560 = vst [vmem:[%s339 + $0x18] sm:$0xff] %v552
      %561 = vst [vmem:[%s339 + $0x20] sm:$0xff] %v553
      %562 = vst [vmem:[%s339 + $0x28] sm:$0xff] %v554
      %563 = vst [vmem:[%s339 + $0x30] sm:$0xff] %v555
      %564 = vst [vmem:[%s339 + $0x38] sm:$0xff] %v556
      %s565 = smul.u32 2, %s22
      %p566 = scmp.lt.s32.totalorder %s21, 1
      %s567 = scalar_select %p566, %s21, 1
      %p568 = scmp.lt.s32.totalorder %s565, 1
      %s569 = scalar_select %p568, %s565, 1
      %s570 = smul.addr %s567, 8
      %s571 = sadd.s32 %s569, %s570
      %s572 = smul.addr %s571, 8
      %s573 = scalar_lea.vmem %s6, %s572
      // Predicated region
      $region45: #{mbconv_forward.5} parent=43 // pred_check
        %p574 = pneg %p194
      $region46: #{mbconv_forward.5} parent=43 // pred_check_branch
        %576 = sbr.rel (%p574) target = $region48
      $region47: #{mbconv_forward.5} parent=43 // pred_region
        %s577 = smul.u32 2, %s22
      $region48: #{mbconv_forward.5} parent=43 // pred_fallthru
        _
    $region44: #{mbconv_forward.5} parent=5 // pred_fallthru
      _
    %p578 = scmp.le.s32.totalorder 2, %s12
    // Predicated region
    $region49: #{mbconv_forward.5} parent=5 // pred_check
      %p579 = pneg %p578
    $region50: #{mbconv_forward.5} parent=5 // pred_check_branch
      %581 = sbr.rel (%p579) target = $region52
    $region51: #{mbconv_forward.5} parent=5 // pred_region
      %s582 = ssub.s32 %s12, 2
      // Predicated region
      $region53: #{mbconv_forward.5} parent=51 // pred_check
        %p583 = pneg %p200
      $region54: #{mbconv_forward.5} parent=51 // pred_check_branch
        %585 = sbr.rel (%p583) target = $region56
      $region55: #{mbconv_forward.5} parent=51 // pred_region
        %s586 = smul.u32 2, %s24
        %p587 = scmp.lt.s32.totalorder %s23, 1
        %s588 = scalar_select %p587, %s23, 1
        %p589 = scmp.lt.s32.totalorder %s586, 1
        %s590 = scalar_select %p589, %s586, 1
        %s591 = smul.addr %s588, 8
        %s592 = sadd.s32 %s590, %s591
        %s593 = smul.addr %s592, 8
        %s594 = scalar_lea.vmem %s6, %s593
      $region56: #{mbconv_forward.5} parent=51 // pred_fallthru
        _
    $region52: #{mbconv_forward.5} parent=5 // pred_fallthru
      _
  $region6: #{mbconv_forward.5} parent=0 // loop_footer
    %s16 = sadd.s32 1, %s12
  $region7: #{mbconv_forward.5} parent=0 // loop_footer_branch
    %11 = sbr.rel target = $region3
  $region8: #{mbconv_forward.5} parent=0 // loop_exit
    _

// kernel: mbconv_forward.3
$region0: #{mbconv_forward.3}
  #allocation0 [shape = 'u32[]', space=smem, size = 0x4, offset = 0x4, fixed_abs, tag = 'smem constant byte address 0x4 - core index']
  #allocation1 [shape = 'u32[144,128]{1,0:T(1,128)}', space=vmem, size = 0x12000, scoped, tag = 'internal scratch']
  %s0 = inlined_call_operand.vmem [shape: f32[2,18,24,32], index: 0, kind: input, shape index: {}]
  %s1 = inlined_call_operand.vmem [shape: f32[32,128], index: 1, kind: input, shape index: {}]
  %s2 = inlined_call_operand.vmem [shape: f32[1,128], index: 2, kind: input, shape index: {}]
  %s3 = inlined_call_operand.vmem [shape: f32[1,128], index: 3, kind: input, shape index: {}]
  %s4 = inlined_call_operand.vmem [shape: f32[9,128], index: 4, kind: input, shape index: {}]
  %s5 = inlined_call_operand.vmem [shape: f32[1,128], index: 5, kind: input, shape index: {}]
  %s6 = inlined_call_operand.vmem [shape: f32[1,128], index: 6, kind: input, shape index: {}]
  %s7 = inlined_call_operand.vmem [shape: f32[2,16,16,128], index: 7, kind: output, shape index: {0}]
  %s8 = inlined_call_operand.vmem [shape: f32[2,1,128], index: 8, kind: output, shape index: {1}]
  %9 = xla_tuple %s7, %s8
  %s10 = sld [smem:[#allocation0]]
  $region73: #{mbconv_forward.3} parent=0
    _
  %s12 = ssub.s32 1, %s10
  %s13 = scalar_select 0, %s12, %s10
  loop: start=0, step=1, limit=6
  $region2: #{mbconv_forward.3} parent=0 // loop_pre_header
    _
  $region3: #{mbconv_forward.3} parent=0 // loop_header
    %s15 = sphi 0, %s19
    %p16 = scmp.ge.s32.totalorder %s15, 6
    %s22 = sphi 0, %s34
    %s23 = sphi 0, %s30
    %s24 = sphi 0, %s22
    %s25 = sphi 0, %s23
    %s26 = sphi 0, %s24
    %s27 = sphi 0, %s25
    %s37 = sphi 0, %s39
    %s40 = sphi 0, %s37
    %s41 = sphi 0, %s40
    %s57 = sphi 0, %s41
    %s61 = sphi 0, %s61
    %s63 = sphi 0, %s61
    %s64 = sphi 0, %s63
    %s78 = sphi 0, %s64
    %s82 = sphi 0, %s82
    %s84 = sphi 0, %s82
    %s85 = sphi 0, %s84
    %s99 = sphi 0, %s85
    %s103 = sphi 0, %s103
    %s105 = sphi 0, %s103
    %s106 = sphi 0, %s105
    %s120 = sphi 0, %s106
    %s124 = sphi 0, %s124
    %s126 = sphi 0, %s124
    %s127 = sphi 0, %s126
    %s141 = sphi 0, %s127
    %s145 = sphi 0, %s145
    %s147 = sphi 0, %s145
    %s148 = sphi 0, %s147
    %s162 = sphi 0, %s148
    %s166 = sphi 0, %s166
    %s168 = sphi 0, %s166
    %s169 = sphi 0, %s168
    %s183 = sphi 0, %s169
    %s191 = sphi 0, %s193
    %s194 = sphi 0, %s191
    %s195 = sphi 0, %s194
    %s211 = sphi 0, %s195
    %s217 = sphi 0, %s219
    %s220 = sphi 0, %s217
    %s221 = sphi 0, %s220
    %s237 = sphi 0, %s221
  $region4: #{mbconv_forward.3} parent=0 // loop_header_branch
    %18 = sbr.rel (%p16) target = $region8
  $region5: #{mbconv_forward.3} parent=0 // loop_body
    %s20 = ssub.s32 %s15, 1
    %s21 = ssub.s32 %s15, 2
    %s28 = sadd.s32 1, %s23
    %p29 = scmp.ge.s32.totalorder %s28, 2
    %s30 = scalar_select %p29, 0, %s28
    %s31 = sadd.s32 1, %s22
    %s32 = scalar_select %p29, %s31, %s22
    %p33 = scmp.ge.s32.totalorder %s32, 2
    %s34 = scalar_select %p33, 0, %s32
    %s35 = ssub.s32 %s22, %s34
    %p36 = scmp.eq.s32.totalorder %s35, 0
    %s38 = sadd.s32 %s37, 1
    %s39 = scalar_select %p36, %s37, %s38
    %p42 = pneg %p36
    %p43 = scmp.eq.s32.totalorder %s15, 3
    %p44 = por %p42, %p43
    %p45 = scmp.ne.s32.totalorder %s37, %s40
    %p46 = scmp.eq.s32.totalorder %s15, 0
    %p47 = por %p45, %p46
    %p48 = scmp.ne.s32.totalorder %s37, %s40
    %p49 = scmp.eq.s32.totalorder %s20, 3
    %p50 = por %p48, %p49
    %p51 = scmp.ne.s32.totalorder %s40, %s41
    %p52 = scmp.eq.s32.totalorder %s20, 0
    %p53 = por %p51, %p52
    %p54 = scmp.ne.s32.totalorder %s40, %s41
    %p55 = scmp.eq.s32.totalorder %s21, 3
    %p56 = por %p54, %p55
    %p58 = scmp.ne.s32.totalorder %s41, %s57
    %p59 = scmp.eq.s32.totalorder %s21, 0
    %p60 = por %p58, %p59
    %s62 = sadd.s32 %s61, 1
    %p65 = scmp.eq.s32.totalorder %s15, 3
    %p66 = scmp.ne.s32.totalorder %s61, %s63
    %p67 = scmp.eq.s32.totalorder %s15, 0
    %p68 = por %p66, %p67
    %p69 = scmp.ne.s32.totalorder %s61, %s63
    %p70 = scmp.eq.s32.totalorder %s20, 3
    %p71 = por %p69, %p70
    %p72 = scmp.ne.s32.totalorder %s63, %s64
    %p73 = scmp.eq.s32.totalorder %s20, 0
    %p74 = por %p72, %p73
    %p75 = scmp.ne.s32.totalorder %s63, %s64
    %p76 = scmp.eq.s32.totalorder %s21, 3
    %p77 = por %p75, %p76
    %p79 = scmp.ne.s32.totalorder %s64, %s78
    %p80 = scmp.eq.s32.totalorder %s21, 0
    %p81 = por %p79, %p80
    %s83 = sadd.s32 %s82, 1
    %p86 = scmp.eq.s32.totalorder %s15, 3
    %p87 = scmp.ne.s32.totalorder %s82, %s84
    %p88 = scmp.eq.s32.totalorder %s15, 0
    %p89 = por %p87, %p88
    %p90 = scmp.ne.s32.totalorder %s82, %s84
    %p91 = scmp.eq.s32.totalorder %s20, 3
    %p92 = por %p90, %p91
    %p93 = scmp.ne.s32.totalorder %s84, %s85
    %p94 = scmp.eq.s32.totalorder %s20, 0
    %p95 = por %p93, %p94
    %p96 = scmp.ne.s32.totalorder %s84, %s85
    %p97 = scmp.eq.s32.totalorder %s21, 3
    %p98 = por %p96, %p97
    %p100 = scmp.ne.s32.totalorder %s85, %s99
    %p101 = scmp.eq.s32.totalorder %s21, 0
    %p102 = por %p100, %p101
    %s104 = sadd.s32 %s103, 1
    %p107 = scmp.eq.s32.totalorder %s15, 3
    %p108 = scmp.ne.s32.totalorder %s103, %s105
    %p109 = scmp.eq.s32.totalorder %s15, 0
    %p110 = por %p108, %p109
    %p111 = scmp.ne.s32.totalorder %s103, %s105
    %p112 = scmp.eq.s32.totalorder %s20, 3
    %p113 = por %p111, %p112
    %p114 = scmp.ne.s32.totalorder %s105, %s106
    %p115 = scmp.eq.s32.totalorder %s20, 0
    %p116 = por %p114, %p115
    %p117 = scmp.ne.s32.totalorder %s105, %s106
    %p118 = scmp.eq.s32.totalorder %s21, 3
    %p119 = por %p117, %p118
    %p121 = scmp.ne.s32.totalorder %s106, %s120
    %p122 = scmp.eq.s32.totalorder %s21, 0
    %p123 = por %p121, %p122
    %s125 = sadd.s32 %s124, 1
    %p128 = scmp.eq.s32.totalorder %s15, 3
    %p129 = scmp.ne.s32.totalorder %s124, %s126
    %p130 = scmp.eq.s32.totalorder %s15, 0
    %p131 = por %p129, %p130
    %p132 = scmp.ne.s32.totalorder %s124, %s126
    %p133 = scmp.eq.s32.totalorder %s20, 3
    %p134 = por %p132, %p133
    %p135 = scmp.ne.s32.totalorder %s126, %s127
    %p136 = scmp.eq.s32.totalorder %s20, 0
    %p137 = por %p135, %p136
    %p138 = scmp.ne.s32.totalorder %s126, %s127
    %p139 = scmp.eq.s32.totalorder %s21, 3
    %p140 = por %p138, %p139
    %p142 = scmp.ne.s32.totalorder %s127, %s141
    %p143 = scmp.eq.s32.totalorder %s21, 0
    %p144 = por %p142, %p143
    %s146 = sadd.s32 %s145, 1
    %p149 = scmp.eq.s32.totalorder %s15, 3
    %p150 = scmp.ne.s32.totalorder %s145, %s147
    %p151 = scmp.eq.s32.totalorder %s15, 0
    %p152 = por %p150, %p151
    %p153 = scmp.ne.s32.totalorder %s145, %s147
    %p154 = scmp.eq.s32.totalorder %s20, 3
    %p155 = por %p153, %p154
    %p156 = scmp.ne.s32.totalorder %s147, %s148
    %p157 = scmp.eq.s32.totalorder %s20, 0
    %p158 = por %p156, %p157
    %p159 = scmp.ne.s32.totalorder %s147, %s148
    %p160 = scmp.eq.s32.totalorder %s21, 3
    %p161 = por %p159, %p160
    %p163 = scmp.ne.s32.totalorder %s148, %s162
    %p164 = scmp.eq.s32.totalorder %s21, 0
    %p165 = por %p163, %p164
    %s167 = sadd.s32 %s166, 1
    %p170 = scmp.eq.s32.totalorder %s15, 3
    %p171 = scmp.ne.s32.totalorder %s166, %s168
    %p172 = scmp.eq.s32.totalorder %s15, 0
    %p173 = por %p171, %p172
    %p174 = scmp.ne.s32.totalorder %s166, %s168
    %p175 = scmp.eq.s32.totalorder %s20, 3
    %p176 = por %p174, %p175
    %p177 = scmp.ne.s32.totalorder %s168, %s169
    %p178 = scmp.eq.s32.totalorder %s20, 0
    %p179 = por %p177, %p178
    %p180 = scmp.ne.s32.totalorder %s168, %s169
    %p181 = scmp.eq.s32.totalorder %s21, 3
    %p182 = por %p180, %p181
    %p184 = scmp.ne.s32.totalorder %s169, %s183
    %p185 = scmp.eq.s32.totalorder %s21, 0
    %p186 = por %p184, %p185
    %s187 = ssub.s32 %s22, %s34
    %s188 = ssub.s32 %s23, %s30
    %s189 = sor.u32 %s187, %s188
    %p190 = scmp.eq.s32.totalorder %s189, 0
    %s192 = sadd.s32 %s191, 1
    %s193 = scalar_select %p190, %s191, %s192
    %p196 = pneg %p190
    %p197 = scmp.eq.s32.totalorder %s15, 3
    %p198 = por %p196, %p197
    %p199 = scmp.ne.s32.totalorder %s191, %s194
    %p200 = scmp.eq.s32.totalorder %s15, 0
    %p201 = por %p199, %p200
    %p202 = scmp.ne.s32.totalorder %s191, %s194
    %p203 = scmp.eq.s32.totalorder %s20, 3
    %p204 = por %p202, %p203
    %p205 = scmp.ne.s32.totalorder %s194, %s195
    %p206 = scmp.eq.s32.totalorder %s20, 0
    %p207 = por %p205, %p206
    %p208 = scmp.ne.s32.totalorder %s194, %s195
    %p209 = scmp.eq.s32.totalorder %s21, 3
    %p210 = por %p208, %p209
    %p212 = scmp.ne.s32.totalorder %s195, %s211
    %p213 = scmp.eq.s32.totalorder %s21, 0
    %p214 = por %p212, %p213
    %s215 = ssub.s32 %s22, %s34
    %p216 = scmp.eq.s32.totalorder %s215, 0
    %s218 = sadd.s32 %s217, 1
    %s219 = scalar_select %p216, %s217, %s218
    %p222 = pneg %p216
    %p223 = scmp.eq.s32.totalorder %s15, 3
    %p224 = por %p222, %p223
    %p225 = scmp.ne.s32.totalorder %s217, %s220
    %p226 = scmp.eq.s32.totalorder %s15, 0
    %p227 = por %p225, %p226
    %p228 = scmp.ne.s32.totalorder %s217, %s220
    %p229 = scmp.eq.s32.totalorder %s20, 3
    %p230 = por %p228, %p229
    %p231 = scmp.ne.s32.totalorder %s220, %s221
    %p232 = scmp.eq.s32.totalorder %s20, 0
    %p233 = por %p231, %p232
    %p234 = scmp.ne.s32.totalorder %s220, %s221
    %p235 = scmp.eq.s32.totalorder %s21, 3
    %p236 = por %p234, %p235
    %p238 = scmp.ne.s32.totalorder %s221, %s237
    %p239 = scmp.eq.s32.totalorder %s21, 0
    %p240 = por %p238, %p239
    %p241 = scmp.le.s32.totalorder 1, %s15
    %p242 = scmp.lt.s32.totalorder %s15, 5
    %p243 = pnand %p241, %p242
    %p244 = pneg %p243
    // Predicated region
    $region9: #{mbconv_forward.3} parent=5 // pred_check
      _
    $region10: #{mbconv_forward.3} parent=5 // pred_check_branch
      %246 = sbr.rel (%p243) target = $region12
    $region11: #{mbconv_forward.3} parent=5 // pred_region
      %s247 = ssub.s32 %s15, 1
      // Predicated region
      $region13: #{mbconv_forward.3} parent=11 // pred_check
        %p248 = pneg %p74
      $region14: #{mbconv_forward.3} parent=11 // pred_check_branch
        %250 = sbr.rel (%p248) target = $region16
      $region15: #{mbconv_forward.3} parent=11 // pred_region
        _
      $region16: #{mbconv_forward.3} parent=11 // pred_fallthru
        _
      // Predicated region
      $region17: #{mbconv_forward.3} parent=11 // pred_check
        %p251 = pneg %p95
      $region18: #{mbconv_forward.3} parent=11 // pred_check_branch
        %253 = sbr.rel (%p251) target = $region20
      $region19: #{mbconv_forward.3} parent=11 // pred_region
        _
      $region20: #{mbconv_forward.3} parent=11 // pred_fallthru
        _
      // Predicated region
      $region21: #{mbconv_forward.3} parent=11 // pred_check
        %p254 = pneg %p116
      $region22: #{mbconv_forward.3} parent=11 // pred_check_branch
        %256 = sbr.rel (%p254) target = $region24
      $region23: #{mbconv_forward.3} parent=11 // pred_region
        _
      $region24: #{mbconv_forward.3} parent=11 // pred_fallthru
        _
      // Predicated region
      $region25: #{mbconv_forward.3} parent=11 // pred_check
        %p257 = pneg %p137
      $region26: #{mbconv_forward.3} parent=11 // pred_check_branch
        %259 = sbr.rel (%p257) target = $region28
      $region27: #{mbconv_forward.3} parent=11 // pred_region
        _
      $region28: #{mbconv_forward.3} parent=11 // pred_fallthru
        _
      // Predicated region
      $region29: #{mbconv_forward.3} parent=11 // pred_check
        %p260 = pneg %p158
      $region30: #{mbconv_forward.3} parent=11 // pred_check_branch
        %262 = sbr.rel (%p260) target = $region32
      $region31: #{mbconv_forward.3} parent=11 // pred_region
        _
      $region32: #{mbconv_forward.3} parent=11 // pred_fallthru
        _
      // Predicated region
      $region33: #{mbconv_forward.3} parent=11 // pred_check
        %p263 = pneg %p179
      $region34: #{mbconv_forward.3} parent=11 // pred_check_branch
        %265 = sbr.rel (%p263) target = $region36
      $region35: #{mbconv_forward.3} parent=11 // pred_region
        _
      $region36: #{mbconv_forward.3} parent=11 // pred_fallthru
        _
    $region12: #{mbconv_forward.3} parent=5 // pred_fallthru
      _
    %p266 = scmp.lt.s32.totalorder %s15, 4
    // Predicated region
    $region37: #{mbconv_forward.3} parent=5 // pred_check
      %p267 = pneg %p266
    $region38: #{mbconv_forward.3} parent=5 // pred_check_branch
      %269 = sbr.rel (%p267) target = $region40
    $region39: #{mbconv_forward.3} parent=5 // pred_region
      // Predicated region
      $region41: #{mbconv_forward.3} parent=39 // pred_check
        %p270 = pneg %p47
      $region42: #{mbconv_forward.3} parent=39 // pred_check_branch
        %272 = sbr.rel (%p270) target = $region44
      $region43: #{mbconv_forward.3} parent=39 // pred_region
        %p273 = scmp.lt.s32.totalorder %s22, 1
        %s274 = scalar_select %p273, %s22, 1
        %s275 = smul.addr %s274, 54
        %s276 = smul.addr %s275, 8
        %s277 = scalar_lea.vmem %s0, %s276
      $region44: #{mbconv_forward.3} parent=39 // pred_fallthru
        _
    $region40: #{mbconv_forward.3} parent=5 // pred_fallthru
      _
    %p278 = scmp.le.s32.totalorder 1, %s15
    %p279 = scmp.lt.s32.totalorder %s15, 5
    %p280 = pnand %p278, %p279
    %p281 = pneg %p280
    // Predicated region
    $region45: #{mbconv_forward.3} parent=5 // pred_check
      _
    $region46: #{mbconv_forward.3} parent=5 // pred_check_branch
      %283 = sbr.rel (%p280) target = $region48
    $region47: #{mbconv_forward.3} parent=5 // pred_region
      %s284 = ssub.s32 %s15, 1
      %p285 = scmp.lt.s32.totalorder %s24, 1
      %s286 = scalar_select %p285, %s24, 1
      %s287 = smul.addr %s286, 54
      %s288 = smul.addr %s287, 8
      %s289 = scalar_lea.vmem %s0, %s288
      %p290 = pneg %p53
      %p291 = pneg %p50
      %p292 = pneg %p74
      %p293 = pneg %p71
      %p294 = pneg %p95
      %p295 = pneg %p92
      %p296 = pneg %p116
      %p297 = pneg %p113
      %p298 = pneg %p137
      %p299 = pneg %p134
      %p300 = pneg %p158
      %p301 = pneg %p155
      %p302 = pneg %p179
      %p303 = pneg %p176
      %p304 = pneg %p207
      %p305 = pneg %p204
      %s306 = smul.u32 8, %s25
      %p307 = scmp.lt.s32.totalorder %s24, 1
      %s308 = scalar_select %p307, %s24, 1
      %p309 = scmp.lt.s32.totalorder %s306, 15
      %s310 = scalar_select %p309, %s306, 15
      %s311 = smul.addr %s310, 2
      %s312 = smul.addr %s308, 32
      %s313 = sadd.s32 %s311, %s312
      %s314 = smul.addr %s313, 8
      %s315 = scalar_lea.vmem %s7, %s314
      %p316 = pneg %p233
      %p317 = pneg %p230
      %p318 = scmp.lt.s32.totalorder %s24, 1
      %s319 = scalar_select %p318, %s24, 1
      %s320 = scalar_lea.vmem %s8, %s319
      %p321 = scmp.lt.s32.totalorder %s24, 1
      %s322 = scalar_select %p321, %s24, 1
      %s323 = smul.addr %s322, 54
      %s324 = smul.addr %s323, 8
      %s325 = scalar_lea.vmem %s0, %s324
      %s326 = smul.u32 8, %s25
      %p327 = scmp.lt.s32.totalorder %s24, 1
      %s328 = scalar_select %p327, %s24, 1
      %p329 = scmp.lt.s32.totalorder %s326, 15
      %s330 = scalar_select %p329, %s326, 15
      %s331 = smul.addr %s330, 2
      %s332 = smul.addr %s328, 32
      %s333 = sadd.s32 %s331, %s332
      %s334 = smul.addr %s333, 8
      %s335 = scalar_lea.vmem %s7, %s334
      %s336 = smul.u32 8, %s25
      %p337 = scmp.lt.s32.totalorder %s24, 1
      %s338 = scalar_select %p337, %s24, 1
      %s339 = scalar_lea.vmem %s8, %s338
      %s340 = smul.u32 %s25, 8
      %s341 = smul.u32 %s340, 24
      %s342 = scalar_lea.vmem %s325, %s341
      %v343 = vld [vmem:[%s342] sm:$0xff]
      %v344 = vld [vmem:[%s342 + $0x8] sm:$0xff]
      %v345 = vld [vmem:[%s342 + $0x10] sm:$0xff]
      %v346 = vld [vmem:[%s342 + $0x18] sm:$0xff]
      %v347 = vld [vmem:[%s342 + $0x20] sm:$0xff]
      %v348 = vld [vmem:[%s342 + $0x28] sm:$0xff]
      %v349 = vld [vmem:[%s342 + $0x30] sm:$0xff]
      %v350 = vld [vmem:[%s342 + $0x38] sm:$0xff]
      %v351 = vld [vmem:[%s342 + $0x40] sm:$0xff]
      %v352 = vld [vmem:[%s342 + $0x48] sm:$0xff]
      %v353 = vld [vmem:[%s342 + $0x50] sm:$0xff]
      %v354 = vld [vmem:[%s342 + $0x58] sm:$0xff]
      %v355 = vld [vmem:[%s342 + $0x60] sm:$0xff]
      %v356 = vld [vmem:[%s342 + $0x68] sm:$0xff]
      %v357 = vld [vmem:[%s342 + $0x70] sm:$0xff]
      %v358 = vld [vmem:[%s342 + $0x78] sm:$0xff]
      %v359 = vld [vmem:[%s342 + $0x80] sm:$0xff]
      %v360 = vld [vmem:[%s342 + $0x88] sm:$0xff]
      %v361 = vld [vmem:[%s342 + $0x90] sm:$0xff]
      %v362 = vld [vmem:[%s342 + $0x98] sm:$0xff]
      %v363 = vld [vmem:[%s342 + $0xa0] sm:$0xff]
      %v364 = vld [vmem:[%s342 + $0xa8] sm:$0xff]
      %v365 = vld [vmem:[%s342 + $0xb0] sm:$0xff]
      %v366 = vld [vmem:[%s342 + $0xb8] sm:$0xff]
      %v367 = vld [vmem:[%s342 + $0xc0] sm:$0xff]
      %v368 = vld [vmem:[%s342 + $0xc8] sm:$0xff]
      %v369 = vld [vmem:[%s342 + $0xd0] sm:$0xff]
      %v370 = vld [vmem:[%s342 + $0xd8] sm:$0xff]
      %v371 = vld [vmem:[%s342 + $0xe0] sm:$0xff]
      %v372 = vld [vmem:[%s342 + $0xe8] sm:$0xff]
      %v373 = vld [vmem:[%s1] sm:$0xff]
      %v374 = vld [vmem:[%s1 + $0x8] sm:$0xff]
      %v375 = vld [vmem:[%s1 + $0x10] sm:$0xff]
      %v376 = vld [vmem:[%s1 + $0x18] sm:$0xff]
      %vm377 = vcmask 261120
      %v379 = vsel %vm377, %v343, 0
      %v382 = vsel %vm377, %v344, 0
      %v385 = vsel %vm377, %v345, 0
      %v388 = vsel %vm377, %v346, 0
      %v391 = vsel %vm377, %v347, 0
      %v394 = vsel %vm377, %v348, 0
      %v397 = vsel %vm377, %v349, 0
      %v400 = vsel %vm377, %v350, 0
      %v403 = vsel %vm377, %v351, 0
      %v406 = vsel %vm377, %v352, 0
      %v409 = vsel %vm377, %v353, 0
      %v412 = vsel %vm377, %v354, 0
      %v415 = vsel %vm377, %v355, 0
      %v418 = vsel %vm377, %v356, 0
      %v421 = vsel %vm377, %v357, 0
      %v424 = vsel %vm377, %v358, 0
      %v427 = vsel %vm377, %v359, 0
      %v430 = vsel %vm377, %v360, 0
      %v433 = vsel %vm377, %v361, 0
      %v436 = vsel %vm377, %v362, 0
      %v439 = vsel %vm377, %v363, 0
      %v442 = vsel %vm377, %v364, 0
      %v445 = vsel %vm377, %v365, 0
      %v448 = vsel %vm377, %v366, 0
      %v451 = vsel %vm377, %v367, 0
      %v454 = vsel %vm377, %v368, 0
      %v457 = vsel %vm377, %v369, 0
      %v460 = vsel %vm377, %v370, 0
      %v463 = vsel %vm377, %v371, 0
      %v466 = vsel %vm377, %v372, 0
      %468 = vmatprep.subr.mxu0 0.0
      %469 = vmatpush1.msra.mxu0 0.0
      %470 = vmatprep.subr.mxu0 0.0
      %471 = vmatpush1.msra.mxu0 0.0
      %472 = vmatprep.subr.mxu0 0.0
      %473 = vmatpush1.msra.mxu0 0.0
      %474 = vmatprep.subr.mxu0 0.0
      %475 = vmatpush1.msra.mxu0 0.0
      %476 = vmatprep.subr.mxu0 0.0
      %477 = vmatpush1.msra.mxu0 0.0
      %478 = vmatprep.subr.mxu0 0.0
      %479 = vmatpush1.msra.mxu0 0.0
      %480 = vmatprep.subr.mxu0 0.0
      %481 = vmatpush1.msra.mxu0 0.0
      %482 = vmatprep.subr.mxu0 0.0
      %483 = vmatpush1.msra.mxu0 0.0
      %484 = vmatprep.subr.mxu0 0.0
      %485 = vmatpush1.msra.mxu0 0.0
      %486 = vmatprep.subr.mxu0 0.0
      %487 = vmatpush1.msra.mxu0 0.0
      %488 = vmatprep.subr.mxu0 0.0
      %489 = vmatpush1.msra.mxu0 0.0
      %490 = vmatprep.subr.mxu0 0.0
      %491 = vmatpush1.msra.mxu0 0.0
      %492 = vmatprep.subr.mxu0 0.0
      %493 = vmatpush1.msra.mxu0 %v376
      %494 = vmatprep.subr.mxu0 0.0
      %495 = vmatpush1.msra.mxu0 %v375
      %496 = vmatprep.subr.mxu0 0.0
      %497 = vmatpush1.msra.mxu0 %v374
      %498 = vmatprep.subr.mxu0 0.0
      %499 = vmatpush1.msra.mxu0 %v373
      %500 = vmatprep.subr.mxu0 0.0
      %501 = vmatpush2.msra.mxu0 0.0
      %502 = vmatprep.subr.mxu0 0.0
      %503 = vmatpush2.msra.mxu0 0.0
      %504 = vmatprep.subr.mxu0 0.0
      %505 = vmatpush2.msra.mxu0 0.0
      %506 = vmatprep.subr.mxu0 0.0
      %507 = vmatpush2.msra.mxu0 0.0
      %508 = vmatprep.subr.mxu0 0.0
      %509 = vmatpush2.msra.mxu0 0.0
      %510 = vmatprep.subr.mxu0 0.0
      %511 = vmatpush2.msra.mxu0 0.0
      %512 = vmatprep.subr.mxu0 0.0
      %513 = vmatpush2.msra.mxu0 0.0
      %514 = vmatprep.subr.mxu0 0.0
      %515 = vmatpush2.msra.mxu0 0.0
      %516 = vmatprep.subr.mxu0 0.0
      %517 = vmatpush2.msra.mxu0 0.0
      %518 = vmatprep.subr.mxu0 0.0
      %519 = vmatpush2.msra.mxu0 0.0
      %520 = vmatprep.subr.mxu0 0.0
      %521 = vmatpush2.msra.mxu0 0.0
      %522 = vmatprep.subr.mxu0 0.0
      %523 = vmatpush2.msra.mxu0 0.0
      %524 = vmatprep.subr.mxu0 0.0
      %525 = vmatpush2.msra.mxu0 0.0
      %526 = vmatprep.subr.mxu0 0.0
      %527 = vmatpush2.msra.mxu0 0.0
      %528 = vmatprep.subr.mxu0 0.0
      %529 = vmatpush2.msra.mxu0 0.0
      %530 = vmatprep.subr.mxu0 0.0
      %531 = vmatpush2.msra.mxu0 0.0
      %532 = vmatprep.mubr.f32.mxu0 0.0
      %533 = vmatmul.mubr.f32.gmra.mxu0 %v379
      %v534 = vpop.f32.mrf.mxu0
      %v535 = vadd.f32 0.0, %v534
      %v536 = vpop.f32.mrf.mxu0
      %537 = vmatprep.mubr.f32.mxu0 0.0
      %538 = vmatmul.mubr.f32.gmra.mxu0 %v382
      %v539 = vpop.f32.mrf.mxu0
      %v540 = vadd.f32 0.0, %v539
      %v541 = vpop.f32.mrf.mxu0
      %542 = vmatprep.mubr.f32.mxu0 0.0
      %543 = vmatmul.mubr.f32.gmra.mxu0 %v385
      %v544 = vpop.f32.mrf.mxu0
      %v545 = vadd.f32 0.0, %v544
      %v546 = vpop.f32.mrf.mxu0
      %547 = vmatprep.mubr.f32.mxu0 0.0
      %548 = vmatmul.mubr.f32.gmra.mxu0 %v388
      %v549 = vpop.f32.mrf.mxu0
      %v550 = vadd.f32 0.0, %v549
      %v551 = vpop.f32.mrf.mxu0
      %552 = vmatprep.mubr.f32.mxu0 0.0
      %553 = vmatmul.mubr.f32.gmra.mxu0 %v391
      %v554 = vpop.f32.mrf.mxu0
      %v555 = vadd.f32 0.0, %v554
      %v556 = vpop.f32.mrf.mxu0
      %557 = vmatprep.mubr.f32.mxu0 0.0
      %558 = vmatmul.mubr.f32.gmra.mxu0 %v394
      %v559 = vpop.f32.mrf.mxu0
      %v560 = vadd.f32 0.0, %v559
      %v561 = vpop.f32.mrf.mxu0
      %562 = vmatprep.mubr.f32.mxu0 0.0
      %563 = vmatmul.mubr.f32.gmra.mxu0 %v397
      %v564 = vpop.f32.mrf.mxu0
      %v565 = vadd.f32 0.0, %v564
      %v566 = vpop.f32.mrf.mxu0
      %567 = vmatprep.mubr.f32.mxu0 0.0
      %568 = vmatmul.mubr.f32.gmra.mxu0 %v400
      %v569 = vpop.f32.mrf.mxu0
      %v570 = vadd.f32 0.0, %v569
      %v571 = vpop.f32.mrf.mxu0
      %572 = vmatprep.mubr.f32.mxu0 0.0
      %573 = vmatmul.mubr.f32.gmra.mxu0 %v403
      %v574 = vpop.f32.mrf.mxu0
      %v575 = vadd.f32 0.0, %v574
      %v576 = vpop.f32.mrf.mxu0
      %577 = vmatprep.mubr.f32.mxu0 0.0
      %578 = vmatmul.mubr.f32.gmra.mxu0 %v406
      %v579 = vpop.f32.mrf.mxu0
      %v580 = vadd.f32 0.0, %v579
      %v581 = vpop.f32.mrf.mxu0
      %582 = vmatprep.mubr.f32.mxu0 0.0
      %583 = vmatmul.mubr.f32.gmra.mxu0 %v409
      %v584 = vpop.f32.mrf.mxu0
      %v585 = vadd.f32 0.0, %v584
      %v586 = vpop.f32.mrf.mxu0
      %587 = vmatprep.mubr.f32.mxu0 0.0
      %588 = vmatmul.mubr.f32.gmra.mxu0 %v412
      %v589 = vpop.f32.mrf.mxu0
      %v590 = vadd.f32 0.0, %v589
      %v591 = vpop.f32.mrf.mxu0
      %592 = vmatprep.mubr.f32.mxu0 0.0
      %593 = vmatmul.mubr.f32.gmra.mxu0 %v415
      %v594 = vpop.f32.mrf.mxu0
      %v595 = vadd.f32 0.0, %v594
      %v596 = vpop.f32.mrf.mxu0
      %597 = vmatprep.mubr.f32.mxu0 0.0
      %598 = vmatmul.mubr.f32.gmra.mxu0 %v418
      %v599 = vpop.f32.mrf.mxu0
      %v600 = vadd.f32 0.0, %v599
      %v601 = vpop.f32.mrf.mxu0
      %602 = vmatprep.mubr.f32.mxu0 0.0
      %603 = vmatmul.mubr.f32.gmra.mxu0 %v421
      %v604 = vpop.f32.mrf.mxu0
      %v605 = vadd.f32 0.0, %v604
      %v606 = vpop.f32.mrf.mxu0
      %607 = vmatprep.mubr.f32.mxu0 0.0
      %608 = vmatmul.mubr.f32.gmra.mxu0 %v424
      %v609 = vpop.f32.mrf.mxu0
      %v610 = vadd.f32 0.0, %v609
      %v611 = vpop.f32.mrf.mxu0
      %612 = vmatprep.mubr.f32.mxu0 0.0
      %613 = vmatmul.mubr.f32.gmra.mxu0 %v427
      %v614 = vpop.f32.mrf.mxu0
      %v615 = vadd.f32 0.0, %v614
      %v616 = vpop.f32.mrf.mxu0
      %617 = vmatprep.mubr.f32.mxu0 0.0
      %618 = vmatmul.mubr.f32.gmra.mxu0 %v430
      %v619 = vpop.f32.mrf.mxu0
      %v620 = vadd.f32 0.0, %v619
      %v621 = vpop.f32.mrf.mxu0
      %622 = vmatprep.mubr.f32.mxu0 0.0
      %623 = vmatmul.mubr.f32.gmra.mxu0 %v433
      %v624 = vpop.f32.mrf.mxu0
      %v625 = vadd.f32 0.0, %v624
      %v626 = vpop.f32.mrf.mxu0
      %627 = vmatprep.mubr.f32.mxu0 0.0
      %628 = vmatmul.mubr.f32.gmra.mxu0 %v436
      %v629 = vpop.f32.mrf.mxu0
      %v630 = vadd.f32 0.0, %v629
      %v631 = vpop.f32.mrf.mxu0
      %632 = vmatprep.mubr.f32.mxu0 0.0
      %633 = vmatmul.mubr.f32.gmra.mxu0 %v439
      %v634 = vpop.f32.mrf.mxu0
      %v635 = vadd.f32 0.0, %v634
      %v636 = vpop.f32.mrf.mxu0
      %637 = vmatprep.mubr.f32.mxu0 0.0
      %638 = vmatmul.mubr.f32.gmra.mxu0 %v442
      %v639 = vpop.f32.mrf.mxu0
      %v640 = vadd.f32 0.0, %v639
      %v641 = vpop.f32.mrf.mxu0
      %642 = vmatprep.mubr.f32.mxu0 0.0
      %643 = vmatmul.mubr.f32.gmra.mxu0 %v445
      %v644 = vpop.f32.mrf.mxu0
      %v645 = vadd.f32 0.0, %v644
      %v646 = vpop.f32.mrf.mxu0
      %647 = vmatprep.mubr.f32.mxu0 0.0
      %648 = vmatmul.mubr.f32.gmra.mxu0 %v448
      %v649 = vpop.f32.mrf.mxu0
      %v650 = vadd.f32 0.0, %v649
      %v651 = vpop.f32.mrf.mxu0
      %652 = vmatprep.mubr.f32.mxu0 0.0
      %653 = vmatmul.mubr.f32.gmra.mxu0 %v451
      %v654 = vpop.f32.mrf.mxu0
      %v655 = vadd.f32 0.0, %v654
      %v656 = vpop.f32.mrf.mxu0
      %657 = vmatprep.mubr.f32.mxu0 0.0
      %658 = vmatmul.mubr.f32.gmra.mxu0 %v454
      %v659 = vpop.f32.mrf.mxu0
      %v660 = vadd.f32 0.0, %v659
      %v661 = vpop.f32.mrf.mxu0
      %662 = vmatprep.mubr.f32.mxu0 0.0
      %663 = vmatmul.mubr.f32.gmra.mxu0 %v457
      %v664 = vpop.f32.mrf.mxu0
      %v665 = vadd.f32 0.0, %v664
      %v666 = vpop.f32.mrf.mxu0
      %667 = vmatprep.mubr.f32.mxu0 0.0
      %668 = vmatmul.mubr.f32.gmra.mxu0 %v460
      %v669 = vpop.f32.mrf.mxu0
      %v670 = vadd.f32 0.0, %v669
      %v671 = vpop.f32.mrf.mxu0
      %672 = vmatprep.mubr.f32.mxu0 0.0
      %673 = vmatmul.mubr.f32.gmra.mxu0 %v463
      %v674 = vpop.f32.mrf.mxu0
      %v675 = vadd.f32 0.0, %v674
      %v676 = vpop.f32.mrf.mxu0
      %677 = vmatprep.mubr.f32.mxu0 0.0
      %678 = vmatmul.mubr.f32.gmra.mxu0 %v466
      %v679 = vpop.f32.mrf.mxu0
      %v680 = vadd.f32 0.0, %v679
      %v681 = vpop.f32.mrf.mxu0
      %682 = vdwg.mxu0
      %v683 = vld [vmem:[%s2] sm:$0x1]
      %v685 = vlaneseq
      %v686 = vshrl.u32 %v685, 7
      %v687 = vsub.s32 0, %v686
      %v688 = vrot.slane %v683, %v687
      %v690 = vmul.f32 %v535, %v688
      %v691 = vmul.f32 %v540, %v688
      %v692 = vmul.f32 %v545, %v688
      %v693 = vmul.f32 %v550, %v688
      %v694 = vmul.f32 %v555, %v688
      %v695 = vmul.f32 %v560, %v688
      %v696 = vmul.f32 %v565, %v688
      %v697 = vmul.f32 %v570, %v688
      %v698 = vmul.f32 %v575, %v688
      %v699 = vmul.f32 %v580, %v688
      %v700 = vmul.f32 %v585, %v688
      %v701 = vmul.f32 %v590, %v688
      %v702 = vmul.f32 %v595, %v688
      %v703 = vmul.f32 %v600, %v688
      %v704 = vmul.f32 %v605, %v688
      %v705 = vmul.f32 %v610, %v688
      %v706 = vmul.f32 %v615, %v688
      %v707 = vmul.f32 %v620, %v688
      %v708 = vmul.f32 %v625, %v688
      %v709 = vmul.f32 %v630, %v688
      %v710 = vmul.f32 %v635, %v688
      %v711 = vmul.f32 %v640, %v688
      %v712 = vmul.f32 %v645, %v688
      %v713 = vmul.f32 %v650, %v688
      %v714 = vmul.f32 %v655, %v688
      %v715 = vmul.f32 %v660, %v688
      %v716 = vmul.f32 %v665, %v688
      %v717 = vmul.f32 %v670, %v688
      %v718 = vmul.f32 %v675, %v688
      %v719 = vmul.f32 %v680, %v688
      %v720 = vld [vmem:[%s3] sm:$0x1]
      %v722 = vlaneseq
      %v723 = vshrl.u32 %v722, 7
      %v724 = vsub.s32 0, %v723
      %v725 = vrot.slane %v720, %v724
      %v727 = vadd.f32 %v690, %v725
      %v728 = vadd.f32 %v691, %v725
      %v729 = vadd.f32 %v692, %v725
      %v730 = vadd.f32 %v693, %v725
      %v731 = vadd.f32 %v694, %v725
      %v732 = vadd.f32 %v695, %v725
      %v733 = vadd.f32 %v696, %v725
      %v734 = vadd.f32 %v697, %v725
      %v735 = vadd.f32 %v698, %v725
      %v736 = vadd.f32 %v699, %v725
      %v737 = vadd.f32 %v700, %v725
      %v738 = vadd.f32 %v701, %v725
      %v739 = vadd.f32 %v702, %v725
      %v740 = vadd.f32 %v703, %v725
      %v741 = vadd.f32 %v704, %v725
      %v742 = vadd.f32 %v705, %v725
      %v743 = vadd.f32 %v706, %v725
      %v744 = vadd.f32 %v707, %v725
      %v745 = vadd.f32 %v708, %v725
      %v746 = vadd.f32 %v709, %v725
      %v747 = vadd.f32 %v710, %v725
      %v748 = vadd.f32 %v711, %v725
      %v749 = vadd.f32 %v712, %v725
      %v750 = vadd.f32 %v713, %v725
      %v751 = vadd.f32 %v714, %v725
      %v752 = vadd.f32 %v715, %v725
      %v753 = vadd.f32 %v716, %v725
      %v754 = vadd.f32 %v717, %v725
      %v755 = vadd.f32 %v718, %v725
      %v756 = vadd.f32 %v719, %v725
      %v757 = vxor.u32 %v727, 2147483648
      %v758 = vxor.u32 %v728, 2147483648
      %v759 = vxor.u32 %v729, 2147483648
      %v760 = vxor.u32 %v730, 2147483648
      %v761 = vxor.u32 %v731, 2147483648
      %v762 = vxor.u32 %v732, 2147483648
      %v763 = vxor.u32 %v733, 2147483648
      %v764 = vxor.u32 %v734, 2147483648
      %v765 = vxor.u32 %v735, 2147483648
      %v766 = vxor.u32 %v736, 2147483648
      %v767 = vxor.u32 %v737, 2147483648
      %v768 = vxor.u32 %v738, 2147483648
      %v769 = vxor.u32 %v739, 2147483648
      %v770 = vxor.u32 %v740, 2147483648
      %v771 = vxor.u32 %v741, 2147483648
      %v772 = vxor.u32 %v742, 2147483648
      %v773 = vxor.u32 %v743, 2147483648
      %v774 = vxor.u32 %v744, 2147483648
      %v775 = vxor.u32 %v745, 2147483648
      %v776 = vxor.u32 %v746, 2147483648
      %v777 = vxor.u32 %v747, 2147483648
      %v778 = vxor.u32 %v748, 2147483648
      %v779 = vxor.u32 %v749, 2147483648
      %v780 = vxor.u32 %v750, 2147483648
      %v781 = vxor.u32 %v751, 2147483648
      %v782 = vxor.u32 %v752, 2147483648
      %v783 = vxor.u32 %v753, 2147483648
      %v784 = vxor.u32 %v754, 2147483648
      %v785 = vxor.u32 %v755, 2147483648
      %v786 = vxor.u32 %v756, 2147483648
      %v787 = vmul.f32 %v757, 1.442695
      %v788 = vpow.pop %v787
      %v789 = vmul.f32 %v758, 1.442695
      %v790 = vpow.pop %v789
      %v791 = vmul.f32 %v759, 1.442695
      %v792 = vpow.pop %v791
      %v793 = vmul.f32 %v760, 1.442695
      %v794 = vpow.pop %v793
      %v795 = vmul.f32 %v761, 1.442695
      %v796 = vpow.pop %v795
      %v797 = vmul.f32 %v762, 1.442695
      %v798 = vpow.pop %v797
      %v799 = vmul.f32 %v763, 1.442695
      %v800 = vpow.pop %v799
      %v801 = vmul.f32 %v764, 1.442695
      %v802 = vpow.pop %v801
      %v803 = vmul.f32 %v765, 1.442695
      %v804 = vpow.pop %v803
      %v805 = vmul.f32 %v766, 1.442695
      %v806 = vpow.pop %v805
      %v807 = vmul.f32 %v767, 1.442695
      %v808 = vpow.pop %v807
      %v809 = vmul.f32 %v768, 1.442695
      %v810 = vpow.pop %v809
      %v811 = vmul.f32 %v769, 1.442695
      %v812 = vpow.pop %v811
      %v813 = vmul.f32 %v770, 1.442695
      %v814 = vpow.pop %v813
      %v815 = vmul.f32 %v771, 1.442695
      %v816 = vpow.pop %v815
      %v817 = vmul.f32 %v772, 1.442695
      %v818 = vpow.pop %v817
      %v819 = vmul.f32 %v773, 1.442695
      %v820 = vpow.pop %v819
      %v821 = vmul.f32 %v774, 1.442695
      %v822 = vpow.pop %v821
      %v823 = vmul.f32 %v775, 1.442695
      %v824 = vpow.pop %v823
      %v825 = vmul.f32 %v776, 1.442695
      %v826 = vpow.pop %v825
      %v827 = vmul.f32 %v777, 1.442695
      %v828 = vpow.pop %v827
      %v829 = vmul.f32 %v778, 1.442695
      %v830 = vpow.pop %v829
      %v831 = vmul.f32 %v779, 1.442695
      %v832 = vpow.pop %v831
      %v833 = vmul.f32 %v780, 1.442695
      %v834 = vpow.pop %v833
      %v835 = vmul.f32 %v781, 1.442695
      %v836 = vpow.pop %v835
      %v837 = vmul.f32 %v782, 1.442695
      %v838 = vpow.pop %v837
      %v839 = vmul.f32 %v783, 1.442695
      %v840 = vpow.pop %v839
      %v841 = vmul.f32 %v784, 1.442695
      %v842 = vpow.pop %v841
      %v843 = vmul.f32 %v785, 1.442695
      %v844 = vpow.pop %v843
      %v845 = vmul.f32 %v786, 1.442695
      %v846 = vpow.pop %v845
      %v847 = vadd.f32 %v788, 1.0
      %v848 = vadd.f32 %v790, 1.0
      %v849 = vadd.f32 %v792, 1.0
      %v850 = vadd.f32 %v794, 1.0
      %v851 = vadd.f32 %v796, 1.0
      %v852 = vadd.f32 %v798, 1.0
      %v853 = vadd.f32 %v800, 1.0
      %v854 = vadd.f32 %v802, 1.0
      %v855 = vadd.f32 %v804, 1.0
      %v856 = vadd.f32 %v806, 1.0
      %v857 = vadd.f32 %v808, 1.0
      %v858 = vadd.f32 %v810, 1.0
      %v859 = vadd.f32 %v812, 1.0
      %v860 = vadd.f32 %v814, 1.0
      %v861 = vadd.f32 %v816, 1.0
      %v862 = vadd.f32 %v818, 1.0
      %v863 = vadd.f32 %v820, 1.0
      %v864 = vadd.f32 %v822, 1.0
      %v865 = vadd.f32 %v824, 1.0
      %v866 = vadd.f32 %v826, 1.0
      %v867 = vadd.f32 %v828, 1.0
      %v868 = vadd.f32 %v830, 1.0
      %v869 = vadd.f32 %v832, 1.0
      %v870 = vadd.f32 %v834, 1.0
      %v871 = vadd.f32 %v836, 1.0
      %v872 = vadd.f32 %v838, 1.0
      %v873 = vadd.f32 %v840, 1.0
      %v874 = vadd.f32 %v842, 1.0
      %v875 = vadd.f32 %v844, 1.0
      %v876 = vadd.f32 %v846, 1.0
      %v877 = vrcp.pop %v847
      %v878 = vmul.f32 1.0, %v877
      %v879 = vrcp.pop %v848
      %v880 = vmul.f32 1.0, %v879
      %v881 = vrcp.pop %v849
      %v882 = vmul.f32 1.0, %v881
      %v883 = vrcp.pop %v850
      %v884 = vmul.f32 1.0, %v883
      %v885 = vrcp.pop %v851
      %v886 = vmul.f32 1.0, %v885
      %v887 = vrcp.pop %v852
      %v888 = vmul.f32 1.0, %v887
      %v889 = vrcp.pop %v853
      %v890 = vmul.f32 1.0, %v889
      %v891 = vrcp.pop %v854
      %v892 = vmul.f32 1.0, %v891
      %v893 = vrcp.pop %v855
      %v894 = vmul.f32 1.0, %v893
      %v895 = vrcp.pop %v856
      %v896 = vmul.f32 1.0, %v895
      %v897 = vrcp.pop %v857
      %v898 = vmul.f32 1.0, %v897
      %v899 = vrcp.pop %v858
      %v900 = vmul.f32 1.0, %v899
      %v901 = vrcp.pop %v859
      %v902 = vmul.f32 1.0, %v901
      %v903 = vrcp.pop %v860
      %v904 = vmul.f32 1.0, %v903
      %v905 = vrcp.pop %v861
      %v906 = vmul.f32 1.0, %v905
      %v907 = vrcp.pop %v862
      %v908 = vmul.f32 1.0, %v907
      %v909 = vrcp.pop %v863
      %v910 = vmul.f32 1.0, %v909
      %v911 = vrcp.pop %v864
      %v912 = vmul.f32 1.0, %v911
      %v913 = vrcp.pop %v865
      %v914 = vmul.f32 1.0, %v913
      %v915 = vrcp.pop %v866
      %v916 = vmul.f32 1.0, %v915
      %v917 = vrcp.pop %v867
      %v918 = vmul.f32 1.0, %v917
      %v919 = vrcp.pop %v868
      %v920 = vmul.f32 1.0, %v919
      %v921 = vrcp.pop %v869
      %v922 = vmul.f32 1.0, %v921
      %v923 = vrcp.pop %v870
      %v924 = vmul.f32 1.0, %v923
      %v925 = vrcp.pop %v871
      %v926 = vmul.f32 1.0, %v925
      %v927 = vrcp.pop %v872
      %v928 = vmul.f32 1.0, %v927
      %v929 = vrcp.pop %v873
      %v930 = vmul.f32 1.0, %v929
      %v931 = vrcp.pop %v874
      %v932 = vmul.f32 1.0, %v931
      %v933 = vrcp.pop %v875
      %v934 = vmul.f32 1.0, %v933
      %v935 = vrcp.pop %v876
      %v936 = vmul.f32 1.0, %v935
      %v937 = vmul.f32 %v727, %v878
      %v938 = vmul.f32 %v728, %v880
      %v939 = vmul.f32 %v729, %v882
      %v940 = vmul.f32 %v730, %v884
      %v941 = vmul.f32 %v731, %v886
      %v942 = vmul.f32 %v732, %v888
      %v943 = vmul.f32 %v733, %v890
      %v944 = vmul.f32 %v734, %v892
      %v945 = vmul.f32 %v735, %v894
      %v946 = vmul.f32 %v736, %v896
      %v947 = vmul.f32 %v737, %v898
      %v948 = vmul.f32 %v738, %v900
      %v949 = vmul.f32 %v739, %v902
      %v950 = vmul.f32 %v740, %v904
      %v951 = vmul.f32 %v741, %v906
      %v952 = vmul.f32 %v742, %v908
      %v953 = vmul.f32 %v743, %v910
      %v954 = vmul.f32 %v744, %v912
      %v955 = vmul.f32 %v745, %v914
      %v956 = vmul.f32 %v746, %v916
      %v957 = vmul.f32 %v747, %v918
      %v958 = vmul.f32 %v748, %v920
      %v959 = vmul.f32 %v749, %v922
      %v960 = vmul.f32 %v750, %v924
      %v961 = vmul.f32 %v751, %v926
      %v962 = vmul.f32 %v752, %v928
      %v963 = vmul.f32 %v753, %v930
      %v964 = vmul.f32 %v754, %v932
      %v965 = vmul.f32 %v755, %v934
      %v966 = vmul.f32 %v756, %v936
      %v967 = vstv %s340
      %v968 = vadd.s32 %v967, 1
      %v969 = vadd.s32 %v967, 2
      %v970 = vadd.s32 %v967, 3
      %v971 = vadd.s32 %v967, 4
      %v972 = vadd.s32 %v967, 5
      %v973 = vadd.s32 %v967, 6
      %v974 = vadd.s32 %v967, 7
      %v975 = vadd.s32 %v967, 8
      %v976 = vadd.s32 %v967, 9
      %v977 = vlaneseq
      %v978 = vshrl.u32 %v977, 7
      %v979 = vadd.s32 %v978, 8
      %v980 = vadd.s32 %v978, 16
      %vm981 = vcmp.ge.s32.totalorder %v967, 1
      %vm982 = vcmp.ge.s32.totalorder %v968, 1
      %vm983 = vcmp.ge.s32.totalorder %v969, 1
      %vm984 = vcmp.ge.s32.totalorder %v970, 1
      %vm985 = vcmp.ge.s32.totalorder %v971, 1
      %vm986 = vcmp.ge.s32.totalorder %v972, 1
      %vm987 = vcmp.ge.s32.totalorder %v973, 1
      %vm988 = vcmp.ge.s32.totalorder %v974, 1
      %vm989 = vcmp.ge.s32.totalorder %v975, 1
      %vm990 = vcmp.ge.s32.totalorder %v976, 1
      %vm991 = vcmp.lt.s32.totalorder %v967, 17
      %vm992 = vcmp.lt.s32.totalorder %v968, 17
      %vm993 = vcmp.lt.s32.totalorder %v969, 17
      %vm994 = vcmp.lt.s32.totalorder %v970, 17
      %vm995 = vcmp.lt.s32.totalorder %v971, 17
      %vm996 = vcmp.lt.s32.totalorder %v972, 17
      %vm997 = vcmp.lt.s32.totalorder %v973, 17
      %vm998 = vcmp.lt.s32.totalorder %v974, 17
      %vm999 = vcmp.lt.s32.totalorder %v975, 17
      %vm1000 = vcmp.lt.s32.totalorder %v976, 17
      %vm1001 = vmand %vm981, %vm991
      %vm1002 = vmand %vm982, %vm992
      %vm1003 = vmand %vm983, %vm993
      %vm1004 = vmand %vm984, %vm994
      %vm1005 = vmand %vm985, %vm995
      %vm1006 = vmand %vm986, %vm996
      %vm1007 = vmand %vm987, %vm997
      %vm1008 = vmand %vm988, %vm998
      %vm1009 = vmand %vm989, %vm999
      %vm1010 = vmand %vm990, %vm1000
      %vm1011 = vcmp.ge.s32.totalorder %v978, 1
      %vm1012 = vcmp.ge.s32.totalorder %v979, 1
      %vm1013 = vcmp.ge.s32.totalorder %v980, 1
      %vm1014 = vmand %vm1001, %vm1011
      %vm1015 = vmand %vm1001, %vm1012
      %vm1016 = vmand %vm1001, %vm1013
      %vm1017 = vmand %vm1002, %vm1011
      %vm1018 = vmand %vm1002, %vm1012
      %vm1019 = vmand %vm1002, %vm1013
      %vm1020 = vmand %vm1003, %vm1011
      %vm1021 = vmand %vm1003, %vm1012
      %vm1022 = vmand %vm1003, %vm1013
      %vm1023 = vmand %vm1004, %vm1011
      %vm1024 = vmand %vm1004, %vm1012
      %vm1025 = vmand %vm1004, %vm1013
      %vm1026 = vmand %vm1005, %vm1011
      %vm1027 = vmand %vm1005, %vm1012
      %vm1028 = vmand %vm1005, %vm1013
      %vm1029 = vmand %vm1006, %vm1011
      %vm1030 = vmand %vm1006, %vm1012
      %vm1031 = vmand %vm1006, %vm1013
      %vm1032 = vmand %vm1007, %vm1011
      %vm1033 = vmand %vm1007, %vm1012
      %vm1034 = vmand %vm1007, %vm1013
      %vm1035 = vmand %vm1008, %vm1011
      %vm1036 = vmand %vm1008, %vm1012
      %vm1037 = vmand %vm1008, %vm1013
      %vm1038 = vmand %vm1009, %vm1011
      %vm1039 = vmand %vm1009, %vm1012
      %vm1040 = vmand %vm1009, %vm1013
      %vm1041 = vmand %vm1010, %vm1011
      %vm1042 = vmand %vm1010, %vm1012
      %vm1043 = vmand %vm1010, %vm1013
      %vm1044 = vcmp.lt.s32.totalorder %v978, 17
      %vm1045 = vcmp.lt.s32.totalorder %v979, 17
      %vm1046 = vcmp.lt.s32.totalorder %v980, 17
      %vm1047 = vmand %vm1014, %vm1044
      %vm1048 = vmand %vm1015, %vm1045
      %vm1049 = vmand %vm1016, %vm1046
      %vm1050 = vmand %vm1017, %vm1044
      %vm1051 = vmand %vm1018, %vm1045
      %vm1052 = vmand %vm1019, %vm1046
      %vm1053 = vmand %vm1020, %vm1044
      %vm1054 = vmand %vm1021, %vm1045
      %vm1055 = vmand %vm1022, %vm1046
      %vm1056 = vmand %vm1023, %vm1044
      %vm1057 = vmand %vm1024, %vm1045
      %vm1058 = vmand %vm1025, %vm1046
      %vm1059 = vmand %vm1026, %vm1044
      %vm1060 = vmand %vm1027, %vm1045
      %vm1061 = vmand %vm1028, %vm1046
      %vm1062 = vmand %vm1029, %vm1044
      %vm1063 = vmand %vm1030, %vm1045
      %vm1064 = vmand %vm1031, %vm1046
      %vm1065 = vmand %vm1032, %vm1044
      %vm1066 = vmand %vm1033, %vm1045
      %vm1067 = vmand %vm1034, %vm1046
      %vm1068 = vmand %vm1035, %vm1044
      %vm1069 = vmand %vm1036, %vm1045
      %vm1070 = vmand %vm1037, %vm1046
      %vm1071 = vmand %vm1038, %vm1044
      %vm1072 = vmand %vm1039, %vm1045
      %vm1073 = vmand %vm1040, %vm1046
      %vm1074 = vmand %vm1041, %vm1044
      %vm1075 = vmand %vm1042, %vm1045
      %vm1076 = vmand %vm1043, %vm1046
      %v1077 = vsel %vm1047, 1, 0
      %v1078 = vsel %vm1048, 1, 0
      %v1079 = vsel %vm1049, 1, 0
      %v1080 = vsel %vm1050, 1, 0
      %v1081 = vsel %vm1051, 1, 0
      %v1082 = vsel %vm1052, 1, 0
      %v1083 = vsel %vm1053, 1, 0
      %v1084 = vsel %vm1054, 1, 0
      %v1085 = vsel %vm1055, 1, 0
      %v1086 = vsel %vm1056, 1, 0
      %v1087 = vsel %vm1057, 1, 0
      %v1088 = vsel %vm1058, 1, 0
      %v1089 = vsel %vm1059, 1, 0
      %v1090 = vsel %vm1060, 1, 0
      %v1091 = vsel %vm1061, 1, 0
      %v1092 = vsel %vm1062, 1, 0
      %v1093 = vsel %vm1063, 1, 0
      %v1094 = vsel %vm1064, 1, 0
      %v1095 = vsel %vm1065, 1, 0
      %v1096 = vsel %vm1066, 1, 0
      %v1097 = vsel %vm1067, 1, 0
      %v1098 = vsel %vm1068, 1, 0
      %v1099 = vsel %vm1069, 1, 0
      %v1100 = vsel %vm1070, 1, 0
      %v1101 = vsel %vm1071, 1, 0
      %v1102 = vsel %vm1072, 1, 0
      %v1103 = vsel %vm1073, 1, 0
      %v1104 = vsel %vm1074, 1, 0
      %v1105 = vsel %vm1075, 1, 0
      %v1106 = vsel %vm1076, 1, 0
      %v1107 = vcvt.s32.f32 %v1077
      %v1108 = vcvt.s32.f32 %v1078
      %v1109 = vcvt.s32.f32 %v1079
      %v1110 = vcvt.s32.f32 %v1080
      %v1111 = vcvt.s32.f32 %v1081
      %v1112 = vcvt.s32.f32 %v1082
      %v1113 = vcvt.s32.f32 %v1083
      %v1114 = vcvt.s32.f32 %v1084
      %v1115 = vcvt.s32.f32 %v1085
      %v1116 = vcvt.s32.f32 %v1086
      %v1117 = vcvt.s32.f32 %v1087
      %v1118 = vcvt.s32.f32 %v1088
      %v1119 = vcvt.s32.f32 %v1089
      %v1120 = vcvt.s32.f32 %v1090
      %v1121 = vcvt.s32.f32 %v1091
      %v1122 = vcvt.s32.f32 %v1092
      %v1123 = vcvt.s32.f32 %v1093
      %v1124 = vcvt.s32.f32 %v1094
      %v1125 = vcvt.s32.f32 %v1095
      %v1126 = vcvt.s32.f32 %v1096
      %v1127 = vcvt.s32.f32 %v1097
      %v1128 = vcvt.s32.f32 %v1098
      %v1129 = vcvt.s32.f32 %v1099
      %v1130 = vcvt.s32.f32 %v1100
      %v1131 = vcvt.s32.f32 %v1101
      %v1132 = vcvt.s32.f32 %v1102
      %v1133 = vcvt.s32.f32 %v1103
      %v1134 = vcvt.s32.f32 %v1104
      %v1135 = vcvt.s32.f32 %v1105
      %v1136 = vcvt.s32.f32 %v1106
      %v1137 = vmul.f32 %v937, %v1107
      %v1138 = vmul.f32 %v938, %v1108
      %v1139 = vmul.f32 %v939, %v1109
      %v1140 = vmul.f32 %v940, %v1110
      %v1141 = vmul.f32 %v941, %v1111
      %v1142 = vmul.f32 %v942, %v1112
      %v1143 = vmul.f32 %v943, %v1113
      %v1144 = vmul.f32 %v944, %v1114
      %v1145 = vmul.f32 %v945, %v1115
      %v1146 = vmul.f32 %v946, %v1116
      %v1147 = vmul.f32 %v947, %v1117
      %v1148 = vmul.f32 %v948, %v1118
      %v1149 = vmul.f32 %v949, %v1119
      %v1150 = vmul.f32 %v950, %v1120
      %v1151 = vmul.f32 %v951, %v1121
      %v1152 = vmul.f32 %v952, %v1122
      %v1153 = vmul.f32 %v953, %v1123
      %v1154 = vmul.f32 %v954, %v1124
      %v1155 = vmul.f32 %v955, %v1125
      %v1156 = vmul.f32 %v956, %v1126
      %v1157 = vmul.f32 %v957, %v1127
      %v1158 = vmul.f32 %v958, %v1128
      %v1159 = vmul.f32 %v959, %v1129
      %v1160 = vmul.f32 %v960, %v1130
      %v1161 = vmul.f32 %v961, %v1131
      %v1162 = vmul.f32 %v962, %v1132
      %v1163 = vmul.f32 %v963, %v1133
      %v1164 = vmul.f32 %v964, %v1134
      %v1165 = vmul.f32 %v965, %v1135
      %v1166 = vmul.f32 %v966, %v1136
      %v1167 = vld [vmem:[%s4] sm:$0xff]
      %v1168 = vld [vmem:[%s4 + $0x8] sm:$0x1]
      %v1169 = vlaneseq
      %v1170 = vshrl.u32 %v1169, 7
      %v1171 = vsub.s32 0, %v1170
      %v1172 = vrot.slane %v1167, %v1171
      %v1173 = vmul.f32 %v1137, %v1172
      %v1174 = vmul.f32 %v1138, %v1172
      %v1175 = vmul.f32 %v1140, %v1172
      %v1176 = vmul.f32 %v1141, %v1172
      %v1177 = vmul.f32 %v1143, %v1172
      %v1178 = vmul.f32 %v1144, %v1172
      %v1179 = vmul.f32 %v1146, %v1172
      %v1180 = vmul.f32 %v1147, %v1172
      %v1181 = vmul.f32 %v1149, %v1172
      %v1182 = vmul.f32 %v1150, %v1172
      %v1183 = vmul.f32 %v1152, %v1172
      %v1184 = vmul.f32 %v1153, %v1172
      %v1185 = vmul.f32 %v1155, %v1172
      %v1186 = vmul.f32 %v1156, %v1172
      %v1187 = vmul.f32 %v1158, %v1172
      %v1188 = vmul.f32 %v1159, %v1172
      %v1189 = vadd.f32 %v1173, 0.0
      %v1190 = vadd.f32 %v1174, 0.0
      %v1191 = vadd.f32 %v1175, 0.0
      %v1192 = vadd.f32 %v1176, 0.0
      %v1193 = vadd.f32 %v1177, 0.0
      %v1194 = vadd.f32 %v1178, 0.0
      %v1195 = vadd.f32 %v1179, 0.0
      %v1196 = vadd.f32 %v1180, 0.0
      %v1197 = vadd.f32 %v1181, 0.0
      %v1198 = vadd.f32 %v1182, 0.0
      %v1199 = vadd.f32 %v1183, 0.0
      %v1200 = vadd.f32 %v1184, 0.0
      %v1201 = vadd.f32 %v1185, 0.0
      %v1202 = vadd.f32 %v1186, 0.0
      %v1203 = vadd.f32 %v1187, 0.0
      %v1204 = vadd.f32 %v1188, 0.0
      %v1205 = vlaneseq
      %v1206 = vshrl.u32 %v1205, 7
      %v1207 = vsub.s32 1, %v1206
      %v1208 = vrot.slane %v1167, %v1207
      %v1209 = vmul.f32 %v1137, %v1208
      %v1210 = vmul.f32 %v1138, %v1208
      %v1211 = vmul.f32 %v1139, %v1208
      %v1212 = vmul.f32 %v1140, %v1208
      %v1213 = vmul.f32 %v1141, %v1208
      %v1214 = vmul.f32 %v1142, %v1208
      %v1215 = vmul.f32 %v1143, %v1208
      %v1216 = vmul.f32 %v1144, %v1208
      %v1217 = vmul.f32 %v1145, %v1208
      %v1218 = vmul.f32 %v1146, %v1208
      %v1219 = vmul.f32 %v1147, %v1208
      %v1220 = vmul.f32 %v1148, %v1208
      %v1221 = vmul.f32 %v1149, %v1208
      %v1222 = vmul.f32 %v1150, %v1208
      %v1223 = vmul.f32 %v1151, %v1208
      %v1224 = vmul.f32 %v1152, %v1208
      %v1225 = vmul.f32 %v1153, %v1208
      %v1226 = vmul.f32 %v1154, %v1208
      %v1227 = vmul.f32 %v1155, %v1208
      %v1228 = vmul.f32 %v1156, %v1208
      %v1229 = vmul.f32 %v1157, %v1208
      %v1230 = vmul.f32 %v1158, %v1208
      %v1231 = vmul.f32 %v1159, %v1208
      %v1232 = vmul.f32 %v1160, %v1208
      %vm1257 = vcmask 1046528
      %v1258 = vrot.slane %v1209, 1
      %v1259 = vrot.slane %v1210, 1
      %v1260 = vsel %vm1257, %v1258, %v1259
      %v1261 = vrot.slane %v1211, 1
      %v1262 = vsel %vm1257, %v1259, %v1261
      %v1263 = vrot.slane %v1212, 1
      %v1264 = vrot.slane %v1213, 1
      %v1265 = vsel %vm1257, %v1263, %v1264
      %v1266 = vrot.slane %v1214, 1
      %v1267 = vsel %vm1257, %v1264, %v1266
      %v1268 = vrot.slane %v1215, 1
      %v1269 = vrot.slane %v1216, 1
      %v1270 = vsel %vm1257, %v1268, %v1269
      %v1271 = vrot.slane %v1217, 1
      %v1272 = vsel %vm1257, %v1269, %v1271
      %v1273 = vrot.slane %v1218, 1
      %v1274 = vrot.slane %v1219, 1
      %v1275 = vsel %vm1257, %v1273, %v1274
      %v1276 = vrot.slane %v1220, 1
      %v1277 = vsel %vm1257, %v1274, %v1276
      %v1278 = vrot.slane %v1221, 1
      %v1279 = vrot.slane %v1222, 1
      %v1280 = vsel %vm1257, %v1278, %v1279
      %v1281 = vrot.slane %v1223, 1
      %v1282 = vsel %vm1257, %v1279, %v1281
      %v1283 = vrot.slane %v1224, 1
      %v1284 = vrot.slane %v1225, 1
      %v1285 = vsel %vm1257, %v1283, %v1284
      %v1286 = vrot.slane %v1226, 1
      %v1287 = vsel %vm1257, %v1284, %v1286
      %v1288 = vrot.slane %v1227, 1
      %v1289 = vrot.slane %v1228, 1
      %v1290 = vsel %vm1257, %v1288, %v1289
      %v1291 = vrot.slane %v1229, 1
      %v1292 = vsel %vm1257, %v1289, %v1291
      %v1293 = vrot.slane %v1230, 1
      %v1294 = vrot.slane %v1231, 1
      %v1295 = vsel %vm1257, %v1293, %v1294
      %v1296 = vrot.slane %v1232, 1
      %v1297 = vsel %vm1257, %v1294, %v1296
      %v1314 = vadd.f32 %v1189, %v1260
      %v1315 = vadd.f32 %v1190, %v1262
      %v1316 = vadd.f32 %v1191, %v1265
      %v1317 = vadd.f32 %v1192, %v1267
      %v1318 = vadd.f32 %v1193, %v1270
      %v1319 = vadd.f32 %v1194, %v1272
      %v1320 = vadd.f32 %v1195, %v1275
      %v1321 = vadd.f32 %v1196, %v1277
      %v1322 = vadd.f32 %v1197, %v1280
      %v1323 = vadd.f32 %v1198, %v1282
      %v1324 = vadd.f32 %v1199, %v1285
      %v1325 = vadd.f32 %v1200, %v1287
      %v1326 = vadd.f32 %v1201, %v1290
      %v1327 = vadd.f32 %v1202, %v1292
      %v1328 = vadd.f32 %v1203, %v1295
      %v1329 = vadd.f32 %v1204, %v1297
      %v1330 = vlaneseq
      %v1331 = vshrl.u32 %v1330, 7
      %v1332 = vsub.s32 2, %v1331
      %v1333 = vrot.slane %v1167, %v1332
      %v1334 = vmul.f32 %v1137, %v1333
      %v1335 = vmul.f32 %v1138, %v1333
      %v1336 = vmul.f32 %v1139, %v1333
      %v1337 = vmul.f32 %v1140, %v1333
      %v1338 = vmul.f32 %v1141, %v1333
      %v1339 = vmul.f32 %v1142, %v1333
      %v1340 = vmul.f32 %v1143, %v1333
      %v1341 = vmul.f32 %v1144, %v1333
      %v1342 = vmul.f32 %v1145, %v1333
      %v1343 = vmul.f32 %v1146, %v1333
      %v1344 = vmul.f32 %v1147, %v1333
      %v1345 = vmul.f32 %v1148, %v1333
      %v1346 = vmul.f32 %v1149, %v1333
      %v1347 = vmul.f32 %v1150, %v1333
      %v1348 = vmul.f32 %v1151, %v1333
      %v1349 = vmul.f32 %v1152, %v1333
      %v1350 = vmul.f32 %v1153, %v1333
      %v1351 = vmul.f32 %v1154, %v1333
      %v1352 = vmul.f32 %v1155, %v1333
      %v1353 = vmul.f32 %v1156, %v1333
      %v1354 = vmul.f32 %v1157, %v1333
      %v1355 = vmul.f32 %v1158, %v1333
      %v1356 = vmul.f32 %v1159, %v1333
      %v1357 = vmul.f32 %v1160, %v1333
      %vm1382 = vcmask 1045504
      %v1383 = vrot.slane %v1334, 2
      %v1384 = vrot.slane %v1335, 2
      %v1385 = vsel %vm1382, %v1383, %v1384
      %v1386 = vrot.slane %v1336, 2
      %v1387 = vsel %vm1382, %v1384, %v1386
      %v1388 = vrot.slane %v1337, 2
      %v1389 = vrot.slane %v1338, 2
      %v1390 = vsel %vm1382, %v1388, %v1389
      %v1391 = vrot.slane %v1339, 2
      %v1392 = vsel %vm1382, %v1389, %v1391
      %v1393 = vrot.slane %v1340, 2
      %v1394 = vrot.slane %v1341, 2
      %v1395 = vsel %vm1382, %v1393, %v1394
      %v1396 = vrot.slane %v1342, 2
      %v1397 = vsel %vm1382, %v1394, %v1396
      %v1398 = vrot.slane %v1343, 2
      %v1399 = vrot.slane %v1344, 2
      %v1400 = vsel %vm1382, %v1398, %v1399
      %v1401 = vrot.slane %v1345, 2
      %v1402 = vsel %vm1382, %v1399, %v1401
      %v1403 = vrot.slane %v1346, 2
      %v1404 = vrot.slane %v1347, 2
      %v1405 = vsel %vm1382, %v1403, %v1404
      %v1406 = vrot.slane %v1348, 2
      %v1407 = vsel %vm1382, %v1404, %v1406
      %v1408 = vrot.slane %v1349, 2
      %v1409 = vrot.slane %v1350, 2
      %v1410 = vsel %vm1382, %v1408, %v1409
      %v1411 = vrot.slane %v1351, 2
      %v1412 = vsel %vm1382, %v1409, %v1411
      %v1413 = vrot.slane %v1352, 2
      %v1414 = vrot.slane %v1353, 2
      %v1415 = vsel %vm1382, %v1413, %v1414
      %v1416 = vrot.slane %v1354, 2
      %v1417 = vsel %vm1382, %v1414, %v1416
      %v1418 = vrot.slane %v1355, 2
      %v1419 = vrot.slane %v1356, 2
      %v1420 = vsel %vm1382, %v1418, %v1419
      %v1421 = vrot.slane %v1357, 2
      %v1422 = vsel %vm1382, %v1419, %v1421
      %v1439 = vadd.f32 %v1314, %v1385
      %v1440 = vadd.f32 %v1315, %v1387
      %v1441 = vadd.f32 %v1316, %v1390
      %v1442 = vadd.f32 %v1317, %v1392
      %v1443 = vadd.f32 %v1318, %v1395
      %v1444 = vadd.f32 %v1319, %v1397
      %v1445 = vadd.f32 %v1320, %v1400
      %v1446 = vadd.f32 %v1321, %v1402
      %v1447 = vadd.f32 %v1322, %v1405
      %v1448 = vadd.f32 %v1323, %v1407
      %v1449 = vadd.f32 %v1324, %v1410
      %v1450 = vadd.f32 %v1325, %v1412
      %v1451 = vadd.f32 %v1326, %v1415
      %v1452 = vadd.f32 %v1327, %v1417
      %v1453 = vadd.f32 %v1328, %v1420
      %v1454 = vadd.f32 %v1329, %v1422
      %v1455 = vlaneseq
      %v1456 = vshrl.u32 %v1455, 7
      %v1457 = vsub.s32 3, %v1456
      %v1458 = vrot.slane %v1167, %v1457
      %v1459 = vmul.f32 %v1140, %v1458
      %v1460 = vmul.f32 %v1141, %v1458
      %v1461 = vmul.f32 %v1143, %v1458
      %v1462 = vmul.f32 %v1144, %v1458
      %v1463 = vmul.f32 %v1146, %v1458
      %v1464 = vmul.f32 %v1147, %v1458
      %v1465 = vmul.f32 %v1149, %v1458
      %v1466 = vmul.f32 %v1150, %v1458
      %v1467 = vmul.f32 %v1152, %v1458
      %v1468 = vmul.f32 %v1153, %v1458
      %v1469 = vmul.f32 %v1155, %v1458
      %v1470 = vmul.f32 %v1156, %v1458
      %v1471 = vmul.f32 %v1158, %v1458
      %v1472 = vmul.f32 %v1159, %v1458
      %v1473 = vmul.f32 %v1161, %v1458
      %v1474 = vmul.f32 %v1162, %v1458
      %v1475 = vadd.f32 %v1439, %v1459
      %v1476 = vadd.f32 %v1440, %v1460
      %v1477 = vadd.f32 %v1441, %v1461
      %v1478 = vadd.f32 %v1442, %v1462
      %v1479 = vadd.f32 %v1443, %v1463
      %v1480 = vadd.f32 %v1444, %v1464
      %v1481 = vadd.f32 %v1445, %v1465
      %v1482 = vadd.f32 %v1446, %v1466
      %v1483 = vadd.f32 %v1447, %v1467
      %v1484 = vadd.f32 %v1448, %v1468
      %v1485 = vadd.f32 %v1449, %v1469
      %v1486 = vadd.f32 %v1450, %v1470
      %v1487 = vadd.f32 %v1451, %v1471
      %v1488 = vadd.f32 %v1452, %v1472
      %v1489 = vadd.f32 %v1453, %v1473
      %v1490 = vadd.f32 %v1454, %v1474
      %v1491 = vlaneseq
      %v1492 = vshrl.u32 %v1491, 7
      %v1493 = vsub.s32 4, %v1492
      %v1494 = vrot.slane %v1167, %v1493
      %v1495 = vmul.f32 %v1140, %v1494
      %v1496 = vmul.f32 %v1141, %v1494
      %v1497 = vmul.f32 %v1142, %v1494
      %v1498 = vmul.f32 %v1143, %v1494
      %v1499 = vmul.f32 %v1144, %v1494
      %v1500 = vmul.f32 %v1145, %v1494
      %v1501 = vmul.f32 %v1146, %v1494
      %v1502 = vmul.f32 %v1147, %v1494
      %v1503 = vmul.f32 %v1148, %v1494
      %v1504 = vmul.f32 %v1149, %v1494
      %v1505 = vmul.f32 %v1150, %v1494
      %v1506 = vmul.f32 %v1151, %v1494
      %v1507 = vmul.f32 %v1152, %v1494
      %v1508 = vmul.f32 %v1153, %v1494
      %v1509 = vmul.f32 %v1154, %v1494
      %v1510 = vmul.f32 %v1155, %v1494
      %v1511 = vmul.f32 %v1156, %v1494
      %v1512 = vmul.f32 %v1157, %v1494
      %v1513 = vmul.f32 %v1158, %v1494
      %v1514 = vmul.f32 %v1159, %v1494
      %v1515 = vmul.f32 %v1160, %v1494
      %v1516 = vmul.f32 %v1161, %v1494
      %v1517 = vmul.f32 %v1162, %v1494
      %v1518 = vmul.f32 %v1163, %v1494
      %v1543 = vrot.slane %v1495, 1
      %v1544 = vrot.slane %v1496, 1
      %v1545 = vsel %vm1257, %v1543, %v1544
      %v1546 = vrot.slane %v1497, 1
      %v1547 = vsel %vm1257, %v1544, %v1546
      %v1548 = vrot.slane %v1498, 1
      %v1549 = vrot.slane %v1499, 1
      %v1550 = vsel %vm1257, %v1548, %v1549
      %v1551 = vrot.slane %v1500, 1
      %v1552 = vsel %vm1257, %v1549, %v1551
      %v1553 = vrot.slane %v1501, 1
      %v1554 = vrot.slane %v1502, 1
      %v1555 = vsel %vm1257, %v1553, %v1554
      %v1556 = vrot.slane %v1503, 1
      %v1557 = vsel %vm1257, %v1554, %v1556
      %v1558 = vrot.slane %v1504, 1
      %v1559 = vrot.slane %v1505, 1
      %v1560 = vsel %vm1257, %v1558, %v1559
      %v1561 = vrot.slane %v1506, 1
      %v1562 = vsel %vm1257, %v1559, %v1561
      %v1563 = vrot.slane %v1507, 1
      %v1564 = vrot.slane %v1508, 1
      %v1565 = vsel %vm1257, %v1563, %v1564
      %v1566 = vrot.slane %v1509, 1
      %v1567 = vsel %vm1257, %v1564, %v1566
      %v1568 = vrot.slane %v1510, 1
      %v1569 = vrot.slane %v1511, 1
      %v1570 = vsel %vm1257, %v1568, %v1569
      %v1571 = vrot.slane %v1512, 1
      %v1572 = vsel %vm1257, %v1569, %v1571
      %v1573 = vrot.slane %v1513, 1
      %v1574 = vrot.slane %v1514, 1
      %v1575 = vsel %vm1257, %v1573, %v1574
      %v1576 = vrot.slane %v1515, 1
      %v1577 = vsel %vm1257, %v1574, %v1576
      %v1578 = vrot.slane %v1516, 1
      %v1579 = vrot.slane %v1517, 1
      %v1580 = vsel %vm1257, %v1578, %v1579
      %v1581 = vrot.slane %v1518, 1
      %v1582 = vsel %vm1257, %v1579, %v1581
      %v1599 = vadd.f32 %v1475, %v1545
      %v1600 = vadd.f32 %v1476, %v1547
      %v1601 = vadd.f32 %v1477, %v1550
      %v1602 = vadd.f32 %v1478, %v1552
      %v1603 = vadd.f32 %v1479, %v1555
      %v1604 = vadd.f32 %v1480, %v1557
      %v1605 = vadd.f32 %v1481, %v1560
      %v1606 = vadd.f32 %v1482, %v1562
      %v1607 = vadd.f32 %v1483, %v1565
      %v1608 = vadd.f32 %v1484, %v1567
      %v1609 = vadd.f32 %v1485, %v1570
      %v1610 = vadd.f32 %v1486, %v1572
      %v1611 = vadd.f32 %v1487, %v1575
      %v1612 = vadd.f32 %v1488, %v1577
      %v1613 = vadd.f32 %v1489, %v1580
      %v1614 = vadd.f32 %v1490, %v1582
      %v1615 = vlaneseq
      %v1616 = vshrl.u32 %v1615, 7
      %v1617 = vsub.s32 5, %v1616
      %v1618 = vrot.slane %v1167, %v1617
      %v1619 = vmul.f32 %v1140, %v1618
      %v1620 = vmul.f32 %v1141, %v1618
      %v1621 = vmul.f32 %v1142, %v1618
      %v1622 = vmul.f32 %v1143, %v1618
      %v1623 = vmul.f32 %v1144, %v1618
      %v1624 = vmul.f32 %v1145, %v1618
      %v1625 = vmul.f32 %v1146, %v1618
      %v1626 = vmul.f32 %v1147, %v1618
      %v1627 = vmul.f32 %v1148, %v1618
      %v1628 = vmul.f32 %v1149, %v1618
      %v1629 = vmul.f32 %v1150, %v1618
      %v1630 = vmul.f32 %v1151, %v1618
      %v1631 = vmul.f32 %v1152, %v1618
      %v1632 = vmul.f32 %v1153, %v1618
      %v1633 = vmul.f32 %v1154, %v1618
      %v1634 = vmul.f32 %v1155, %v1618
      %v1635 = vmul.f32 %v1156, %v1618
      %v1636 = vmul.f32 %v1157, %v1618
      %v1637 = vmul.f32 %v1158, %v1618
      %v1638 = vmul.f32 %v1159, %v1618
      %v1639 = vmul.f32 %v1160, %v1618
      %v1640 = vmul.f32 %v1161, %v1618
      %v1641 = vmul.f32 %v1162, %v1618
      %v1642 = vmul.f32 %v1163, %v1618
      %v1667 = vrot.slane %v1619, 2
      %v1668 = vrot.slane %v1620, 2
      %v1669 = vsel %vm1382, %v1667, %v1668
      %v1670 = vrot.slane %v1621, 2
      %v1671 = vsel %vm1382, %v1668, %v1670
      %v1672 = vrot.slane %v1622, 2
      %v1673 = vrot.slane %v1623, 2
      %v1674 = vsel %vm1382, %v1672, %v1673
      %v1675 = vrot.slane %v1624, 2
      %v1676 = vsel %vm1382, %v1673, %v1675
      %v1677 = vrot.slane %v1625, 2
      %v1678 = vrot.slane %v1626, 2
      %v1679 = vsel %vm1382, %v1677, %v1678
      %v1680 = vrot.slane %v1627, 2
      %v1681 = vsel %vm1382, %v1678, %v1680
      %v1682 = vrot.slane %v1628, 2
      %v1683 = vrot.slane %v1629, 2
      %v1684 = vsel %vm1382, %v1682, %v1683
      %v1685 = vrot.slane %v1630, 2
      %v1686 = vsel %vm1382, %v1683, %v1685
      %v1687 = vrot.slane %v1631, 2
      %v1688 = vrot.slane %v1632, 2
      %v1689 = vsel %vm1382, %v1687, %v1688
      %v1690 = vrot.slane %v1633, 2
      %v1691 = vsel %vm1382, %v1688, %v1690
      %v1692 = vrot.slane %v1634, 2
      %v1693 = vrot.slane %v1635, 2
      %v1694 = vsel %vm1382, %v1692, %v1693
      %v1695 = vrot.slane %v1636, 2
      %v1696 = vsel %vm1382, %v1693, %v1695
      %v1697 = vrot.slane %v1637, 2
      %v1698 = vrot.slane %v1638, 2
      %v1699 = vsel %vm1382, %v1697, %v1698
      %v1700 = vrot.slane %v1639, 2
      %v1701 = vsel %vm1382, %v1698, %v1700
      %v1702 = vrot.slane %v1640, 2
      %v1703 = vrot.slane %v1641, 2
      %v1704 = vsel %vm1382, %v1702, %v1703
      %v1705 = vrot.slane %v1642, 2
      %v1706 = vsel %vm1382, %v1703, %v1705
      %v1723 = vadd.f32 %v1599, %v1669
      %v1724 = vadd.f32 %v1600, %v1671
      %v1725 = vadd.f32 %v1601, %v1674
      %v1726 = vadd.f32 %v1602, %v1676
      %v1727 = vadd.f32 %v1603, %v1679
      %v1728 = vadd.f32 %v1604, %v1681
      %v1729 = vadd.f32 %v1605, %v1684
      %v1730 = vadd.f32 %v1606, %v1686
      %v1731 = vadd.f32 %v1607, %v1689
      %v1732 = vadd.f32 %v1608, %v1691
      %v1733 = vadd.f32 %v1609, %v1694
      %v1734 = vadd.f32 %v1610, %v1696
      %v1735 = vadd.f32 %v1611, %v1699
      %v1736 = vadd.f32 %v1612, %v1701
      %v1737 = vadd.f32 %v1613, %v1704
      %v1738 = vadd.f32 %v1614, %v1706
      %v1739 = vlaneseq
      %v1740 = vshrl.u32 %v1739, 7
      %v1741 = vsub.s32 6, %v1740
      %v1742 = vrot.slane %v1167, %v1741
      %v1743 = vmul.f32 %v1143, %v1742
      %v1744 = vmul.f32 %v1144, %v1742
      %v1745 = vmul.f32 %v1146, %v1742
      %v1746 = vmul.f32 %v1147, %v1742
      %v1747 = vmul.f32 %v1149, %v1742
      %v1748 = vmul.f32 %v1150, %v1742
      %v1749 = vmul.f32 %v1152, %v1742
      %v1750 = vmul.f32 %v1153, %v1742
      %v1751 = vmul.f32 %v1155, %v1742
      %v1752 = vmul.f32 %v1156, %v1742
      %v1753 = vmul.f32 %v1158, %v1742
      %v1754 = vmul.f32 %v1159, %v1742
      %v1755 = vmul.f32 %v1161, %v1742
      %v1756 = vmul.f32 %v1162, %v1742
      %v1757 = vmul.f32 %v1164, %v1742
      %v1758 = vmul.f32 %v1165, %v1742
      %v1759 = vadd.f32 %v1723, %v1743
      %v1760 = vadd.f32 %v1724, %v1744
      %v1761 = vadd.f32 %v1725, %v1745
      %v1762 = vadd.f32 %v1726, %v1746
      %v1763 = vadd.f32 %v1727, %v1747
      %v1764 = vadd.f32 %v1728, %v1748
      %v1765 = vadd.f32 %v1729, %v1749
      %v1766 = vadd.f32 %v1730, %v1750
      %v1767 = vadd.f32 %v1731, %v1751
      %v1768 = vadd.f32 %v1732, %v1752
      %v1769 = vadd.f32 %v1733, %v1753
      %v1770 = vadd.f32 %v1734, %v1754
      %v1771 = vadd.f32 %v1735, %v1755
      %v1772 = vadd.f32 %v1736, %v1756
      %v1773 = vadd.f32 %v1737, %v1757
      %v1774 = vadd.f32 %v1738, %v1758
      %v1775 = vlaneseq
      %v1776 = vshrl.u32 %v1775, 7
      %v1777 = vsub.s32 7, %v1776
      %v1778 = vrot.slane %v1167, %v1777
      %v1779 = vmul.f32 %v1143, %v1778
      %v1780 = vmul.f32 %v1144, %v1778
      %v1781 = vmul.f32 %v1145, %v1778
      %v1782 = vmul.f32 %v1146, %v1778
      %v1783 = vmul.f32 %v1147, %v1778
      %v1784 = vmul.f32 %v1148, %v1778
      %v1785 = vmul.f32 %v1149, %v1778
      %v1786 = vmul.f32 %v1150, %v1778
      %v1787 = vmul.f32 %v1151, %v1778
      %v1788 = vmul.f32 %v1152, %v1778
      %v1789 = vmul.f32 %v1153, %v1778
      %v1790 = vmul.f32 %v1154, %v1778
      %v1791 = vmul.f32 %v1155, %v1778
      %v1792 = vmul.f32 %v1156, %v1778
      %v1793 = vmul.f32 %v1157, %v1778
      %v1794 = vmul.f32 %v1158, %v1778
      %v1795 = vmul.f32 %v1159, %v1778
      %v1796 = vmul.f32 %v1160, %v1778
      %v1797 = vmul.f32 %v1161, %v1778
      %v1798 = vmul.f32 %v1162, %v1778
      %v1799 = vmul.f32 %v1163, %v1778
      %v1800 = vmul.f32 %v1164, %v1778
      %v1801 = vmul.f32 %v1165, %v1778
      %v1802 = vmul.f32 %v1166, %v1778
      %v1827 = vrot.slane %v1779, 1
      %v1828 = vrot.slane %v1780, 1
      %v1829 = vsel %vm1257, %v1827, %v1828
      %v1830 = vrot.slane %v1781, 1
      %v1831 = vsel %vm1257, %v1828, %v1830
      %v1832 = vrot.slane %v1782, 1
      %v1833 = vrot.slane %v1783, 1
      %v1834 = vsel %vm1257, %v1832, %v1833
      %v1835 = vrot.slane %v1784, 1
      %v1836 = vsel %vm1257, %v1833, %v1835
      %v1837 = vrot.slane %v1785, 1
      %v1838 = vrot.slane %v1786, 1
      %v1839 = vsel %vm1257, %v1837, %v1838
      %v1840 = vrot.slane %v1787, 1
      %v1841 = vsel %vm1257, %v1838, %v1840
      %v1842 = vrot.slane %v1788, 1
      %v1843 = vrot.slane %v1789, 1
      %v1844 = vsel %vm1257, %v1842, %v1843
      %v1845 = vrot.slane %v1790, 1
      %v1846 = vsel %vm1257, %v1843, %v1845
      %v1847 = vrot.slane %v1791, 1
      %v1848 = vrot.slane %v1792, 1
      %v1849 = vsel %vm1257, %v1847, %v1848
      %v1850 = vrot.slane %v1793, 1
      %v1851 = vsel %vm1257, %v1848, %v1850
      %v1852 = vrot.slane %v1794, 1
      %v1853 = vrot.slane %v1795, 1
      %v1854 = vsel %vm1257, %v1852, %v1853
      %v1855 = vrot.slane %v1796, 1
      %v1856 = vsel %vm1257, %v1853, %v1855
      %v1857 = vrot.slane %v1797, 1
      %v1858 = vrot.slane %v1798, 1
      %v1859 = vsel %vm1257, %v1857, %v1858
      %v1860 = vrot.slane %v1799, 1
      %v1861 = vsel %vm1257, %v1858, %v1860
      %v1862 = vrot.slane %v1800, 1
      %v1863 = vrot.slane %v1801, 1
      %v1864 = vsel %vm1257, %v1862, %v1863
      %v1865 = vrot.slane %v1802, 1
      %v1866 = vsel %vm1257, %v1863, %v1865
      %v1883 = vadd.f32 %v1759, %v1829
      %v1884 = vadd.f32 %v1760, %v1831
      %v1885 = vadd.f32 %v1761, %v1834
      %v1886 = vadd.f32 %v1762, %v1836
      %v1887 = vadd.f32 %v1763, %v1839
      %v1888 = vadd.f32 %v1764, %v1841
      %v1889 = vadd.f32 %v1765, %v1844
      %v1890 = vadd.f32 %v1766, %v1846
      %v1891 = vadd.f32 %v1767, %v1849
      %v1892 = vadd.f32 %v1768, %v1851
      %v1893 = vadd.f32 %v1769, %v1854
      %v1894 = vadd.f32 %v1770, %v1856
      %v1895 = vadd.f32 %v1771, %v1859
      %v1896 = vadd.f32 %v1772, %v1861
      %v1897 = vadd.f32 %v1773, %v1864
      %v1898 = vadd.f32 %v1774, %v1866
      %v1899 = vlaneseq
      %v1900 = vshrl.u32 %v1899, 7
      %v1901 = vsub.s32 0, %v1900
      %v1902 = vrot.slane %v1168, %v1901
      %v1903 = vmul.f32 %v1143, %v1902
      %v1904 = vmul.f32 %v1144, %v1902
      %v1905 = vmul.f32 %v1145, %v1902
      %v1906 = vmul.f32 %v1146, %v1902
      %v1907 = vmul.f32 %v1147, %v1902
      %v1908 = vmul.f32 %v1148, %v1902
      %v1909 = vmul.f32 %v1149, %v1902
      %v1910 = vmul.f32 %v1150, %v1902
      %v1911 = vmul.f32 %v1151, %v1902
      %v1912 = vmul.f32 %v1152, %v1902
      %v1913 = vmul.f32 %v1153, %v1902
      %v1914 = vmul.f32 %v1154, %v1902
      %v1915 = vmul.f32 %v1155, %v1902
      %v1916 = vmul.f32 %v1156, %v1902
      %v1917 = vmul.f32 %v1157, %v1902
      %v1918 = vmul.f32 %v1158, %v1902
      %v1919 = vmul.f32 %v1159, %v1902
      %v1920 = vmul.f32 %v1160, %v1902
      %v1921 = vmul.f32 %v1161, %v1902
      %v1922 = vmul.f32 %v1162, %v1902
      %v1923 = vmul.f32 %v1163, %v1902
      %v1924 = vmul.f32 %v1164, %v1902
      %v1925 = vmul.f32 %v1165, %v1902
      %v1926 = vmul.f32 %v1166, %v1902
      %v1951 = vrot.slane %v1903, 2
      %v1952 = vrot.slane %v1904, 2
      %v1953 = vsel %vm1382, %v1951, %v1952
      %v1954 = vrot.slane %v1905, 2
      %v1955 = vsel %vm1382, %v1952, %v1954
      %v1956 = vrot.slane %v1906, 2
      %v1957 = vrot.slane %v1907, 2
      %v1958 = vsel %vm1382, %v1956, %v1957
      %v1959 = vrot.slane %v1908, 2
      %v1960 = vsel %vm1382, %v1957, %v1959
      %v1961 = vrot.slane %v1909, 2
      %v1962 = vrot.slane %v1910, 2
      %v1963 = vsel %vm1382, %v1961, %v1962
      %v1964 = vrot.slane %v1911, 2
      %v1965 = vsel %vm1382, %v1962, %v1964
      %v1966 = vrot.slane %v1912, 2
      %v1967 = vrot.slane %v1913, 2
      %v1968 = vsel %vm1382, %v1966, %v1967
      %v1969 = vrot.slane %v1914, 2
      %v1970 = vsel %vm1382, %v1967, %v1969
      %v1971 = vrot.slane %v1915, 2
      %v1972 = vrot.slane %v1916, 2
      %v1973 = vsel %vm1382, %v1971, %v1972
      %v1974 = vrot.slane %v1917, 2
      %v1975 = vsel %vm1382, %v1972, %v1974
      %v1976 = vrot.slane %v1918, 2
      %v1977 = vrot.slane %v1919, 2
      %v1978 = vsel %vm1382, %v1976, %v1977
      %v1979 = vrot.slane %v1920, 2
      %v1980 = vsel %vm1382, %v1977, %v1979
      %v1981 = vrot.slane %v1921, 2
      %v1982 = vrot.slane %v1922, 2
      %v1983 = vsel %vm1382, %v1981, %v1982
      %v1984 = vrot.slane %v1923, 2
      %v1985 = vsel %vm1382, %v1982, %v1984
      %v1986 = vrot.slane %v1924, 2
      %v1987 = vrot.slane %v1925, 2
      %v1988 = vsel %vm1382, %v1986, %v1987
      %v1989 = vrot.slane %v1926, 2
      %v1990 = vsel %vm1382, %v1987, %v1989
      %v2007 = vadd.f32 %v1883, %v1953
      %v2008 = vadd.f32 %v1884, %v1955
      %v2009 = vadd.f32 %v1885, %v1958
      %v2010 = vadd.f32 %v1886, %v1960
      %v2011 = vadd.f32 %v1887, %v1963
      %v2012 = vadd.f32 %v1888, %v1965
      %v2013 = vadd.f32 %v1889, %v1968
      %v2014 = vadd.f32 %v1890, %v1970
      %v2015 = vadd.f32 %v1891, %v1973
      %v2016 = vadd.f32 %v1892, %v1975
      %v2017 = vadd.f32 %v1893, %v1978
      %v2018 = vadd.f32 %v1894, %v1980
      %v2019 = vadd.f32 %v1895, %v1983
      %v2020 = vadd.f32 %v1896, %v1985
      %v2021 = vadd.f32 %v1897, %v1988
      %v2022 = vadd.f32 %v1898, %v1990
      %v2023 = vld [vmem:[%s5] sm:$0x1]
      %v2025 = vlaneseq
      %v2026 = vshrl.u32 %v2025, 7
      %v2027 = vsub.s32 0, %v2026
      %v2028 = vrot.slane %v2023, %v2027
      %v2030 = vmul.f32 %v2007, %v2028
      %v2031 = vmul.f32 %v2008, %v2028
      %v2032 = vmul.f32 %v2009, %v2028
      %v2033 = vmul.f32 %v2010, %v2028
      %v2034 = vmul.f32 %v2011, %v2028
      %v2035 = vmul.f32 %v2012, %v2028
      %v2036 = vmul.f32 %v2013, %v2028
      %v2037 = vmul.f32 %v2014, %v2028
      %v2038 = vmul.f32 %v2015, %v2028
      %v2039 = vmul.f32 %v2016, %v2028
      %v2040 = vmul.f32 %v2017, %v2028
      %v2041 = vmul.f32 %v2018, %v2028
      %v2042 = vmul.f32 %v2019, %v2028
      %v2043 = vmul.f32 %v2020, %v2028
      %v2044 = vmul.f32 %v2021, %v2028
      %v2045 = vmul.f32 %v2022, %v2028
      %v2046 = vld [vmem:[%s6] sm:$0x1]
      %v2048 = vlaneseq
      %v2049 = vshrl.u32 %v2048, 7
      %v2050 = vsub.s32 0, %v2049
      %v2051 = vrot.slane %v2046, %v2050
      %v2053 = vadd.f32 %v2030, %v2051
      %v2054 = vadd.f32 %v2031, %v2051
      %v2055 = vadd.f32 %v2032, %v2051
      %v2056 = vadd.f32 %v2033, %v2051
      %v2057 = vadd.f32 %v2034, %v2051
      %v2058 = vadd.f32 %v2035, %v2051
      %v2059 = vadd.f32 %v2036, %v2051
      %v2060 = vadd.f32 %v2037, %v2051
      %v2061 = vadd.f32 %v2038, %v2051
      %v2062 = vadd.f32 %v2039, %v2051
      %v2063 = vadd.f32 %v2040, %v2051
      %v2064 = vadd.f32 %v2041, %v2051
      %v2065 = vadd.f32 %v2042, %v2051
      %v2066 = vadd.f32 %v2043, %v2051
      %v2067 = vadd.f32 %v2044, %v2051
      %v2068 = vadd.f32 %v2045, %v2051
      %v2069 = vxor.u32 %v2053, 2147483648
      %v2070 = vxor.u32 %v2054, 2147483648
      %v2071 = vxor.u32 %v2055, 2147483648
      %v2072 = vxor.u32 %v2056, 2147483648
      %v2073 = vxor.u32 %v2057, 2147483648
      %v2074 = vxor.u32 %v2058, 2147483648
      %v2075 = vxor.u32 %v2059, 2147483648
      %v2076 = vxor.u32 %v2060, 2147483648
      %v2077 = vxor.u32 %v2061, 2147483648
      %v2078 = vxor.u32 %v2062, 2147483648
      %v2079 = vxor.u32 %v2063, 2147483648
      %v2080 = vxor.u32 %v2064, 2147483648
      %v2081 = vxor.u32 %v2065, 2147483648
      %v2082 = vxor.u32 %v2066, 2147483648
      %v2083 = vxor.u32 %v2067, 2147483648
      %v2084 = vxor.u32 %v2068, 2147483648
      %v2085 = vmul.f32 %v2069, 1.442695
      %v2086 = vpow.pop %v2085
      %v2087 = vmul.f32 %v2070, 1.442695
      %v2088 = vpow.pop %v2087
      %v2089 = vmul.f32 %v2071, 1.442695
      %v2090 = vpow.pop %v2089
      %v2091 = vmul.f32 %v2072, 1.442695
      %v2092 = vpow.pop %v2091
      %v2093 = vmul.f32 %v2073, 1.442695
      %v2094 = vpow.pop %v2093
      %v2095 = vmul.f32 %v2074, 1.442695
      %v2096 = vpow.pop %v2095
      %v2097 = vmul.f32 %v2075, 1.442695
      %v2098 = vpow.pop %v2097
      %v2099 = vmul.f32 %v2076, 1.442695
      %v2100 = vpow.pop %v2099
      %v2101 = vmul.f32 %v2077, 1.442695
      %v2102 = vpow.pop %v2101
      %v2103 = vmul.f32 %v2078, 1.442695
      %v2104 = vpow.pop %v2103
      %v2105 = vmul.f32 %v2079, 1.442695
      %v2106 = vpow.pop %v2105
      %v2107 = vmul.f32 %v2080, 1.442695
      %v2108 = vpow.pop %v2107
      %v2109 = vmul.f32 %v2081, 1.442695
      %v2110 = vpow.pop %v2109
      %v2111 = vmul.f32 %v2082, 1.442695
      %v2112 = vpow.pop %v2111
      %v2113 = vmul.f32 %v2083, 1.442695
      %v2114 = vpow.pop %v2113
      %v2115 = vmul.f32 %v2084, 1.442695
      %v2116 = vpow.pop %v2115
      %v2117 = vadd.f32 %v2086, 1.0
      %v2118 = vadd.f32 %v2088, 1.0
      %v2119 = vadd.f32 %v2090, 1.0
      %v2120 = vadd.f32 %v2092, 1.0
      %v2121 = vadd.f32 %v2094, 1.0
      %v2122 = vadd.f32 %v2096, 1.0
      %v2123 = vadd.f32 %v2098, 1.0
      %v2124 = vadd.f32 %v2100, 1.0
      %v2125 = vadd.f32 %v2102, 1.0
      %v2126 = vadd.f32 %v2104, 1.0
      %v2127 = vadd.f32 %v2106, 1.0
      %v2128 = vadd.f32 %v2108, 1.0
      %v2129 = vadd.f32 %v2110, 1.0
      %v2130 = vadd.f32 %v2112, 1.0
      %v2131 = vadd.f32 %v2114, 1.0
      %v2132 = vadd.f32 %v2116, 1.0
      %v2133 = vrcp.pop %v2117
      %v2134 = vmul.f32 1.0, %v2133
      %v2135 = vrcp.pop %v2118
      %v2136 = vmul.f32 1.0, %v2135
      %v2137 = vrcp.pop %v2119
      %v2138 = vmul.f32 1.0, %v2137
      %v2139 = vrcp.pop %v2120
      %v2140 = vmul.f32 1.0, %v2139
      %v2141 = vrcp.pop %v2121
      %v2142 = vmul.f32 1.0, %v2141
      %v2143 = vrcp.pop %v2122
      %v2144 = vmul.f32 1.0, %v2143
      %v2145 = vrcp.pop %v2123
      %v2146 = vmul.f32 1.0, %v2145
      %v2147 = vrcp.pop %v2124
      %v2148 = vmul.f32 1.0, %v2147
      %v2149 = vrcp.pop %v2125
      %v2150 = vmul.f32 1.0, %v2149
      %v2151 = vrcp.pop %v2126
      %v2152 = vmul.f32 1.0, %v2151
      %v2153 = vrcp.pop %v2127
      %v2154 = vmul.f32 1.0, %v2153
      %v2155 = vrcp.pop %v2128
      %v2156 = vmul.f32 1.0, %v2155
      %v2157 = vrcp.pop %v2129
      %v2158 = vmul.f32 1.0, %v2157
      %v2159 = vrcp.pop %v2130
      %v2160 = vmul.f32 1.0, %v2159
      %v2161 = vrcp.pop %v2131
      %v2162 = vmul.f32 1.0, %v2161
      %v2163 = vrcp.pop %v2132
      %v2164 = vmul.f32 1.0, %v2163
      %v2165 = vmul.f32 %v2053, %v2134
      %v2166 = vmul.f32 %v2054, %v2136
      %v2167 = vmul.f32 %v2055, %v2138
      %v2168 = vmul.f32 %v2056, %v2140
      %v2169 = vmul.f32 %v2057, %v2142
      %v2170 = vmul.f32 %v2058, %v2144
      %v2171 = vmul.f32 %v2059, %v2146
      %v2172 = vmul.f32 %v2060, %v2148
      %v2173 = vmul.f32 %v2061, %v2150
      %v2174 = vmul.f32 %v2062, %v2152
      %v2175 = vmul.f32 %v2063, %v2154
      %v2176 = vmul.f32 %v2064, %v2156
      %v2177 = vmul.f32 %v2065, %v2158
      %v2178 = vmul.f32 %v2066, %v2160
      %v2179 = vmul.f32 %v2067, %v2162
      %v2180 = vmul.f32 %v2068, %v2164
      %2181 = vst [vmem:[%s335] sm:$0xff] %v2165
      %2182 = vst [vmem:[%s335 + $0x8] sm:$0xff] %v2166
      %2183 = vst [vmem:[%s335 + $0x10] sm:$0xff] %v2167
      %2184 = vst [vmem:[%s335 + $0x18] sm:$0xff] %v2168
      %2185 = vst [vmem:[%s335 + $0x20] sm:$0xff] %v2169
      %2186 = vst [vmem:[%s335 + $0x28] sm:$0xff] %v2170
      %2187 = vst [vmem:[%s335 + $0x30] sm:$0xff] %v2171
      %2188 = vst [vmem:[%s335 + $0x38] sm:$0xff] %v2172
      %2189 = vst [vmem:[%s335 + $0x40] sm:$0xff] %v2173
      %2190 = vst [vmem:[%s335 + $0x48] sm:$0xff] %v2174
      %2191 = vst [vmem:[%s335 + $0x50] sm:$0xff] %v2175
      %2192 = vst [vmem:[%s335 + $0x58] sm:$0xff] %v2176
      %2193 = vst [vmem:[%s335 + $0x60] sm:$0xff] %v2177
      %2194 = vst [vmem:[%s335 + $0x68] sm:$0xff] %v2178
      %2195 = vst [vmem:[%s335 + $0x70] sm:$0xff] %v2179
      %2196 = vst [vmem:[%s335 + $0x78] sm:$0xff] %v2180
      %p2197 = scmp.eq.s32.totalorder %s25, 0
      // Predicated region
      $region49: #{mbconv_forward.3} parent=47 // pred_check
        %p2198 = pneg %p2197
      $region50: #{mbconv_forward.3} parent=47 // pred_check_branch
        %2200 = sbr.rel (%p2198) target = $region52
      $region51: #{mbconv_forward.3} parent=47 // pred_region
        %2201 = vst [vmem:[%s339] sm:$0x1] 0.0
      $region52: #{mbconv_forward.3} parent=47 // pred_fallthru
        _
      %v2202 = vld [vmem:[%s339] sm:$0x1]
      %v2203 = vadd.f32 %v2165, %v2166
      %v2204 = vadd.f32 %v2203, %v2167
      %v2205 = vadd.f32 %v2204, %v2168
      %v2206 = vadd.f32 %v2205, %v2169
      %v2207 = vadd.f32 %v2206, %v2170
      %v2208 = vadd.f32 %v2207, %v2171
      %v2209 = vadd.f32 %v2208, %v2172
      %v2210 = vadd.f32 %v2209, %v2173
      %v2211 = vadd.f32 %v2210, %v2174
      %v2212 = vadd.f32 %v2211, %v2175
      %v2213 = vadd.f32 %v2212, %v2176
      %v2214 = vadd.f32 %v2213, %v2177
      %v2215 = vadd.f32 %v2214, %v2178
      %v2216 = vadd.f32 %v2215, %v2179
      %v2217 = vadd.f32 %v2216, %v2180
      %v2218 = vrot.slane %v2217, 4
      %v2219 = vadd.f32 %v2217, %v2218
      %v2220 = vrot.slane %v2219, 2
      %v2221 = vadd.f32 %v2219, %v2220
      %v2222 = vrot.slane %v2221, 1
      %v2223 = vadd.f32 %v2221, %v2222
      %v2224 = vmul.f32 %v2223, 0.00390625
      %v2225 = vadd.f32 %v2202, %v2224
      %2226 = vst [vmem:[%s339] sm:$0x1] %v2225
      %s2227 = smul.u32 8, %s25
      %p2228 = scmp.lt.s32.totalorder %s24, 1
      %s2229 = scalar_select %p2228, %s24, 1
      %p2230 = scmp.lt.s32.totalorder %s2227, 15
      %s2231 = scalar_select %p2230, %s2227, 15
      %s2232 = smul.addr %s2231, 2
      %s2233 = smul.addr %s2229, 32
      %s2234 = sadd.s32 %s2232, %s2233
      %s2235 = smul.addr %s2234, 8
      %s2236 = scalar_lea.vmem %s7, %s2235
      %p2237 = scmp.lt.s32.totalorder %s24, 1
      %s2238 = scalar_select %p2237, %s24, 1
      %s2239 = scalar_lea.vmem %s8, %s2238
      // Predicated region
      $region53: #{mbconv_forward.3} parent=47 // pred_check
        %p2240 = pneg %p204
      $region54: #{mbconv_forward.3} parent=47 // pred_check_branch
        %2242 = sbr.rel (%p2240) target = $region56
      $region55: #{mbconv_forward.3} parent=47 // pred_region
        %s2243 = smul.u32 8, %s25
      $region56: #{mbconv_forward.3} parent=47 // pred_fallthru
        _
      // Predicated region
      $region57: #{mbconv_forward.3} parent=47 // pred_check
        %p2244 = pneg %p230
      $region58: #{mbconv_forward.3} parent=47 // pred_check_branch
        %2246 = sbr.rel (%p2244) target = $region60
      $region59: #{mbconv_forward.3} parent=47 // pred_region
        _
      $region60: #{mbconv_forward.3} parent=47 // pred_fallthru
        _
    $region48: #{mbconv_forward.3} parent=5 // pred_fallthru
      _
    %p2247 = scmp.le.s32.totalorder 2, %s15
    // Predicated region
    $region61: #{mbconv_forward.3} parent=5 // pred_check
      %p2248 = pneg %p2247
    $region62: #{mbconv_forward.3} parent=5 // pred_check_branch
      %2250 = sbr.rel (%p2248) target = $region64
    $region63: #{mbconv_forward.3} parent=5 // pred_region
      %s2251 = ssub.s32 %s15, 2
      // Predicated region
      $region65: #{mbconv_forward.3} parent=63 // pred_check
        %p2252 = pneg %p210
      $region66: #{mbconv_forward.3} parent=63 // pred_check_branch
        %2254 = sbr.rel (%p2252) target = $region68
      $region67: #{mbconv_forward.3} parent=63 // pred_region
        %s2255 = smul.u32 8, %s27
        %p2256 = scmp.lt.s32.totalorder %s26, 1
        %s2257 = scalar_select %p2256, %s26, 1
        %p2258 = scmp.lt.s32.totalorder %s2255, 15
        %s2259 = scalar_select %p2258, %s2255, 15
        %s2260 = smul.addr %s2259, 2
        %s2261 = smul.addr %s2257, 32
        %s2262 = sadd.s32 %s2260, %s2261
        %s2263 = smul.addr %s2262, 8
        %s2264 = scalar_lea.vmem %s7, %s2263
      $region68: #{mbconv_forward.3} parent=63 // pred_fallthru
        _
      // Predicated region
      $region69: #{mbconv_forward.3} parent=63 // pred_check
        %p2265 = pneg %p236
      $region70: #{mbconv_forward.3} parent=63 // pred_check_branch
        %2267 = sbr.rel (%p2265) target = $region72
      $region71: #{mbconv_forward.3} parent=63 // pred_region
        %p2268 = scmp.lt.s32.totalorder %s26, 1
        %s2269 = scalar_select %p2268, %s26, 1
        %s2270 = scalar_lea.vmem %s8, %s2269
      $region72: #{mbconv_forward.3} parent=63 // pred_fallthru
        _
    $region64: #{mbconv_forward.3} parent=5 // pred_fallthru
      _
  $region6: #{mbconv_forward.3} parent=0 // loop_footer
    %s19 = sadd.s32 1, %s15
  $region7: #{mbconv_forward.3} parent=0 // loop_footer_branch
    %14 = sbr.rel target = $region3
  $region8: #{mbconv_forward.3} parent=0 // loop_exit
    _

</llo_original>
